<compile_context>
chip_gen: v7x
topology: tpu7x:2x2x1
jax: 0.10.0
libtpu: 0.0.40
codegen_flags: <defaults>
</compile_context>

<pallas_src>
import functools

import jax
import jax.numpy as jnp
from jax.experimental import pallas as pl
from jax.experimental.pallas import tpu as pltpu


# ----------------------------------------------------------------------------
# Single fused kernel: GRU recurrence (both directions) + Linear + softmax.
# ----------------------------------------------------------------------------
def _net_fused_kernel(x_ref,                                   # (T*B, n_in)
                      wih_f_ref, whh_f_ref, bih_f_ref, bhh_f_ref,
                      wih_b_ref, whh_b_ref, bih_b_ref, bhh_b_ref,
                      wfc_f_ref, wfc_b_ref, bfc_ref,
                      o_ref,                                   # (T*B, n_out)
                      gx_fr, gx_fz, gx_fn,                     # (T*B, H) scratch
                      gx_br, gx_bz, gx_bn,                     # (T*B, H) scratch
                      out_f_ref, out_b_ref,                    # (T*B, H) scratch
                      *, T, B, H):
    x = x_ref[...]                                             # time-major packed rows

    # ---- Prologue: input projections for ALL timesteps, one MXU matmul per
    #      gate/direction (independent of the recurrence, pipelines freely).
    def proj(w_ref, b_ref, g):
        return jnp.dot(x, w_ref[g], preferred_element_type=jnp.float32) + b_ref[g]

    gx_fr[...] = proj(wih_f_ref, bih_f_ref, 0)
    gx_fz[...] = proj(wih_f_ref, bih_f_ref, 1)
    gx_fn[...] = proj(wih_f_ref, bih_f_ref, 2)
    gx_br[...] = proj(wih_b_ref, bih_b_ref, 0)
    gx_bz[...] = proj(wih_b_ref, bih_b_ref, 1)
    gx_bn[...] = proj(wih_b_ref, bih_b_ref, 2)

    # Loop-invariant recurrent weights / biases (loaded once, reused).
    whh_f = (whh_f_ref[0], whh_f_ref[1], whh_f_ref[2])
    whh_b = (whh_b_ref[0], whh_b_ref[1], whh_b_ref[2])
    bhh_f = (bhh_f_ref[0], bhh_f_ref[1], bhh_f_ref[2])
    bhh_b = (bhh_b_ref[0], bhh_b_ref[1], bhh_b_ref[2])

    def gru_cell(h, gx_r, gx_z, gx_n, whh, bhh):
        # PyTorch GRU: r = sig(gx_r + h Whr + bhr); z likewise;
        #              n = tanh(gx_n + r*(h Whn + bhn)); h' = (1-z)*n + z*h
        r = jax.nn.sigmoid(
            gx_r + jnp.dot(h, whh[0], preferred_element_type=jnp.float32) + bhh[0])
        z = jax.nn.sigmoid(
            gx_z + jnp.dot(h, whh[1], preferred_element_type=jnp.float32) + bhh[1])
        n = jnp.tanh(
            gx_n + r * (jnp.dot(h, whh[2], preferred_element_type=jnp.float32) + bhh[2]))
        return (1.0 - z) * n + z * h

    h_f = jnp.zeros((B, H), jnp.float32)
    h_b = jnp.zeros((B, H), jnp.float32)

    # Fully unrolled static time loop (T is small); all slice offsets static.
    # TODO(synk): for long sequences switch to lax.fori_loop over time blocks.
    for t in range(T):
        rf = slice(t * B, (t + 1) * B)                 # forward time index  t
        rb = slice((T - 1 - t) * B, (T - t) * B)       # backward time index T-1-t
        h_f = gru_cell(h_f, gx_fr[rf, :], gx_fz[rf, :], gx_fn[rf, :], whh_f, bhh_f)
        h_b = gru_cell(h_b, gx_br[rb, :], gx_bz[rb, :], gx_bn[rb, :], whh_b, bhh_b)
        out_f_ref[rf, :] = h_f
        out_b_ref[rb, :] = h_b

    # ---- Epilogue: Linear(2H -> n_out) with the weight split per direction
    #      (no concat), then numerically-stable softmax(dim=-1).
    logits = (jnp.dot(out_f_ref[...], wfc_f_ref[...], preferred_element_type=jnp.float32)
              + jnp.dot(out_b_ref[...], wfc_b_ref[...], preferred_element_type=jnp.float32)
              + bfc_ref[...])
    m = jnp.max(logits, axis=-1, keepdims=True)
    e = jnp.exp(logits - m)
    o_ref[...] = e * pl.reciprocal(jnp.sum(e, axis=-1, keepdims=True), approx=True)


# ----------------------------------------------------------------------------
# Host-side weight preparation (pure layout plumbing, done once / folded by jit)
# ----------------------------------------------------------------------------
def _prep_gru_dir(wih, whh, bih, bhh, n_hidden, n_input):
    H = n_hidden
    # PyTorch layout: wih (3H, n_in), whh (3H, H); gate order [r, z, n].
    wih = wih.reshape(3, H, n_input).transpose(0, 2, 1)    # (3, n_in, H)  pre-transposed
    whh = whh.reshape(3, H, H).transpose(0, 2, 1)          # (3, H, H)     pre-transposed
    bih = bih.reshape(3, 1, H)
    bhh = bhh.reshape(3, 1, H)
    return wih, whh, bih, bhh


def net_forward(x, params, hidden):
    T, B, n_in = x.shape
    H = hidden
    n_out = params["w_fc"].shape[0]

    wih_f, whh_f, bih_f, bhh_f = _prep_gru_dir(
        params["wih_f"], params["whh_f"], params["bih_f"], params["bhh_f"], H, n_in)
    wih_b, whh_b, bih_b, bhh_b = _prep_gru_dir(
        params["wih_b"], params["whh_b"], params["bih_b"], params["bhh_b"], H, n_in)
    wfc_f = params["w_fc"][:, :H].T                        # (H, n_out)
    wfc_b = params["w_fc"][:, H:].T                        # (H, n_out)
    bfc = params["b_fc"].reshape(1, n_out)

    x2 = x.reshape(T * B, n_in)                            # packed time-major rows

    kernel = functools.partial(_net_fused_kernel, T=T, B=B, H=H)
    probs = pl.pallas_call(
        kernel,
        out_shape=jax.ShapeDtypeStruct((T * B, n_out), jnp.float32),
        scratch_shapes=[pltpu.VMEM((T * B, H), jnp.float32) for _ in range(8)],
    )(x2, wih_f, whh_f, bih_f, bhh_f,
      wih_b, whh_b, bih_b, bhh_b,
      wfc_f, wfc_b, bfc)

    # TODO(synk): variable-length PackedSequence (ragged batch_sizes) is not
    # modeled; equal-length sequences assumed, so batch_sizes == [B]*T.
    batch_sizes = jnp.full((T,), B, dtype=jnp.int32)       # PackedSequence .batch_sizes
    return probs, batch_sizes


# ----------------------------------------------------------------------------
# Parameter init (matches the PyTorch module's init scheme) + pure-JAX reference
# ----------------------------------------------------------------------------
def init_params(key, n_input, n_hidden, n_output):
    ortho = jax.nn.initializers.orthogonal()
    xavier = jax.nn.initializers.xavier_uniform()
    ks = jax.random.split(key, 5)
    three_h = 3 * n_hidden
    return {
        "wih_f": ortho(ks[0], (three_h, n_input), jnp.float32),
        "whh_f": ortho(ks[1], (three_h, n_hidden), jnp.float32),
        "bih_f": jnp.zeros((three_h,), jnp.float32),
        "bhh_f": jnp.zeros((three_h,), jnp.float32),
        "wih_b": ortho(ks[2], (three_h, n_input), jnp.float32),
        "whh_b": ortho(ks[3], (three_h, n_hidden), jnp.float32),
        "bih_b": jnp.zeros((three_h,), jnp.float32),
        "bhh_b": jnp.zeros((three_h,), jnp.float32),
        "w_fc": xavier(ks[4], (n_output, 2 * n_hidden), jnp.float32),
        "b_fc": jnp.zeros((n_output,), jnp.float32),
    }


def net_reference(x, params, hidden):
    """Pure-JAX reference matching torch nn.GRU(bidirectional=True)+Linear+softmax."""
    H = hidden
    T, B, _ = x.shape

    def run_dir(xs, wih, whh, bih, bhh):
        def step(h, x_t):
            gx = x_t @ wih.T + bih
            gh = h @ whh.T + bhh
            r = jax.nn.sigmoid(gx[:, :H] + gh[:, :H])
            z = jax.nn.sigmoid(gx[:, H:2 * H] + gh[:, H:2 * H])
            n = jnp.tanh(gx[:, 2 * H:] + r * gh[:, 2 * H:])
            h_new = (1.0 - z) * n + z * h
            return h_new, h_new
        h0 = jnp.zeros((B, H), jnp.float32)
        _, ys = jax.lax.scan(step, h0, xs)
        return ys

    out_f = run_dir(x, params["wih_f"], params["whh_f"], params["bih_f"], params["bhh_f"])
    out_b = run_dir(x[::-1], params["wih_b"], params["whh_b"],
                    params["bih_b"], params["bhh_b"])[::-1]
    feats = jnp.concatenate([out_f, out_b], axis=-1).reshape(T * B, 2 * H)
    logits = feats @ params["w_fc"].T + params["b_fc"]
    return jax.nn.softmax(logits, axis=-1)


if __name__ == "__main__":
    import numpy as np

    T, B = 8, 2
    n_input, n_hidden, n_output = 16, 32, 8

    root = jax.random.PRNGKey(0)
    k_params, k_x = jax.random.split(root)
    params = init_params(k_params, n_input, n_hidden, n_output)
    x = jax.random.normal(k_x, (T, B, n_input), jnp.float32)

    forward = jax.jit(net_forward, static_argnums=2)
    probs, batch_sizes = forward(x, params, n_hidden)
    jax.block_until_ready(probs)

    assert probs.shape == (T * B, n_output)
    assert batch_sizes.shape == (T,)

    ref = net_reference(x, params, n_hidden)
    np.testing.assert_allclose(np.asarray(probs), np.asarray(ref), rtol=1e-2, atol=1e-2)

    print("KERNEL_OK")
</pallas_src>

<mosaic_0001>
module attributes {stable_mosaic.version = 11 : i64} {
  func.func @_net_fused_kernel(%arg0: memref<16x16xf32, #tpu.memory_space<vmem>>, %arg1: memref<3x16x32xf32, #tpu.memory_space<vmem>>, %arg2: memref<3x32x32xf32, #tpu.memory_space<vmem>>, %arg3: memref<3x1x32xf32, #tpu.memory_space<vmem>>, %arg4: memref<3x1x32xf32, #tpu.memory_space<vmem>>, %arg5: memref<3x16x32xf32, #tpu.memory_space<vmem>>, %arg6: memref<3x32x32xf32, #tpu.memory_space<vmem>>, %arg7: memref<3x1x32xf32, #tpu.memory_space<vmem>>, %arg8: memref<3x1x32xf32, #tpu.memory_space<vmem>>, %arg9: memref<32x8xf32, #tpu.memory_space<vmem>>, %arg10: memref<32x8xf32, #tpu.memory_space<vmem>>, %arg11: memref<1x8xf32, #tpu.memory_space<vmem>>, %arg12: memref<16x8xf32, #tpu.memory_space<vmem>>, %arg13: memref<16x32xf32, #tpu.memory_space<vmem>>, %arg14: memref<16x32xf32, #tpu.memory_space<vmem>>, %arg15: memref<16x32xf32, #tpu.memory_space<vmem>>, %arg16: memref<16x32xf32, #tpu.memory_space<vmem>>, %arg17: memref<16x32xf32, #tpu.memory_space<vmem>>, %arg18: memref<16x32xf32, #tpu.memory_space<vmem>>, %arg19: memref<16x32xf32, #tpu.memory_space<vmem>>, %arg20: memref<16x32xf32, #tpu.memory_space<vmem>>) attributes {dimension_semantics = [], scalar_prefetch = 0 : i64, scratch_operands = 8 : i64, tpu.core_type = #tpu.core_type<tc>} {
    %c0 = arith.constant 0 : index
    %c0_0 = arith.constant 0 : index
    %0 = vector.load %arg0[%c0, %c0_0] : memref<16x16xf32, #tpu.memory_space<vmem>>, vector<16x16xf32>
    %c0_1 = arith.constant 0 : index
    %c0_2 = arith.constant 0 : index
    %c0_3 = arith.constant 0 : index
    %1 = vector.load %arg1[%c0_1, %c0_2, %c0_3] : memref<3x16x32xf32, #tpu.memory_space<vmem>>, vector<1x16x32xf32>
    %2 = vector.shape_cast %1 : vector<1x16x32xf32> to vector<16x32xf32>
    %cst = arith.constant dense<0.000000e+00> : vector<16x32xf32>
    %3 = tpu.matmul %0, %2, %cst {dimension_numbers = #tpu.dot_dimension_numbers<[1], [0], [0], [1], [0, 0, 1, 1], [], []>} : vector<16x16xf32>, vector<16x32xf32>, vector<16x32xf32> -> vector<16x32xf32>
    %c0_4 = arith.constant 0 : index
    %c0_5 = arith.constant 0 : index
    %c0_6 = arith.constant 0 : index
    %4 = vector.load %arg3[%c0_4, %c0_5, %c0_6] : memref<3x1x32xf32, #tpu.memory_space<vmem>>, vector<1x1x32xf32>
    %5 = vector.shape_cast %4 : vector<1x1x32xf32> to vector<1x32xf32>
    %6 = vector.broadcast %5 : vector<1x32xf32> to vector<16x32xf32>
    %7 = arith.addf %3, %6 : vector<16x32xf32>
    %c0_7 = arith.constant 0 : index
    %c0_8 = arith.constant 0 : index
    %8 = vector.load %arg13[%c0_7, %c0_8] : memref<16x32xf32, #tpu.memory_space<vmem>>, vector<16x32xf32>
    tpu.vector_store %arg13[%c0_7, %c0_8], %7 {strides = array<i32>} : memref<16x32xf32, #tpu.memory_space<vmem>>, vector<16x32xf32>,
    %c1 = arith.constant 1 : index
    %c0_9 = arith.constant 0 : index
    %c0_10 = arith.constant 0 : index
    %9 = vector.load %arg1[%c1, %c0_9, %c0_10] : memref<3x16x32xf32, #tpu.memory_space<vmem>>, vector<1x16x32xf32>
    %10 = vector.shape_cast %9 : vector<1x16x32xf32> to vector<16x32xf32>
    %cst_11 = arith.constant dense<0.000000e+00> : vector<16x32xf32>
    %11 = tpu.matmul %0, %10, %cst_11 {dimension_numbers = #tpu.dot_dimension_numbers<[1], [0], [0], [1], [0, 0, 1, 1], [], []>} : vector<16x16xf32>, vector<16x32xf32>, vector<16x32xf32> -> vector<16x32xf32>
    %c1_12 = arith.constant 1 : index
    %c0_13 = arith.constant 0 : index
    %c0_14 = arith.constant 0 : index
    %12 = vector.load %arg3[%c1_12, %c0_13, %c0_14] : memref<3x1x32xf32, #tpu.memory_space<vmem>>, vector<1x1x32xf32>
    %13 = vector.shape_cast %12 : vector<1x1x32xf32> to vector<1x32xf32>
    %14 = vector.broadcast %13 : vector<1x32xf32> to vector<16x32xf32>
    %15 = arith.addf %11, %14 : vector<16x32xf32>
    %c0_15 = arith.constant 0 : index
    %c0_16 = arith.constant 0 : index
    %16 = vector.load %arg14[%c0_15, %c0_16] : memref<16x32xf32, #tpu.memory_space<vmem>>, vector<16x32xf32>
    tpu.vector_store %arg14[%c0_15, %c0_16], %15 {strides = array<i32>} : memref<16x32xf32, #tpu.memory_space<vmem>>, vector<16x32xf32>,
    %c2 = arith.constant 2 : index
    %c0_17 = arith.constant 0 : index
    %c0_18 = arith.constant 0 : index
    %17 = vector.load %arg1[%c2, %c0_17, %c0_18] : memref<3x16x32xf32, #tpu.memory_space<vmem>>, vector<1x16x32xf32>
    %18 = vector.shape_cast %17 : vector<1x16x32xf32> to vector<16x32xf32>
    %cst_19 = arith.constant dense<0.000000e+00> : vector<16x32xf32>
    %19 = tpu.matmul %0, %18, %cst_19 {dimension_numbers = #tpu.dot_dimension_numbers<[1], [0], [0], [1], [0, 0, 1, 1], [], []>} : vector<16x16xf32>, vector<16x32xf32>, vector<16x32xf32> -> vector<16x32xf32>
    %c2_20 = arith.constant 2 : index
    %c0_21 = arith.constant 0 : index
    %c0_22 = arith.constant 0 : index
    %20 = vector.load %arg3[%c2_20, %c0_21, %c0_22] : memref<3x1x32xf32, #tpu.memory_space<vmem>>, vector<1x1x32xf32>
    %21 = vector.shape_cast %20 : vector<1x1x32xf32> to vector<1x32xf32>
    %22 = vector.broadcast %21 : vector<1x32xf32> to vector<16x32xf32>
    %23 = arith.addf %19, %22 : vector<16x32xf32>
    %c0_23 = arith.constant 0 : index
    %c0_24 = arith.constant 0 : index
    %24 = vector.load %arg15[%c0_23, %c0_24] : memref<16x32xf32, #tpu.memory_space<vmem>>, vector<16x32xf32>
    tpu.vector_store %arg15[%c0_23, %c0_24], %23 {strides = array<i32>} : memref<16x32xf32, #tpu.memory_space<vmem>>, vector<16x32xf32>,
    %c0_25 = arith.constant 0 : index
    %c0_26 = arith.constant 0 : index
    %c0_27 = arith.constant 0 : index
    %25 = vector.load %arg5[%c0_25, %c0_26, %c0_27] : memref<3x16x32xf32, #tpu.memory_space<vmem>>, vector<1x16x32xf32>
    %26 = vector.shape_cast %25 : vector<1x16x32xf32> to vector<16x32xf32>
    %cst_28 = arith.constant dense<0.000000e+00> : vector<16x32xf32>
    %27 = tpu.matmul %0, %26, %cst_28 {dimension_numbers = #tpu.dot_dimension_numbers<[1], [0], [0], [1], [0, 0, 1, 1], [], []>} : vector<16x16xf32>, vector<16x32xf32>, vector<16x32xf32> -> vector<16x32xf32>
    %c0_29 = arith.constant 0 : index
    %c0_30 = arith.constant 0 : index
    %c0_31 = arith.constant 0 : index
    %28 = vector.load %arg7[%c0_29, %c0_30, %c0_31] : memref<3x1x32xf32, #tpu.memory_space<vmem>>, vector<1x1x32xf32>
    %29 = vector.shape_cast %28 : vector<1x1x32xf32> to vector<1x32xf32>
    %30 = vector.broadcast %29 : vector<1x32xf32> to vector<16x32xf32>
    %31 = arith.addf %27, %30 : vector<16x32xf32>
    %c0_32 = arith.constant 0 : index
    %c0_33 = arith.constant 0 : index
    %32 = vector.load %arg16[%c0_32, %c0_33] : memref<16x32xf32, #tpu.memory_space<vmem>>, vector<16x32xf32>
    tpu.vector_store %arg16[%c0_32, %c0_33], %31 {strides = array<i32>} : memref<16x32xf32, #tpu.memory_space<vmem>>, vector<16x32xf32>,
    %c1_34 = arith.constant 1 : index
    %c0_35 = arith.constant 0 : index
    %c0_36 = arith.constant 0 : index
    %33 = vector.load %arg5[%c1_34, %c0_35, %c0_36] : memref<3x16x32xf32, #tpu.memory_space<vmem>>, vector<1x16x32xf32>
    %34 = vector.shape_cast %33 : vector<1x16x32xf32> to vector<16x32xf32>
    %cst_37 = arith.constant dense<0.000000e+00> : vector<16x32xf32>
    %35 = tpu.matmul %0, %34, %cst_37 {dimension_numbers = #tpu.dot_dimension_numbers<[1], [0], [0], [1], [0, 0, 1, 1], [], []>} : vector<16x16xf32>, vector<16x32xf32>, vector<16x32xf32> -> vector<16x32xf32>
    %c1_38 = arith.constant 1 : index
    %c0_39 = arith.constant 0 : index
    %c0_40 = arith.constant 0 : index
    %36 = vector.load %arg7[%c1_38, %c0_39, %c0_40] : memref<3x1x32xf32, #tpu.memory_space<vmem>>, vector<1x1x32xf32>
    %37 = vector.shape_cast %36 : vector<1x1x32xf32> to vector<1x32xf32>
    %38 = vector.broadcast %37 : vector<1x32xf32> to vector<16x32xf32>
    %39 = arith.addf %35, %38 : vector<16x32xf32>
    %c0_41 = arith.constant 0 : index
    %c0_42 = arith.constant 0 : index
    %40 = vector.load %arg17[%c0_41, %c0_42] : memref<16x32xf32, #tpu.memory_space<vmem>>, vector<16x32xf32>
    tpu.vector_store %arg17[%c0_41, %c0_42], %39 {strides = array<i32>} : memref<16x32xf32, #tpu.memory_space<vmem>>, vector<16x32xf32>,
    %c2_43 = arith.constant 2 : index
    %c0_44 = arith.constant 0 : index
    %c0_45 = arith.constant 0 : index
    %41 = vector.load %arg5[%c2_43, %c0_44, %c0_45] : memref<3x16x32xf32, #tpu.memory_space<vmem>>, vector<1x16x32xf32>
    %42 = vector.shape_cast %41 : vector<1x16x32xf32> to vector<16x32xf32>
    %cst_46 = arith.constant dense<0.000000e+00> : vector<16x32xf32>
    %43 = tpu.matmul %0, %42, %cst_46 {dimension_numbers = #tpu.dot_dimension_numbers<[1], [0], [0], [1], [0, 0, 1, 1], [], []>} : vector<16x16xf32>, vector<16x32xf32>, vector<16x32xf32> -> vector<16x32xf32>
    %c2_47 = arith.constant 2 : index
    %c0_48 = arith.constant 0 : index
    %c0_49 = arith.constant 0 : index
    %44 = vector.load %arg7[%c2_47, %c0_48, %c0_49] : memref<3x1x32xf32, #tpu.memory_space<vmem>>, vector<1x1x32xf32>
    %45 = vector.shape_cast %44 : vector<1x1x32xf32> to vector<1x32xf32>
    %46 = vector.broadcast %45 : vector<1x32xf32> to vector<16x32xf32>
    %47 = arith.addf %43, %46 : vector<16x32xf32>
    %c0_50 = arith.constant 0 : index
    %c0_51 = arith.constant 0 : index
    %48 = vector.load %arg18[%c0_50, %c0_51] : memref<16x32xf32, #tpu.memory_space<vmem>>, vector<16x32xf32>
    tpu.vector_store %arg18[%c0_50, %c0_51], %47 {strides = array<i32>} : memref<16x32xf32, #tpu.memory_space<vmem>>, vector<16x32xf32>,
    %c0_52 = arith.constant 0 : index
    %c0_53 = arith.constant 0 : index
    %c0_54 = arith.constant 0 : index
    %49 = vector.load %arg2[%c0_52, %c0_53, %c0_54] : memref<3x32x32xf32, #tpu.memory_space<vmem>>, vector<1x32x32xf32>
    %50 = vector.shape_cast %49 : vector<1x32x32xf32> to vector<32x32xf32>
    %c1_55 = arith.constant 1 : index
    %c0_56 = arith.constant 0 : index
    %c0_57 = arith.constant 0 : index
    %51 = vector.load %arg2[%c1_55, %c0_56, %c0_57] : memref<3x32x32xf32, #tpu.memory_space<vmem>>, vector<1x32x32xf32>
    %52 = vector.shape_cast %51 : vector<1x32x32xf32> to vector<32x32xf32>
    %c2_58 = arith.constant 2 : index
    %c0_59 = arith.constant 0 : index
    %c0_60 = arith.constant 0 : index
    %53 = vector.load %arg2[%c2_58, %c0_59, %c0_60] : memref<3x32x32xf32, #tpu.memory_space<vmem>>, vector<1x32x32xf32>
    %54 = vector.shape_cast %53 : vector<1x32x32xf32> to vector<32x32xf32>
    %c0_61 = arith.constant 0 : index
    %c0_62 = arith.constant 0 : index
    %c0_63 = arith.constant 0 : index
    %55 = vector.load %arg6[%c0_61, %c0_62, %c0_63] : memref<3x32x32xf32, #tpu.memory_space<vmem>>, vector<1x32x32xf32>
    %56 = vector.shape_cast %55 : vector<1x32x32xf32> to vector<32x32xf32>
    %c1_64 = arith.constant 1 : index
    %c0_65 = arith.constant 0 : index
    %c0_66 = arith.constant 0 : index
    %57 = vector.load %arg6[%c1_64, %c0_65, %c0_66] : memref<3x32x32xf32, #tpu.memory_space<vmem>>, vector<1x32x32xf32>
    %58 = vector.shape_cast %57 : vector<1x32x32xf32> to vector<32x32xf32>
    %c2_67 = arith.constant 2 : index
    %c0_68 = arith.constant 0 : index
    %c0_69 = arith.constant 0 : index
    %59 = vector.load %arg6[%c2_67, %c0_68, %c0_69] : memref<3x32x32xf32, #tpu.memory_space<vmem>>, vector<1x32x32xf32>
    %60 = vector.shape_cast %59 : vector<1x32x32xf32> to vector<32x32xf32>
    %c0_70 = arith.constant 0 : index
    %c0_71 = arith.constant 0 : index
    %c0_72 = arith.constant 0 : index
    %61 = vector.load %arg4[%c0_70, %c0_71, %c0_72] : memref<3x1x32xf32, #tpu.memory_space<vmem>>, vector<1x1x32xf32>
    %62 = vector.shape_cast %61 : vector<1x1x32xf32> to vector<1x32xf32>
    %c1_73 = arith.constant 1 : index
    %c0_74 = arith.constant 0 : index
    %c0_75 = arith.constant 0 : index
    %63 = vector.load %arg4[%c1_73, %c0_74, %c0_75] : memref<3x1x32xf32, #tpu.memory_space<vmem>>, vector<1x1x32xf32>
    %64 = vector.shape_cast %63 : vector<1x1x32xf32> to vector<1x32xf32>
    %c2_76 = arith.constant 2 : index
    %c0_77 = arith.constant 0 : index
    %c0_78 = arith.constant 0 : index
    %65 = vector.load %arg4[%c2_76, %c0_77, %c0_78] : memref<3x1x32xf32, #tpu.memory_space<vmem>>, vector<1x1x32xf32>
    %66 = vector.shape_cast %65 : vector<1x1x32xf32> to vector<1x32xf32>
    %c0_79 = arith.constant 0 : index
    %c0_80 = arith.constant 0 : index
    %c0_81 = arith.constant 0 : index
    %67 = vector.load %arg8[%c0_79, %c0_80, %c0_81] : memref<3x1x32xf32, #tpu.memory_space<vmem>>, vector<1x1x32xf32>
    %68 = vector.shape_cast %67 : vector<1x1x32xf32> to vector<1x32xf32>
    %c1_82 = arith.constant 1 : index
    %c0_83 = arith.constant 0 : index
    %c0_84 = arith.constant 0 : index
    %69 = vector.load %arg8[%c1_82, %c0_83, %c0_84] : memref<3x1x32xf32, #tpu.memory_space<vmem>>, vector<1x1x32xf32>
    %70 = vector.shape_cast %69 : vector<1x1x32xf32> to vector<1x32xf32>
    %c2_85 = arith.constant 2 : index
    %c0_86 = arith.constant 0 : index
    %c0_87 = arith.constant 0 : index
    %71 = vector.load %arg8[%c2_85, %c0_86, %c0_87] : memref<3x1x32xf32, #tpu.memory_space<vmem>>, vector<1x1x32xf32>
    %72 = vector.shape_cast %71 : vector<1x1x32xf32> to vector<1x32xf32>
    %cst_88 = arith.constant 0.000000e+00 : f32
    %73 = vector.broadcast %cst_88 : f32 to vector<2x32xf32>
    %cst_89 = arith.constant 0.000000e+00 : f32
    %74 = vector.broadcast %cst_89 : f32 to vector<2x32xf32>
    %c0_90 = arith.constant 0 : index
    %c0_91 = arith.constant 0 : index
    %75 = vector.load %arg13[%c0_90, %c0_91] : memref<16x32xf32, #tpu.memory_space<vmem>>, vector<2x32xf32>
    %c0_92 = arith.constant 0 : index
    %c0_93 = arith.constant 0 : index
    %76 = vector.load %arg14[%c0_92, %c0_93] : memref<16x32xf32, #tpu.memory_space<vmem>>, vector<2x32xf32>
    %c0_94 = arith.constant 0 : index
    %c0_95 = arith.constant 0 : index
    %77 = vector.load %arg15[%c0_94, %c0_95] : memref<16x32xf32, #tpu.memory_space<vmem>>, vector<2x32xf32>
    %cst_96 = arith.constant dense<0.000000e+00> : vector<2x32xf32>
    %78 = tpu.matmul %73, %50, %cst_96 {dimension_numbers = #tpu.dot_dimension_numbers<[1], [0], [0], [1], [0, 0, 1, 1], [], []>} : vector<2x32xf32>, vector<32x32xf32>, vector<2x32xf32> -> vector<2x32xf32>
    %79 = arith.addf %75, %78 : vector<2x32xf32>
    %80 = vector.broadcast %62 : vector<1x32xf32> to vector<2x32xf32>
    %81 = arith.addf %79, %80 : vector<2x32xf32>
    %82 = arith.negf %81 : vector<2x32xf32>
    %83 = math.exp %82 : vector<2x32xf32>
    %cst_97 = arith.constant 1.000000e+00 : f32
    %84 = vector.broadcast %cst_97 : f32 to vector<2x32xf32>
    %85 = arith.addf %84, %83 : vector<2x32xf32>
    %86 = arith.divf %84, %85 : vector<2x32xf32>
    %cst_98 = arith.constant dense<0.000000e+00> : vector<2x32xf32>
    %87 = tpu.matmul %73, %52, %cst_98 {dimension_numbers = #tpu.dot_dimension_numbers<[1], [0], [0], [1], [0, 0, 1, 1], [], []>} : vector<2x32xf32>, vector<32x32xf32>, vector<2x32xf32> -> vector<2x32xf32>
    %88 = arith.addf %76, %87 : vector<2x32xf32>
    %89 = vector.broadcast %64 : vector<1x32xf32> to vector<2x32xf32>
    %90 = arith.addf %88, %89 : vector<2x32xf32>
    %91 = arith.negf %90 : vector<2x32xf32>
    %92 = math.exp %91 : vector<2x32xf32>
    %cst_99 = arith.constant 1.000000e+00 : f32
    %93 = vector.broadcast %cst_99 : f32 to vector<2x32xf32>
    %94 = arith.addf %93, %92 : vector<2x32xf32>
    %95 = arith.divf %93, %94 : vector<2x32xf32>
    %cst_100 = arith.constant dense<0.000000e+00> : vector<2x32xf32>
    %96 = tpu.matmul %73, %54, %cst_100 {dimension_numbers = #tpu.dot_dimension_numbers<[1], [0], [0], [1], [0, 0, 1, 1], [], []>} : vector<2x32xf32>, vector<32x32xf32>, vector<2x32xf32> -> vector<2x32xf32>
    %97 = vector.broadcast %66 : vector<1x32xf32> to vector<2x32xf32>
    %98 = arith.addf %96, %97 : vector<2x32xf32>
    %99 = arith.mulf %86, %98 : vector<2x32xf32>
    %100 = arith.addf %77, %99 : vector<2x32xf32>
    %101 = math.tanh %100 : vector<2x32xf32>
    %cst_101 = arith.constant 1.000000e+00 : f32
    %102 = vector.broadcast %cst_101 : f32 to vector<2x32xf32>
    %103 = arith.subf %102, %95 : vector<2x32xf32>
    %104 = arith.mulf %103, %101 : vector<2x32xf32>
    %105 = arith.mulf %95, %73 : vector<2x32xf32>
    %106 = arith.addf %104, %105 : vector<2x32xf32>
    %c14 = arith.constant 14 : index
    %c0_102 = arith.constant 0 : index
    %107 = vector.load %arg16[%c14, %c0_102] : memref<16x32xf32, #tpu.memory_space<vmem>>, vector<2x32xf32>
    %c14_103 = arith.constant 14 : index
    %c0_104 = arith.constant 0 : index
    %108 = vector.load %arg17[%c14_103, %c0_104] : memref<16x32xf32, #tpu.memory_space<vmem>>, vector<2x32xf32>
    %c14_105 = arith.constant 14 : index
    %c0_106 = arith.constant 0 : index
    %109 = vector.load %arg18[%c14_105, %c0_106] : memref<16x32xf32, #tpu.memory_space<vmem>>, vector<2x32xf32>
    %cst_107 = arith.constant dense<0.000000e+00> : vector<2x32xf32>
    %110 = tpu.matmul %74, %56, %cst_107 {dimension_numbers = #tpu.dot_dimension_numbers<[1], [0], [0], [1], [0, 0, 1, 1], [], []>} : vector<2x32xf32>, vector<32x32xf32>, vector<2x32xf32> -> vector<2x32xf32>
    %111 = arith.addf %107, %110 : vector<2x32xf32>
    %112 = vector.broadcast %68 : vector<1x32xf32> to vector<2x32xf32>
    %113 = arith.addf %111, %112 : vector<2x32xf32>
    %114 = arith.negf %113 : vector<2x32xf32>
    %115 = math.exp %114 : vector<2x32xf32>
    %cst_108 = arith.constant 1.000000e+00 : f32
    %116 = vector.broadcast %cst_108 : f32 to vector<2x32xf32>
    %117 = arith.addf %116, %115 : vector<2x32xf32>
    %118 = arith.divf %116, %117 : vector<2x32xf32>
    %cst_109 = arith.constant dense<0.000000e+00> : vector<2x32xf32>
    %119 = tpu.matmul %74, %58, %cst_109 {dimension_numbers = #tpu.dot_dimension_numbers<[1], [0], [0], [1], [0, 0, 1, 1], [], []>} : vector<2x32xf32>, vector<32x32xf32>, vector<2x32xf32> -> vector<2x32xf32>
    %120 = arith.addf %108, %119 : vector<2x32xf32>
    %121 = vector.broadcast %70 : vector<1x32xf32> to vector<2x32xf32>
    %122 = arith.addf %120, %121 : vector<2x32xf32>
    %123 = arith.negf %122 : vector<2x32xf32>
    %124 = math.exp %123 : vector<2x32xf32>
    %cst_110 = arith.constant 1.000000e+00 : f32
    %125 = vector.broadcast %cst_110 : f32 to vector<2x32xf32>
    %126 = arith.addf %125, %124 : vector<2x32xf32>
    %127 = arith.divf %125, %126 : vector<2x32xf32>
    %cst_111 = arith.constant dense<0.000000e+00> : vector<2x32xf32>
    %128 = tpu.matmul %74, %60, %cst_111 {dimension_numbers = #tpu.dot_dimension_numbers<[1], [0], [0], [1], [0, 0, 1, 1], [], []>} : vector<2x32xf32>, vector<32x32xf32>, vector<2x32xf32> -> vector<2x32xf32>
    %129 = vector.broadcast %72 : vector<1x32xf32> to vector<2x32xf32>
    %130 = arith.addf %128, %129 : vector<2x32xf32>
    %131 = arith.mulf %118, %130 : vector<2x32xf32>
    %132 = arith.addf %109, %131 : vector<2x32xf32>
    %133 = math.tanh %132 : vector<2x32xf32>
    %cst_112 = arith.constant 1.000000e+00 : f32
    %134 = vector.broadcast %cst_112 : f32 to vector<2x32xf32>
    %135 = arith.subf %134, %127 : vector<2x32xf32>
    %136 = arith.mulf %135, %133 : vector<2x32xf32>
    %137 = arith.mulf %127, %74 : vector<2x32xf32>
    %138 = arith.addf %136, %137 : vector<2x32xf32>
    %c0_113 = arith.constant 0 : index
    %c0_114 = arith.constant 0 : index
    %139 = vector.load %arg19[%c0_113, %c0_114] : memref<16x32xf32, #tpu.memory_space<vmem>>, vector<2x32xf32>
    tpu.vector_store %arg19[%c0_113, %c0_114], %106 {strides = array<i32>} : memref<16x32xf32, #tpu.memory_space<vmem>>, vector<2x32xf32>,
    %c14_115 = arith.constant 14 : index
    %c0_116 = arith.constant 0 : index
    %140 = vector.load %arg20[%c14_115, %c0_116] : memref<16x32xf32, #tpu.memory_space<vmem>>, vector<2x32xf32>
    tpu.vector_store %arg20[%c14_115, %c0_116], %138 {strides = array<i32>} : memref<16x32xf32, #tpu.memory_space<vmem>>, vector<2x32xf32>,
    %c2_117 = arith.constant 2 : index
    %c0_118 = arith.constant 0 : index
    %141 = vector.load %arg13[%c2_117, %c0_118] : memref<16x32xf32, #tpu.memory_space<vmem>>, vector<2x32xf32>
    %c2_119 = arith.constant 2 : index
    %c0_120 = arith.constant 0 : index
    %142 = vector.load %arg14[%c2_119, %c0_120] : memref<16x32xf32, #tpu.memory_space<vmem>>, vector<2x32xf32>
    %c2_121 = arith.constant 2 : index
    %c0_122 = arith.constant 0 : index
    %143 = vector.load %arg15[%c2_121, %c0_122] : memref<16x32xf32, #tpu.memory_space<vmem>>, vector<2x32xf32>
    %cst_123 = arith.constant dense<0.000000e+00> : vector<2x32xf32>
    %144 = tpu.matmul %106, %50, %cst_123 {dimension_numbers = #tpu.dot_dimension_numbers<[1], [0], [0], [1], [0, 0, 1, 1], [], []>} : vector<2x32xf32>, vector<32x32xf32>, vector<2x32xf32> -> vector<2x32xf32>
    %145 = arith.addf %141, %144 : vector<2x32xf32>
    %146 = vector.broadcast %62 : vector<1x32xf32> to vector<2x32xf32>
    %147 = arith.addf %145, %146 : vector<2x32xf32>
    %148 = arith.negf %147 : vector<2x32xf32>
    %149 = math.exp %148 : vector<2x32xf32>
    %cst_124 = arith.constant 1.000000e+00 : f32
    %150 = vector.broadcast %cst_124 : f32 to vector<2x32xf32>
    %151 = arith.addf %150, %149 : vector<2x32xf32>
    %152 = arith.divf %150, %151 : vector<2x32xf32>
    %cst_125 = arith.constant dense<0.000000e+00> : vector<2x32xf32>
    %153 = tpu.matmul %106, %52, %cst_125 {dimension_numbers = #tpu.dot_dimension_numbers<[1], [0], [0], [1], [0, 0, 1, 1], [], []>} : vector<2x32xf32>, vector<32x32xf32>, vector<2x32xf32> -> vector<2x32xf32>
    %154 = arith.addf %142, %153 : vector<2x32xf32>
    %155 = vector.broadcast %64 : vector<1x32xf32> to vector<2x32xf32>
    %156 = arith.addf %154, %155 : vector<2x32xf32>
    %157 = arith.negf %156 : vector<2x32xf32>
    %158 = math.exp %157 : vector<2x32xf32>
    %cst_126 = arith.constant 1.000000e+00 : f32
    %159 = vector.broadcast %cst_126 : f32 to vector<2x32xf32>
    %160 = arith.addf %159, %158 : vector<2x32xf32>
    %161 = arith.divf %159, %160 : vector<2x32xf32>
    %cst_127 = arith.constant dense<0.000000e+00> : vector<2x32xf32>
    %162 = tpu.matmul %106, %54, %cst_127 {dimension_numbers = #tpu.dot_dimension_numbers<[1], [0], [0], [1], [0, 0, 1, 1], [], []>} : vector<2x32xf32>, vector<32x32xf32>, vector<2x32xf32> -> vector<2x32xf32>
    %163 = vector.broadcast %66 : vector<1x32xf32> to vector<2x32xf32>
    %164 = arith.addf %162, %163 : vector<2x32xf32>
    %165 = arith.mulf %152, %164 : vector<2x32xf32>
    %166 = arith.addf %143, %165 : vector<2x32xf32>
    %167 = math.tanh %166 : vector<2x32xf32>
    %cst_128 = arith.constant 1.000000e+00 : f32
    %168 = vector.broadcast %cst_128 : f32 to vector<2x32xf32>
    %169 = arith.subf %168, %161 : vector<2x32xf32>
    %170 = arith.mulf %169, %167 : vector<2x32xf32>
    %171 = arith.mulf %161, %106 : vector<2x32xf32>
    %172 = arith.addf %170, %171 : vector<2x32xf32>
    %c12 = arith.constant 12 : index
    %c0_129 = arith.constant 0 : index
    %173 = vector.load %arg16[%c12, %c0_129] : memref<16x32xf32, #tpu.memory_space<vmem>>, vector<2x32xf32>
    %c12_130 = arith.constant 12 : index
    %c0_131 = arith.constant 0 : index
    %174 = vector.load %arg17[%c12_130, %c0_131] : memref<16x32xf32, #tpu.memory_space<vmem>>, vector<2x32xf32>
    %c12_132 = arith.constant 12 : index
    %c0_133 = arith.constant 0 : index
    %175 = vector.load %arg18[%c12_132, %c0_133] : memref<16x32xf32, #tpu.memory_space<vmem>>, vector<2x32xf32>
    %cst_134 = arith.constant dense<0.000000e+00> : vector<2x32xf32>
    %176 = tpu.matmul %138, %56, %cst_134 {dimension_numbers = #tpu.dot_dimension_numbers<[1], [0], [0], [1], [0, 0, 1, 1], [], []>} : vector<2x32xf32>, vector<32x32xf32>, vector<2x32xf32> -> vector<2x32xf32>
    %177 = arith.addf %173, %176 : vector<2x32xf32>
    %178 = vector.broadcast %68 : vector<1x32xf32> to vector<2x32xf32>
    %179 = arith.addf %177, %178 : vector<2x32xf32>
    %180 = arith.negf %179 : vector<2x32xf32>
    %181 = math.exp %180 : vector<2x32xf32>
    %cst_135 = arith.constant 1.000000e+00 : f32
    %182 = vector.broadcast %cst_135 : f32 to vector<2x32xf32>
    %183 = arith.addf %182, %181 : vector<2x32xf32>
    %184 = arith.divf %182, %183 : vector<2x32xf32>
    %cst_136 = arith.constant dense<0.000000e+00> : vector<2x32xf32>
    %185 = tpu.matmul %138, %58, %cst_136 {dimension_numbers = #tpu.dot_dimension_numbers<[1], [0], [0], [1], [0, 0, 1, 1], [], []>} : vector<2x32xf32>, vector<32x32xf32>, vector<2x32xf32> -> vector<2x32xf32>
    %186 = arith.addf %174, %185 : vector<2x32xf32>
    %187 = vector.broadcast %70 : vector<1x32xf32> to vector<2x32xf32>
    %188 = arith.addf %186, %187 : vector<2x32xf32>
    %189 = arith.negf %188 : vector<2x32xf32>
    %190 = math.exp %189 : vector<2x32xf32>
    %cst_137 = arith.constant 1.000000e+00 : f32
    %191 = vector.broadcast %cst_137 : f32 to vector<2x32xf32>
    %192 = arith.addf %191, %190 : vector<2x32xf32>
    %193 = arith.divf %191, %192 : vector<2x32xf32>
    %cst_138 = arith.constant dense<0.000000e+00> : vector<2x32xf32>
    %194 = tpu.matmul %138, %60, %cst_138 {dimension_numbers = #tpu.dot_dimension_numbers<[1], [0], [0], [1], [0, 0, 1, 1], [], []>} : vector<2x32xf32>, vector<32x32xf32>, vector<2x32xf32> -> vector<2x32xf32>
    %195 = vector.broadcast %72 : vector<1x32xf32> to vector<2x32xf32>
    %196 = arith.addf %194, %195 : vector<2x32xf32>
    %197 = arith.mulf %184, %196 : vector<2x32xf32>
    %198 = arith.addf %175, %197 : vector<2x32xf32>
    %199 = math.tanh %198 : vector<2x32xf32>
    %cst_139 = arith.constant 1.000000e+00 : f32
    %200 = vector.broadcast %cst_139 : f32 to vector<2x32xf32>
    %201 = arith.subf %200, %193 : vector<2x32xf32>
    %202 = arith.mulf %201, %199 : vector<2x32xf32>
    %203 = arith.mulf %193, %138 : vector<2x32xf32>
    %204 = arith.addf %202, %203 : vector<2x32xf32>
    %c2_140 = arith.constant 2 : index
    %c0_141 = arith.constant 0 : index
    %205 = vector.load %arg19[%c2_140, %c0_141] : memref<16x32xf32, #tpu.memory_space<vmem>>, vector<2x32xf32>
    tpu.vector_store %arg19[%c2_140, %c0_141], %172 {strides = array<i32>} : memref<16x32xf32, #tpu.memory_space<vmem>>, vector<2x32xf32>,
    %c12_142 = arith.constant 12 : index
    %c0_143 = arith.constant 0 : index
    %206 = vector.load %arg20[%c12_142, %c0_143] : memref<16x32xf32, #tpu.memory_space<vmem>>, vector<2x32xf32>
    tpu.vector_store %arg20[%c12_142, %c0_143], %204 {strides = array<i32>} : memref<16x32xf32, #tpu.memory_space<vmem>>, vector<2x32xf32>,
    %c4 = arith.constant 4 : index
    %c0_144 = arith.constant 0 : index
    %207 = vector.load %arg13[%c4, %c0_144] : memref<16x32xf32, #tpu.memory_space<vmem>>, vector<2x32xf32>
    %c4_145 = arith.constant 4 : index
    %c0_146 = arith.constant 0 : index
    %208 = vector.load %arg14[%c4_145, %c0_146] : memref<16x32xf32, #tpu.memory_space<vmem>>, vector<2x32xf32>
    %c4_147 = arith.constant 4 : index
    %c0_148 = arith.constant 0 : index
    %209 = vector.load %arg15[%c4_147, %c0_148] : memref<16x32xf32, #tpu.memory_space<vmem>>, vector<2x32xf32>
    %cst_149 = arith.constant dense<0.000000e+00> : vector<2x32xf32>
    %210 = tpu.matmul %172, %50, %cst_149 {dimension_numbers = #tpu.dot_dimension_numbers<[1], [0], [0], [1], [0, 0, 1, 1], [], []>} : vector<2x32xf32>, vector<32x32xf32>, vector<2x32xf32> -> vector<2x32xf32>
    %211 = arith.addf %207, %210 : vector<2x32xf32>
    %212 = vector.broadcast %62 : vector<1x32xf32> to vector<2x32xf32>
    %213 = arith.addf %211, %212 : vector<2x32xf32>
    %214 = arith.negf %213 : vector<2x32xf32>
    %215 = math.exp %214 : vector<2x32xf32>
    %cst_150 = arith.constant 1.000000e+00 : f32
    %216 = vector.broadcast %cst_150 : f32 to vector<2x32xf32>
    %217 = arith.addf %216, %215 : vector<2x32xf32>
    %218 = arith.divf %216, %217 : vector<2x32xf32>
    %cst_151 = arith.constant dense<0.000000e+00> : vector<2x32xf32>
    %219 = tpu.matmul %172, %52, %cst_151 {dimension_numbers = #tpu.dot_dimension_numbers<[1], [0], [0], [1], [0, 0, 1, 1], [], []>} : vector<2x32xf32>, vector<32x32xf32>, vector<2x32xf32> -> vector<2x32xf32>
    %220 = arith.addf %208, %219 : vector<2x32xf32>
    %221 = vector.broadcast %64 : vector<1x32xf32> to vector<2x32xf32>
    %222 = arith.addf %220, %221 : vector<2x32xf32>
    %223 = arith.negf %222 : vector<2x32xf32>
    %224 = math.exp %223 : vector<2x32xf32>
    %cst_152 = arith.constant 1.000000e+00 : f32
    %225 = vector.broadcast %cst_152 : f32 to vector<2x32xf32>
    %226 = arith.addf %225, %224 : vector<2x32xf32>
    %227 = arith.divf %225, %226 : vector<2x32xf32>
    %cst_153 = arith.constant dense<0.000000e+00> : vector<2x32xf32>
    %228 = tpu.matmul %172, %54, %cst_153 {dimension_numbers = #tpu.dot_dimension_numbers<[1], [0], [0], [1], [0, 0, 1, 1], [], []>} : vector<2x32xf32>, vector<32x32xf32>, vector<2x32xf32> -> vector<2x32xf32>
    %229 = vector.broadcast %66 : vector<1x32xf32> to vector<2x32xf32>
    %230 = arith.addf %228, %229 : vector<2x32xf32>
    %231 = arith.mulf %218, %230 : vector<2x32xf32>
    %232 = arith.addf %209, %231 : vector<2x32xf32>
    %233 = math.tanh %232 : vector<2x32xf32>
    %cst_154 = arith.constant 1.000000e+00 : f32
    %234 = vector.broadcast %cst_154 : f32 to vector<2x32xf32>
    %235 = arith.subf %234, %227 : vector<2x32xf32>
    %236 = arith.mulf %235, %233 : vector<2x32xf32>
    %237 = arith.mulf %227, %172 : vector<2x32xf32>
    %238 = arith.addf %236, %237 : vector<2x32xf32>
    %c10 = arith.constant 10 : index
    %c0_155 = arith.constant 0 : index
    %239 = vector.load %arg16[%c10, %c0_155] : memref<16x32xf32, #tpu.memory_space<vmem>>, vector<2x32xf32>
    %c10_156 = arith.constant 10 : index
    %c0_157 = arith.constant 0 : index
    %240 = vector.load %arg17[%c10_156, %c0_157] : memref<16x32xf32, #tpu.memory_space<vmem>>, vector<2x32xf32>
    %c10_158 = arith.constant 10 : index
    %c0_159 = arith.constant 0 : index
    %241 = vector.load %arg18[%c10_158, %c0_159] : memref<16x32xf32, #tpu.memory_space<vmem>>, vector<2x32xf32>
    %cst_160 = arith.constant dense<0.000000e+00> : vector<2x32xf32>
    %242 = tpu.matmul %204, %56, %cst_160 {dimension_numbers = #tpu.dot_dimension_numbers<[1], [0], [0], [1], [0, 0, 1, 1], [], []>} : vector<2x32xf32>, vector<32x32xf32>, vector<2x32xf32> -> vector<2x32xf32>
    %243 = arith.addf %239, %242 : vector<2x32xf32>
    %244 = vector.broadcast %68 : vector<1x32xf32> to vector<2x32xf32>
    %245 = arith.addf %243, %244 : vector<2x32xf32>
    %246 = arith.negf %245 : vector<2x32xf32>
    %247 = math.exp %246 : vector<2x32xf32>
    %cst_161 = arith.constant 1.000000e+00 : f32
    %248 = vector.broadcast %cst_161 : f32 to vector<2x32xf32>
    %249 = arith.addf %248, %247 : vector<2x32xf32>
    %250 = arith.divf %248, %249 : vector<2x32xf32>
    %cst_162 = arith.constant dense<0.000000e+00> : vector<2x32xf32>
    %251 = tpu.matmul %204, %58, %cst_162 {dimension_numbers = #tpu.dot_dimension_numbers<[1], [0], [0], [1], [0, 0, 1, 1], [], []>} : vector<2x32xf32>, vector<32x32xf32>, vector<2x32xf32> -> vector<2x32xf32>
    %252 = arith.addf %240, %251 : vector<2x32xf32>
    %253 = vector.broadcast %70 : vector<1x32xf32> to vector<2x32xf32>
    %254 = arith.addf %252, %253 : vector<2x32xf32>
    %255 = arith.negf %254 : vector<2x32xf32>
    %256 = math.exp %255 : vector<2x32xf32>
    %cst_163 = arith.constant 1.000000e+00 : f32
    %257 = vector.broadcast %cst_163 : f32 to vector<2x32xf32>
    %258 = arith.addf %257, %256 : vector<2x32xf32>
    %259 = arith.divf %257, %258 : vector<2x32xf32>
    %cst_164 = arith.constant dense<0.000000e+00> : vector<2x32xf32>
    %260 = tpu.matmul %204, %60, %cst_164 {dimension_numbers = #tpu.dot_dimension_numbers<[1], [0], [0], [1], [0, 0, 1, 1], [], []>} : vector<2x32xf32>, vector<32x32xf32>, vector<2x32xf32> -> vector<2x32xf32>
    %261 = vector.broadcast %72 : vector<1x32xf32> to vector<2x32xf32>
    %262 = arith.addf %260, %261 : vector<2x32xf32>
    %263 = arith.mulf %250, %262 : vector<2x32xf32>
    %264 = arith.addf %241, %263 : vector<2x32xf32>
    %265 = math.tanh %264 : vector<2x32xf32>
    %cst_165 = arith.constant 1.000000e+00 : f32
    %266 = vector.broadcast %cst_165 : f32 to vector<2x32xf32>
    %267 = arith.subf %266, %259 : vector<2x32xf32>
    %268 = arith.mulf %267, %265 : vector<2x32xf32>
    %269 = arith.mulf %259, %204 : vector<2x32xf32>
    %270 = arith.addf %268, %269 : vector<2x32xf32>
    %c4_166 = arith.constant 4 : index
    %c0_167 = arith.constant 0 : index
    %271 = vector.load %arg19[%c4_166, %c0_167] : memref<16x32xf32, #tpu.memory_space<vmem>>, vector<2x32xf32>
    tpu.vector_store %arg19[%c4_166, %c0_167], %238 {strides = array<i32>} : memref<16x32xf32, #tpu.memory_space<vmem>>, vector<2x32xf32>,
    %c10_168 = arith.constant 10 : index
    %c0_169 = arith.constant 0 : index
    %272 = vector.load %arg20[%c10_168, %c0_169] : memref<16x32xf32, #tpu.memory_space<vmem>>, vector<2x32xf32>
    tpu.vector_store %arg20[%c10_168, %c0_169], %270 {strides = array<i32>} : memref<16x32xf32, #tpu.memory_space<vmem>>, vector<2x32xf32>,
    %c6 = arith.constant 6 : index
    %c0_170 = arith.constant 0 : index
    %273 = vector.load %arg13[%c6, %c0_170] : memref<16x32xf32, #tpu.memory_space<vmem>>, vector<2x32xf32>
    %c6_171 = arith.constant 6 : index
    %c0_172 = arith.constant 0 : index
    %274 = vector.load %arg14[%c6_171, %c0_172] : memref<16x32xf32, #tpu.memory_space<vmem>>, vector<2x32xf32>
    %c6_173 = arith.constant 6 : index
    %c0_174 = arith.constant 0 : index
    %275 = vector.load %arg15[%c6_173, %c0_174] : memref<16x32xf32, #tpu.memory_space<vmem>>, vector<2x32xf32>
    %cst_175 = arith.constant dense<0.000000e+00> : vector<2x32xf32>
    %276 = tpu.matmul %238, %50, %cst_175 {dimension_numbers = #tpu.dot_dimension_numbers<[1], [0], [0], [1], [0, 0, 1, 1], [], []>} : vector<2x32xf32>, vector<32x32xf32>, vector<2x32xf32> -> vector<2x32xf32>
    %277 = arith.addf %273, %276 : vector<2x32xf32>
    %278 = vector.broadcast %62 : vector<1x32xf32> to vector<2x32xf32>
    %279 = arith.addf %277, %278 : vector<2x32xf32>
    %280 = arith.negf %279 : vector<2x32xf32>
    %281 = math.exp %280 : vector<2x32xf32>
    %cst_176 = arith.constant 1.000000e+00 : f32
    %282 = vector.broadcast %cst_176 : f32 to vector<2x32xf32>
    %283 = arith.addf %282, %281 : vector<2x32xf32>
    %284 = arith.divf %282, %283 : vector<2x32xf32>
    %cst_177 = arith.constant dense<0.000000e+00> : vector<2x32xf32>
    %285 = tpu.matmul %238, %52, %cst_177 {dimension_numbers = #tpu.dot_dimension_numbers<[1], [0], [0], [1], [0, 0, 1, 1], [], []>} : vector<2x32xf32>, vector<32x32xf32>, vector<2x32xf32> -> vector<2x32xf32>
    %286 = arith.addf %274, %285 : vector<2x32xf32>
    %287 = vector.broadcast %64 : vector<1x32xf32> to vector<2x32xf32>
    %288 = arith.addf %286, %287 : vector<2x32xf32>
    %289 = arith.negf %288 : vector<2x32xf32>
    %290 = math.exp %289 : vector<2x32xf32>
    %cst_178 = arith.constant 1.000000e+00 : f32
    %291 = vector.broadcast %cst_178 : f32 to vector<2x32xf32>
    %292 = arith.addf %291, %290 : vector<2x32xf32>
    %293 = arith.divf %291, %292 : vector<2x32xf32>
    %cst_179 = arith.constant dense<0.000000e+00> : vector<2x32xf32>
    %294 = tpu.matmul %238, %54, %cst_179 {dimension_numbers = #tpu.dot_dimension_numbers<[1], [0], [0], [1], [0, 0, 1, 1], [], []>} : vector<2x32xf32>, vector<32x32xf32>, vector<2x32xf32> -> vector<2x32xf32>
    %295 = vector.broadcast %66 : vector<1x32xf32> to vector<2x32xf32>
    %296 = arith.addf %294, %295 : vector<2x32xf32>
    %297 = arith.mulf %284, %296 : vector<2x32xf32>
    %298 = arith.addf %275, %297 : vector<2x32xf32>
    %299 = math.tanh %298 : vector<2x32xf32>
    %cst_180 = arith.constant 1.000000e+00 : f32
    %300 = vector.broadcast %cst_180 : f32 to vector<2x32xf32>
    %301 = arith.subf %300, %293 : vector<2x32xf32>
    %302 = arith.mulf %301, %299 : vector<2x32xf32>
    %303 = arith.mulf %293, %238 : vector<2x32xf32>
    %304 = arith.addf %302, %303 : vector<2x32xf32>
    %c8 = arith.constant 8 : index
    %c0_181 = arith.constant 0 : index
    %305 = vector.load %arg16[%c8, %c0_181] : memref<16x32xf32, #tpu.memory_space<vmem>>, vector<2x32xf32>
    %c8_182 = arith.constant 8 : index
    %c0_183 = arith.constant 0 : index
    %306 = vector.load %arg17[%c8_182, %c0_183] : memref<16x32xf32, #tpu.memory_space<vmem>>, vector<2x32xf32>
    %c8_184 = arith.constant 8 : index
    %c0_185 = arith.constant 0 : index
    %307 = vector.load %arg18[%c8_184, %c0_185] : memref<16x32xf32, #tpu.memory_space<vmem>>, vector<2x32xf32>
    %cst_186 = arith.constant dense<0.000000e+00> : vector<2x32xf32>
    %308 = tpu.matmul %270, %56, %cst_186 {dimension_numbers = #tpu.dot_dimension_numbers<[1], [0], [0], [1], [0, 0, 1, 1], [], []>} : vector<2x32xf32>, vector<32x32xf32>, vector<2x32xf32> -> vector<2x32xf32>
    %309 = arith.addf %305, %308 : vector<2x32xf32>
    %310 = vector.broadcast %68 : vector<1x32xf32> to vector<2x32xf32>
    %311 = arith.addf %309, %310 : vector<2x32xf32>
    %312 = arith.negf %311 : vector<2x32xf32>
    %313 = math.exp %312 : vector<2x32xf32>
    %cst_187 = arith.constant 1.000000e+00 : f32
    %314 = vector.broadcast %cst_187 : f32 to vector<2x32xf32>
    %315 = arith.addf %314, %313 : vector<2x32xf32>
    %316 = arith.divf %314, %315 : vector<2x32xf32>
    %cst_188 = arith.constant dense<0.000000e+00> : vector<2x32xf32>
    %317 = tpu.matmul %270, %58, %cst_188 {dimension_numbers = #tpu.dot_dimension_numbers<[1], [0], [0], [1], [0, 0, 1, 1], [], []>} : vector<2x32xf32>, vector<32x32xf32>, vector<2x32xf32> -> vector<2x32xf32>
    %318 = arith.addf %306, %317 : vector<2x32xf32>
    %319 = vector.broadcast %70 : vector<1x32xf32> to vector<2x32xf32>
    %320 = arith.addf %318, %319 : vector<2x32xf32>
    %321 = arith.negf %320 : vector<2x32xf32>
    %322 = math.exp %321 : vector<2x32xf32>
    %cst_189 = arith.constant 1.000000e+00 : f32
    %323 = vector.broadcast %cst_189 : f32 to vector<2x32xf32>
    %324 = arith.addf %323, %322 : vector<2x32xf32>
    %325 = arith.divf %323, %324 : vector<2x32xf32>
    %cst_190 = arith.constant dense<0.000000e+00> : vector<2x32xf32>
    %326 = tpu.matmul %270, %60, %cst_190 {dimension_numbers = #tpu.dot_dimension_numbers<[1], [0], [0], [1], [0, 0, 1, 1], [], []>} : vector<2x32xf32>, vector<32x32xf32>, vector<2x32xf32> -> vector<2x32xf32>
    %327 = vector.broadcast %72 : vector<1x32xf32> to vector<2x32xf32>
    %328 = arith.addf %326, %327 : vector<2x32xf32>
    %329 = arith.mulf %316, %328 : vector<2x32xf32>
    %330 = arith.addf %307, %329 : vector<2x32xf32>
    %331 = math.tanh %330 : vector<2x32xf32>
    %cst_191 = arith.constant 1.000000e+00 : f32
    %332 = vector.broadcast %cst_191 : f32 to vector<2x32xf32>
    %333 = arith.subf %332, %325 : vector<2x32xf32>
    %334 = arith.mulf %333, %331 : vector<2x32xf32>
    %335 = arith.mulf %325, %270 : vector<2x32xf32>
    %336 = arith.addf %334, %335 : vector<2x32xf32>
    %c6_192 = arith.constant 6 : index
    %c0_193 = arith.constant 0 : index
    %337 = vector.load %arg19[%c6_192, %c0_193] : memref<16x32xf32, #tpu.memory_space<vmem>>, vector<2x32xf32>
    tpu.vector_store %arg19[%c6_192, %c0_193], %304 {strides = array<i32>} : memref<16x32xf32, #tpu.memory_space<vmem>>, vector<2x32xf32>,
    %c8_194 = arith.constant 8 : index
    %c0_195 = arith.constant 0 : index
    %338 = vector.load %arg20[%c8_194, %c0_195] : memref<16x32xf32, #tpu.memory_space<vmem>>, vector<2x32xf32>
    tpu.vector_store %arg20[%c8_194, %c0_195], %336 {strides = array<i32>} : memref<16x32xf32, #tpu.memory_space<vmem>>, vector<2x32xf32>,
    %c8_196 = arith.constant 8 : index
    %c0_197 = arith.constant 0 : index
    %339 = vector.load %arg13[%c8_196, %c0_197] : memref<16x32xf32, #tpu.memory_space<vmem>>, vector<2x32xf32>
    %c8_198 = arith.constant 8 : index
    %c0_199 = arith.constant 0 : index
    %340 = vector.load %arg14[%c8_198, %c0_199] : memref<16x32xf32, #tpu.memory_space<vmem>>, vector<2x32xf32>
    %c8_200 = arith.constant 8 : index
    %c0_201 = arith.constant 0 : index
    %341 = vector.load %arg15[%c8_200, %c0_201] : memref<16x32xf32, #tpu.memory_space<vmem>>, vector<2x32xf32>
    %cst_202 = arith.constant dense<0.000000e+00> : vector<2x32xf32>
    %342 = tpu.matmul %304, %50, %cst_202 {dimension_numbers = #tpu.dot_dimension_numbers<[1], [0], [0], [1], [0, 0, 1, 1], [], []>} : vector<2x32xf32>, vector<32x32xf32>, vector<2x32xf32> -> vector<2x32xf32>
    %343 = arith.addf %339, %342 : vector<2x32xf32>
    %344 = vector.broadcast %62 : vector<1x32xf32> to vector<2x32xf32>
    %345 = arith.addf %343, %344 : vector<2x32xf32>
    %346 = arith.negf %345 : vector<2x32xf32>
    %347 = math.exp %346 : vector<2x32xf32>
    %cst_203 = arith.constant 1.000000e+00 : f32
    %348 = vector.broadcast %cst_203 : f32 to vector<2x32xf32>
    %349 = arith.addf %348, %347 : vector<2x32xf32>
    %350 = arith.divf %348, %349 : vector<2x32xf32>
    %cst_204 = arith.constant dense<0.000000e+00> : vector<2x32xf32>
    %351 = tpu.matmul %304, %52, %cst_204 {dimension_numbers = #tpu.dot_dimension_numbers<[1], [0], [0], [1], [0, 0, 1, 1], [], []>} : vector<2x32xf32>, vector<32x32xf32>, vector<2x32xf32> -> vector<2x32xf32>
    %352 = arith.addf %340, %351 : vector<2x32xf32>
    %353 = vector.broadcast %64 : vector<1x32xf32> to vector<2x32xf32>
    %354 = arith.addf %352, %353 : vector<2x32xf32>
    %355 = arith.negf %354 : vector<2x32xf32>
    %356 = math.exp %355 : vector<2x32xf32>
    %cst_205 = arith.constant 1.000000e+00 : f32
    %357 = vector.broadcast %cst_205 : f32 to vector<2x32xf32>
    %358 = arith.addf %357, %356 : vector<2x32xf32>
    %359 = arith.divf %357, %358 : vector<2x32xf32>
    %cst_206 = arith.constant dense<0.000000e+00> : vector<2x32xf32>
    %360 = tpu.matmul %304, %54, %cst_206 {dimension_numbers = #tpu.dot_dimension_numbers<[1], [0], [0], [1], [0, 0, 1, 1], [], []>} : vector<2x32xf32>, vector<32x32xf32>, vector<2x32xf32> -> vector<2x32xf32>
    %361 = vector.broadcast %66 : vector<1x32xf32> to vector<2x32xf32>
    %362 = arith.addf %360, %361 : vector<2x32xf32>
    %363 = arith.mulf %350, %362 : vector<2x32xf32>
    %364 = arith.addf %341, %363 : vector<2x32xf32>
    %365 = math.tanh %364 : vector<2x32xf32>
    %cst_207 = arith.constant 1.000000e+00 : f32
    %366 = vector.broadcast %cst_207 : f32 to vector<2x32xf32>
    %367 = arith.subf %366, %359 : vector<2x32xf32>
    %368 = arith.mulf %367, %365 : vector<2x32xf32>
    %369 = arith.mulf %359, %304 : vector<2x32xf32>
    %370 = arith.addf %368, %369 : vector<2x32xf32>
    %c6_208 = arith.constant 6 : index
    %c0_209 = arith.constant 0 : index
    %371 = vector.load %arg16[%c6_208, %c0_209] : memref<16x32xf32, #tpu.memory_space<vmem>>, vector<2x32xf32>
    %c6_210 = arith.constant 6 : index
    %c0_211 = arith.constant 0 : index
    %372 = vector.load %arg17[%c6_210, %c0_211] : memref<16x32xf32, #tpu.memory_space<vmem>>, vector<2x32xf32>
    %c6_212 = arith.constant 6 : index
    %c0_213 = arith.constant 0 : index
    %373 = vector.load %arg18[%c6_212, %c0_213] : memref<16x32xf32, #tpu.memory_space<vmem>>, vector<2x32xf32>
    %cst_214 = arith.constant dense<0.000000e+00> : vector<2x32xf32>
    %374 = tpu.matmul %336, %56, %cst_214 {dimension_numbers = #tpu.dot_dimension_numbers<[1], [0], [0], [1], [0, 0, 1, 1], [], []>} : vector<2x32xf32>, vector<32x32xf32>, vector<2x32xf32> -> vector<2x32xf32>
    %375 = arith.addf %371, %374 : vector<2x32xf32>
    %376 = vector.broadcast %68 : vector<1x32xf32> to vector<2x32xf32>
    %377 = arith.addf %375, %376 : vector<2x32xf32>
    %378 = arith.negf %377 : vector<2x32xf32>
    %379 = math.exp %378 : vector<2x32xf32>
    %cst_215 = arith.constant 1.000000e+00 : f32
    %380 = vector.broadcast %cst_215 : f32 to vector<2x32xf32>
    %381 = arith.addf %380, %379 : vector<2x32xf32>
    %382 = arith.divf %380, %381 : vector<2x32xf32>
    %cst_216 = arith.constant dense<0.000000e+00> : vector<2x32xf32>
    %383 = tpu.matmul %336, %58, %cst_216 {dimension_numbers = #tpu.dot_dimension_numbers<[1], [0], [0], [1], [0, 0, 1, 1], [], []>} : vector<2x32xf32>, vector<32x32xf32>, vector<2x32xf32> -> vector<2x32xf32>
    %384 = arith.addf %372, %383 : vector<2x32xf32>
    %385 = vector.broadcast %70 : vector<1x32xf32> to vector<2x32xf32>
    %386 = arith.addf %384, %385 : vector<2x32xf32>
    %387 = arith.negf %386 : vector<2x32xf32>
    %388 = math.exp %387 : vector<2x32xf32>
    %cst_217 = arith.constant 1.000000e+00 : f32
    %389 = vector.broadcast %cst_217 : f32 to vector<2x32xf32>
    %390 = arith.addf %389, %388 : vector<2x32xf32>
    %391 = arith.divf %389, %390 : vector<2x32xf32>
    %cst_218 = arith.constant dense<0.000000e+00> : vector<2x32xf32>
    %392 = tpu.matmul %336, %60, %cst_218 {dimension_numbers = #tpu.dot_dimension_numbers<[1], [0], [0], [1], [0, 0, 1, 1], [], []>} : vector<2x32xf32>, vector<32x32xf32>, vector<2x32xf32> -> vector<2x32xf32>
    %393 = vector.broadcast %72 : vector<1x32xf32> to vector<2x32xf32>
    %394 = arith.addf %392, %393 : vector<2x32xf32>
    %395 = arith.mulf %382, %394 : vector<2x32xf32>
    %396 = arith.addf %373, %395 : vector<2x32xf32>
    %397 = math.tanh %396 : vector<2x32xf32>
    %cst_219 = arith.constant 1.000000e+00 : f32
    %398 = vector.broadcast %cst_219 : f32 to vector<2x32xf32>
    %399 = arith.subf %398, %391 : vector<2x32xf32>
    %400 = arith.mulf %399, %397 : vector<2x32xf32>
    %401 = arith.mulf %391, %336 : vector<2x32xf32>
    %402 = arith.addf %400, %401 : vector<2x32xf32>
    %c8_220 = arith.constant 8 : index
    %c0_221 = arith.constant 0 : index
    %403 = vector.load %arg19[%c8_220, %c0_221] : memref<16x32xf32, #tpu.memory_space<vmem>>, vector<2x32xf32>
    tpu.vector_store %arg19[%c8_220, %c0_221], %370 {strides = array<i32>} : memref<16x32xf32, #tpu.memory_space<vmem>>, vector<2x32xf32>,
    %c6_222 = arith.constant 6 : index
    %c0_223 = arith.constant 0 : index
    %404 = vector.load %arg20[%c6_222, %c0_223] : memref<16x32xf32, #tpu.memory_space<vmem>>, vector<2x32xf32>
    tpu.vector_store %arg20[%c6_222, %c0_223], %402 {strides = array<i32>} : memref<16x32xf32, #tpu.memory_space<vmem>>, vector<2x32xf32>,
    %c10_224 = arith.constant 10 : index
    %c0_225 = arith.constant 0 : index
    %405 = vector.load %arg13[%c10_224, %c0_225] : memref<16x32xf32, #tpu.memory_space<vmem>>, vector<2x32xf32>
    %c10_226 = arith.constant 10 : index
    %c0_227 = arith.constant 0 : index
    %406 = vector.load %arg14[%c10_226, %c0_227] : memref<16x32xf32, #tpu.memory_space<vmem>>, vector<2x32xf32>
    %c10_228 = arith.constant 10 : index
    %c0_229 = arith.constant 0 : index
    %407 = vector.load %arg15[%c10_228, %c0_229] : memref<16x32xf32, #tpu.memory_space<vmem>>, vector<2x32xf32>
    %cst_230 = arith.constant dense<0.000000e+00> : vector<2x32xf32>
    %408 = tpu.matmul %370, %50, %cst_230 {dimension_numbers = #tpu.dot_dimension_numbers<[1], [0], [0], [1], [0, 0, 1, 1], [], []>} : vector<2x32xf32>, vector<32x32xf32>, vector<2x32xf32> -> vector<2x32xf32>
    %409 = arith.addf %405, %408 : vector<2x32xf32>
    %410 = vector.broadcast %62 : vector<1x32xf32> to vector<2x32xf32>
    %411 = arith.addf %409, %410 : vector<2x32xf32>
    %412 = arith.negf %411 : vector<2x32xf32>
    %413 = math.exp %412 : vector<2x32xf32>
    %cst_231 = arith.constant 1.000000e+00 : f32
    %414 = vector.broadcast %cst_231 : f32 to vector<2x32xf32>
    %415 = arith.addf %414, %413 : vector<2x32xf32>
    %416 = arith.divf %414, %415 : vector<2x32xf32>
    %cst_232 = arith.constant dense<0.000000e+00> : vector<2x32xf32>
    %417 = tpu.matmul %370, %52, %cst_232 {dimension_numbers = #tpu.dot_dimension_numbers<[1], [0], [0], [1], [0, 0, 1, 1], [], []>} : vector<2x32xf32>, vector<32x32xf32>, vector<2x32xf32> -> vector<2x32xf32>
    %418 = arith.addf %406, %417 : vector<2x32xf32>
    %419 = vector.broadcast %64 : vector<1x32xf32> to vector<2x32xf32>
    %420 = arith.addf %418, %419 : vector<2x32xf32>
    %421 = arith.negf %420 : vector<2x32xf32>
    %422 = math.exp %421 : vector<2x32xf32>
    %cst_233 = arith.constant 1.000000e+00 : f32
    %423 = vector.broadcast %cst_233 : f32 to vector<2x32xf32>
    %424 = arith.addf %423, %422 : vector<2x32xf32>
    %425 = arith.divf %423, %424 : vector<2x32xf32>
    %cst_234 = arith.constant dense<0.000000e+00> : vector<2x32xf32>
    %426 = tpu.matmul %370, %54, %cst_234 {dimension_numbers = #tpu.dot_dimension_numbers<[1], [0], [0], [1], [0, 0, 1, 1], [], []>} : vector<2x32xf32>, vector<32x32xf32>, vector<2x32xf32> -> vector<2x32xf32>
    %427 = vector.broadcast %66 : vector<1x32xf32> to vector<2x32xf32>
    %428 = arith.addf %426, %427 : vector<2x32xf32>
    %429 = arith.mulf %416, %428 : vector<2x32xf32>
    %430 = arith.addf %407, %429 : vector<2x32xf32>
    %431 = math.tanh %430 : vector<2x32xf32>
    %cst_235 = arith.constant 1.000000e+00 : f32
    %432 = vector.broadcast %cst_235 : f32 to vector<2x32xf32>
    %433 = arith.subf %432, %425 : vector<2x32xf32>
    %434 = arith.mulf %433, %431 : vector<2x32xf32>
    %435 = arith.mulf %425, %370 : vector<2x32xf32>
    %436 = arith.addf %434, %435 : vector<2x32xf32>
    %c4_236 = arith.constant 4 : index
    %c0_237 = arith.constant 0 : index
    %437 = vector.load %arg16[%c4_236, %c0_237] : memref<16x32xf32, #tpu.memory_space<vmem>>, vector<2x32xf32>
    %c4_238 = arith.constant 4 : index
    %c0_239 = arith.constant 0 : index
    %438 = vector.load %arg17[%c4_238, %c0_239] : memref<16x32xf32, #tpu.memory_space<vmem>>, vector<2x32xf32>
    %c4_240 = arith.constant 4 : index
    %c0_241 = arith.constant 0 : index
    %439 = vector.load %arg18[%c4_240, %c0_241] : memref<16x32xf32, #tpu.memory_space<vmem>>, vector<2x32xf32>
    %cst_242 = arith.constant dense<0.000000e+00> : vector<2x32xf32>
    %440 = tpu.matmul %402, %56, %cst_242 {dimension_numbers = #tpu.dot_dimension_numbers<[1], [0], [0], [1], [0, 0, 1, 1], [], []>} : vector<2x32xf32>, vector<32x32xf32>, vector<2x32xf32> -> vector<2x32xf32>
    %441 = arith.addf %437, %440 : vector<2x32xf32>
    %442 = vector.broadcast %68 : vector<1x32xf32> to vector<2x32xf32>
    %443 = arith.addf %441, %442 : vector<2x32xf32>
    %444 = arith.negf %443 : vector<2x32xf32>
    %445 = math.exp %444 : vector<2x32xf32>
    %cst_243 = arith.constant 1.000000e+00 : f32
    %446 = vector.broadcast %cst_243 : f32 to vector<2x32xf32>
    %447 = arith.addf %446, %445 : vector<2x32xf32>
    %448 = arith.divf %446, %447 : vector<2x32xf32>
    %cst_244 = arith.constant dense<0.000000e+00> : vector<2x32xf32>
    %449 = tpu.matmul %402, %58, %cst_244 {dimension_numbers = #tpu.dot_dimension_numbers<[1], [0], [0], [1], [0, 0, 1, 1], [], []>} : vector<2x32xf32>, vector<32x32xf32>, vector<2x32xf32> -> vector<2x32xf32>
    %450 = arith.addf %438, %449 : vector<2x32xf32>
    %451 = vector.broadcast %70 : vector<1x32xf32> to vector<2x32xf32>
    %452 = arith.addf %450, %451 : vector<2x32xf32>
    %453 = arith.negf %452 : vector<2x32xf32>
    %454 = math.exp %453 : vector<2x32xf32>
    %cst_245 = arith.constant 1.000000e+00 : f32
    %455 = vector.broadcast %cst_245 : f32 to vector<2x32xf32>
    %456 = arith.addf %455, %454 : vector<2x32xf32>
    %457 = arith.divf %455, %456 : vector<2x32xf32>
    %cst_246 = arith.constant dense<0.000000e+00> : vector<2x32xf32>
    %458 = tpu.matmul %402, %60, %cst_246 {dimension_numbers = #tpu.dot_dimension_numbers<[1], [0], [0], [1], [0, 0, 1, 1], [], []>} : vector<2x32xf32>, vector<32x32xf32>, vector<2x32xf32> -> vector<2x32xf32>
    %459 = vector.broadcast %72 : vector<1x32xf32> to vector<2x32xf32>
    %460 = arith.addf %458, %459 : vector<2x32xf32>
    %461 = arith.mulf %448, %460 : vector<2x32xf32>
    %462 = arith.addf %439, %461 : vector<2x32xf32>
    %463 = math.tanh %462 : vector<2x32xf32>
    %cst_247 = arith.constant 1.000000e+00 : f32
    %464 = vector.broadcast %cst_247 : f32 to vector<2x32xf32>
    %465 = arith.subf %464, %457 : vector<2x32xf32>
    %466 = arith.mulf %465, %463 : vector<2x32xf32>
    %467 = arith.mulf %457, %402 : vector<2x32xf32>
    %468 = arith.addf %466, %467 : vector<2x32xf32>
    %c10_248 = arith.constant 10 : index
    %c0_249 = arith.constant 0 : index
    %469 = vector.load %arg19[%c10_248, %c0_249] : memref<16x32xf32, #tpu.memory_space<vmem>>, vector<2x32xf32>
    tpu.vector_store %arg19[%c10_248, %c0_249], %436 {strides = array<i32>} : memref<16x32xf32, #tpu.memory_space<vmem>>, vector<2x32xf32>,
    %c4_250 = arith.constant 4 : index
    %c0_251 = arith.constant 0 : index
    %470 = vector.load %arg20[%c4_250, %c0_251] : memref<16x32xf32, #tpu.memory_space<vmem>>, vector<2x32xf32>
    tpu.vector_store %arg20[%c4_250, %c0_251], %468 {strides = array<i32>} : memref<16x32xf32, #tpu.memory_space<vmem>>, vector<2x32xf32>,
    %c12_252 = arith.constant 12 : index
    %c0_253 = arith.constant 0 : index
    %471 = vector.load %arg13[%c12_252, %c0_253] : memref<16x32xf32, #tpu.memory_space<vmem>>, vector<2x32xf32>
    %c12_254 = arith.constant 12 : index
    %c0_255 = arith.constant 0 : index
    %472 = vector.load %arg14[%c12_254, %c0_255] : memref<16x32xf32, #tpu.memory_space<vmem>>, vector<2x32xf32>
    %c12_256 = arith.constant 12 : index
    %c0_257 = arith.constant 0 : index
    %473 = vector.load %arg15[%c12_256, %c0_257] : memref<16x32xf32, #tpu.memory_space<vmem>>, vector<2x32xf32>
    %cst_258 = arith.constant dense<0.000000e+00> : vector<2x32xf32>
    %474 = tpu.matmul %436, %50, %cst_258 {dimension_numbers = #tpu.dot_dimension_numbers<[1], [0], [0], [1], [0, 0, 1, 1], [], []>} : vector<2x32xf32>, vector<32x32xf32>, vector<2x32xf32> -> vector<2x32xf32>
    %475 = arith.addf %471, %474 : vector<2x32xf32>
    %476 = vector.broadcast %62 : vector<1x32xf32> to vector<2x32xf32>
    %477 = arith.addf %475, %476 : vector<2x32xf32>
    %478 = arith.negf %477 : vector<2x32xf32>
    %479 = math.exp %478 : vector<2x32xf32>
    %cst_259 = arith.constant 1.000000e+00 : f32
    %480 = vector.broadcast %cst_259 : f32 to vector<2x32xf32>
    %481 = arith.addf %480, %479 : vector<2x32xf32>
    %482 = arith.divf %480, %481 : vector<2x32xf32>
    %cst_260 = arith.constant dense<0.000000e+00> : vector<2x32xf32>
    %483 = tpu.matmul %436, %52, %cst_260 {dimension_numbers = #tpu.dot_dimension_numbers<[1], [0], [0], [1], [0, 0, 1, 1], [], []>} : vector<2x32xf32>, vector<32x32xf32>, vector<2x32xf32> -> vector<2x32xf32>
    %484 = arith.addf %472, %483 : vector<2x32xf32>
    %485 = vector.broadcast %64 : vector<1x32xf32> to vector<2x32xf32>
    %486 = arith.addf %484, %485 : vector<2x32xf32>
    %487 = arith.negf %486 : vector<2x32xf32>
    %488 = math.exp %487 : vector<2x32xf32>
    %cst_261 = arith.constant 1.000000e+00 : f32
    %489 = vector.broadcast %cst_261 : f32 to vector<2x32xf32>
    %490 = arith.addf %489, %488 : vector<2x32xf32>
    %491 = arith.divf %489, %490 : vector<2x32xf32>
    %cst_262 = arith.constant dense<0.000000e+00> : vector<2x32xf32>
    %492 = tpu.matmul %436, %54, %cst_262 {dimension_numbers = #tpu.dot_dimension_numbers<[1], [0], [0], [1], [0, 0, 1, 1], [], []>} : vector<2x32xf32>, vector<32x32xf32>, vector<2x32xf32> -> vector<2x32xf32>
    %493 = vector.broadcast %66 : vector<1x32xf32> to vector<2x32xf32>
    %494 = arith.addf %492, %493 : vector<2x32xf32>
    %495 = arith.mulf %482, %494 : vector<2x32xf32>
    %496 = arith.addf %473, %495 : vector<2x32xf32>
    %497 = math.tanh %496 : vector<2x32xf32>
    %cst_263 = arith.constant 1.000000e+00 : f32
    %498 = vector.broadcast %cst_263 : f32 to vector<2x32xf32>
    %499 = arith.subf %498, %491 : vector<2x32xf32>
    %500 = arith.mulf %499, %497 : vector<2x32xf32>
    %501 = arith.mulf %491, %436 : vector<2x32xf32>
    %502 = arith.addf %500, %501 : vector<2x32xf32>
    %c2_264 = arith.constant 2 : index
    %c0_265 = arith.constant 0 : index
    %503 = vector.load %arg16[%c2_264, %c0_265] : memref<16x32xf32, #tpu.memory_space<vmem>>, vector<2x32xf32>
    %c2_266 = arith.constant 2 : index
    %c0_267 = arith.constant 0 : index
    %504 = vector.load %arg17[%c2_266, %c0_267] : memref<16x32xf32, #tpu.memory_space<vmem>>, vector<2x32xf32>
    %c2_268 = arith.constant 2 : index
    %c0_269 = arith.constant 0 : index
    %505 = vector.load %arg18[%c2_268, %c0_269] : memref<16x32xf32, #tpu.memory_space<vmem>>, vector<2x32xf32>
    %cst_270 = arith.constant dense<0.000000e+00> : vector<2x32xf32>
    %506 = tpu.matmul %468, %56, %cst_270 {dimension_numbers = #tpu.dot_dimension_numbers<[1], [0], [0], [1], [0, 0, 1, 1], [], []>} : vector<2x32xf32>, vector<32x32xf32>, vector<2x32xf32> -> vector<2x32xf32>
    %507 = arith.addf %503, %506 : vector<2x32xf32>
    %508 = vector.broadcast %68 : vector<1x32xf32> to vector<2x32xf32>
    %509 = arith.addf %507, %508 : vector<2x32xf32>
    %510 = arith.negf %509 : vector<2x32xf32>
    %511 = math.exp %510 : vector<2x32xf32>
    %cst_271 = arith.constant 1.000000e+00 : f32
    %512 = vector.broadcast %cst_271 : f32 to vector<2x32xf32>
    %513 = arith.addf %512, %511 : vector<2x32xf32>
    %514 = arith.divf %512, %513 : vector<2x32xf32>
    %cst_272 = arith.constant dense<0.000000e+00> : vector<2x32xf32>
    %515 = tpu.matmul %468, %58, %cst_272 {dimension_numbers = #tpu.dot_dimension_numbers<[1], [0], [0], [1], [0, 0, 1, 1], [], []>} : vector<2x32xf32>, vector<32x32xf32>, vector<2x32xf32> -> vector<2x32xf32>
    %516 = arith.addf %504, %515 : vector<2x32xf32>
    %517 = vector.broadcast %70 : vector<1x32xf32> to vector<2x32xf32>
    %518 = arith.addf %516, %517 : vector<2x32xf32>
    %519 = arith.negf %518 : vector<2x32xf32>
    %520 = math.exp %519 : vector<2x32xf32>
    %cst_273 = arith.constant 1.000000e+00 : f32
    %521 = vector.broadcast %cst_273 : f32 to vector<2x32xf32>
    %522 = arith.addf %521, %520 : vector<2x32xf32>
    %523 = arith.divf %521, %522 : vector<2x32xf32>
    %cst_274 = arith.constant dense<0.000000e+00> : vector<2x32xf32>
    %524 = tpu.matmul %468, %60, %cst_274 {dimension_numbers = #tpu.dot_dimension_numbers<[1], [0], [0], [1], [0, 0, 1, 1], [], []>} : vector<2x32xf32>, vector<32x32xf32>, vector<2x32xf32> -> vector<2x32xf32>
    %525 = vector.broadcast %72 : vector<1x32xf32> to vector<2x32xf32>
    %526 = arith.addf %524, %525 : vector<2x32xf32>
    %527 = arith.mulf %514, %526 : vector<2x32xf32>
    %528 = arith.addf %505, %527 : vector<2x32xf32>
    %529 = math.tanh %528 : vector<2x32xf32>
    %cst_275 = arith.constant 1.000000e+00 : f32
    %530 = vector.broadcast %cst_275 : f32 to vector<2x32xf32>
    %531 = arith.subf %530, %523 : vector<2x32xf32>
    %532 = arith.mulf %531, %529 : vector<2x32xf32>
    %533 = arith.mulf %523, %468 : vector<2x32xf32>
    %534 = arith.addf %532, %533 : vector<2x32xf32>
    %c12_276 = arith.constant 12 : index
    %c0_277 = arith.constant 0 : index
    %535 = vector.load %arg19[%c12_276, %c0_277] : memref<16x32xf32, #tpu.memory_space<vmem>>, vector<2x32xf32>
    tpu.vector_store %arg19[%c12_276, %c0_277], %502 {strides = array<i32>} : memref<16x32xf32, #tpu.memory_space<vmem>>, vector<2x32xf32>,
    %c2_278 = arith.constant 2 : index
    %c0_279 = arith.constant 0 : index
    %536 = vector.load %arg20[%c2_278, %c0_279] : memref<16x32xf32, #tpu.memory_space<vmem>>, vector<2x32xf32>
    tpu.vector_store %arg20[%c2_278, %c0_279], %534 {strides = array<i32>} : memref<16x32xf32, #tpu.memory_space<vmem>>, vector<2x32xf32>,
    %c14_280 = arith.constant 14 : index
    %c0_281 = arith.constant 0 : index
    %537 = vector.load %arg13[%c14_280, %c0_281] : memref<16x32xf32, #tpu.memory_space<vmem>>, vector<2x32xf32>
    %c14_282 = arith.constant 14 : index
    %c0_283 = arith.constant 0 : index
    %538 = vector.load %arg14[%c14_282, %c0_283] : memref<16x32xf32, #tpu.memory_space<vmem>>, vector<2x32xf32>
    %c14_284 = arith.constant 14 : index
    %c0_285 = arith.constant 0 : index
    %539 = vector.load %arg15[%c14_284, %c0_285] : memref<16x32xf32, #tpu.memory_space<vmem>>, vector<2x32xf32>
    %cst_286 = arith.constant dense<0.000000e+00> : vector<2x32xf32>
    %540 = tpu.matmul %502, %50, %cst_286 {dimension_numbers = #tpu.dot_dimension_numbers<[1], [0], [0], [1], [0, 0, 1, 1], [], []>} : vector<2x32xf32>, vector<32x32xf32>, vector<2x32xf32> -> vector<2x32xf32>
    %541 = arith.addf %537, %540 : vector<2x32xf32>
    %542 = vector.broadcast %62 : vector<1x32xf32> to vector<2x32xf32>
    %543 = arith.addf %541, %542 : vector<2x32xf32>
    %544 = arith.negf %543 : vector<2x32xf32>
    %545 = math.exp %544 : vector<2x32xf32>
    %cst_287 = arith.constant 1.000000e+00 : f32
    %546 = vector.broadcast %cst_287 : f32 to vector<2x32xf32>
    %547 = arith.addf %546, %545 : vector<2x32xf32>
    %548 = arith.divf %546, %547 : vector<2x32xf32>
    %cst_288 = arith.constant dense<0.000000e+00> : vector<2x32xf32>
    %549 = tpu.matmul %502, %52, %cst_288 {dimension_numbers = #tpu.dot_dimension_numbers<[1], [0], [0], [1], [0, 0, 1, 1], [], []>} : vector<2x32xf32>, vector<32x32xf32>, vector<2x32xf32> -> vector<2x32xf32>
    %550 = arith.addf %538, %549 : vector<2x32xf32>
    %551 = vector.broadcast %64 : vector<1x32xf32> to vector<2x32xf32>
    %552 = arith.addf %550, %551 : vector<2x32xf32>
    %553 = arith.negf %552 : vector<2x32xf32>
    %554 = math.exp %553 : vector<2x32xf32>
    %cst_289 = arith.constant 1.000000e+00 : f32
    %555 = vector.broadcast %cst_289 : f32 to vector<2x32xf32>
    %556 = arith.addf %555, %554 : vector<2x32xf32>
    %557 = arith.divf %555, %556 : vector<2x32xf32>
    %cst_290 = arith.constant dense<0.000000e+00> : vector<2x32xf32>
    %558 = tpu.matmul %502, %54, %cst_290 {dimension_numbers = #tpu.dot_dimension_numbers<[1], [0], [0], [1], [0, 0, 1, 1], [], []>} : vector<2x32xf32>, vector<32x32xf32>, vector<2x32xf32> -> vector<2x32xf32>
    %559 = vector.broadcast %66 : vector<1x32xf32> to vector<2x32xf32>
    %560 = arith.addf %558, %559 : vector<2x32xf32>
    %561 = arith.mulf %548, %560 : vector<2x32xf32>
    %562 = arith.addf %539, %561 : vector<2x32xf32>
    %563 = math.tanh %562 : vector<2x32xf32>
    %cst_291 = arith.constant 1.000000e+00 : f32
    %564 = vector.broadcast %cst_291 : f32 to vector<2x32xf32>
    %565 = arith.subf %564, %557 : vector<2x32xf32>
    %566 = arith.mulf %565, %563 : vector<2x32xf32>
    %567 = arith.mulf %557, %502 : vector<2x32xf32>
    %568 = arith.addf %566, %567 : vector<2x32xf32>
    %c0_292 = arith.constant 0 : index
    %c0_293 = arith.constant 0 : index
    %569 = vector.load %arg16[%c0_292, %c0_293] : memref<16x32xf32, #tpu.memory_space<vmem>>, vector<2x32xf32>
    %c0_294 = arith.constant 0 : index
    %c0_295 = arith.constant 0 : index
    %570 = vector.load %arg17[%c0_294, %c0_295] : memref<16x32xf32, #tpu.memory_space<vmem>>, vector<2x32xf32>
    %c0_296 = arith.constant 0 : index
    %c0_297 = arith.constant 0 : index
    %571 = vector.load %arg18[%c0_296, %c0_297] : memref<16x32xf32, #tpu.memory_space<vmem>>, vector<2x32xf32>
    %cst_298 = arith.constant dense<0.000000e+00> : vector<2x32xf32>
    %572 = tpu.matmul %534, %56, %cst_298 {dimension_numbers = #tpu.dot_dimension_numbers<[1], [0], [0], [1], [0, 0, 1, 1], [], []>} : vector<2x32xf32>, vector<32x32xf32>, vector<2x32xf32> -> vector<2x32xf32>
    %573 = arith.addf %569, %572 : vector<2x32xf32>
    %574 = vector.broadcast %68 : vector<1x32xf32> to vector<2x32xf32>
    %575 = arith.addf %573, %574 : vector<2x32xf32>
    %576 = arith.negf %575 : vector<2x32xf32>
    %577 = math.exp %576 : vector<2x32xf32>
    %cst_299 = arith.constant 1.000000e+00 : f32
    %578 = vector.broadcast %cst_299 : f32 to vector<2x32xf32>
    %579 = arith.addf %578, %577 : vector<2x32xf32>
    %580 = arith.divf %578, %579 : vector<2x32xf32>
    %cst_300 = arith.constant dense<0.000000e+00> : vector<2x32xf32>
    %581 = tpu.matmul %534, %58, %cst_300 {dimension_numbers = #tpu.dot_dimension_numbers<[1], [0], [0], [1], [0, 0, 1, 1], [], []>} : vector<2x32xf32>, vector<32x32xf32>, vector<2x32xf32> -> vector<2x32xf32>
    %582 = arith.addf %570, %581 : vector<2x32xf32>
    %583 = vector.broadcast %70 : vector<1x32xf32> to vector<2x32xf32>
    %584 = arith.addf %582, %583 : vector<2x32xf32>
    %585 = arith.negf %584 : vector<2x32xf32>
    %586 = math.exp %585 : vector<2x32xf32>
    %cst_301 = arith.constant 1.000000e+00 : f32
    %587 = vector.broadcast %cst_301 : f32 to vector<2x32xf32>
    %588 = arith.addf %587, %586 : vector<2x32xf32>
    %589 = arith.divf %587, %588 : vector<2x32xf32>
    %cst_302 = arith.constant dense<0.000000e+00> : vector<2x32xf32>
    %590 = tpu.matmul %534, %60, %cst_302 {dimension_numbers = #tpu.dot_dimension_numbers<[1], [0], [0], [1], [0, 0, 1, 1], [], []>} : vector<2x32xf32>, vector<32x32xf32>, vector<2x32xf32> -> vector<2x32xf32>
    %591 = vector.broadcast %72 : vector<1x32xf32> to vector<2x32xf32>
    %592 = arith.addf %590, %591 : vector<2x32xf32>
    %593 = arith.mulf %580, %592 : vector<2x32xf32>
    %594 = arith.addf %571, %593 : vector<2x32xf32>
    %595 = math.tanh %594 : vector<2x32xf32>
    %cst_303 = arith.constant 1.000000e+00 : f32
    %596 = vector.broadcast %cst_303 : f32 to vector<2x32xf32>
    %597 = arith.subf %596, %589 : vector<2x32xf32>
    %598 = arith.mulf %597, %595 : vector<2x32xf32>
    %599 = arith.mulf %589, %534 : vector<2x32xf32>
    %600 = arith.addf %598, %599 : vector<2x32xf32>
    %c14_304 = arith.constant 14 : index
    %c0_305 = arith.constant 0 : index
    %601 = vector.load %arg19[%c14_304, %c0_305] : memref<16x32xf32, #tpu.memory_space<vmem>>, vector<2x32xf32>
    tpu.vector_store %arg19[%c14_304, %c0_305], %568 {strides = array<i32>} : memref<16x32xf32, #tpu.memory_space<vmem>>, vector<2x32xf32>,
    %c0_306 = arith.constant 0 : index
    %c0_307 = arith.constant 0 : index
    %602 = vector.load %arg20[%c0_306, %c0_307] : memref<16x32xf32, #tpu.memory_space<vmem>>, vector<2x32xf32>
    tpu.vector_store %arg20[%c0_306, %c0_307], %600 {strides = array<i32>} : memref<16x32xf32, #tpu.memory_space<vmem>>, vector<2x32xf32>,
    %c0_308 = arith.constant 0 : index
    %c0_309 = arith.constant 0 : index
    %603 = vector.load %arg19[%c0_308, %c0_309] : memref<16x32xf32, #tpu.memory_space<vmem>>, vector<16x32xf32>
    %c0_310 = arith.constant 0 : index
    %c0_311 = arith.constant 0 : index
    %604 = vector.load %arg9[%c0_310, %c0_311] : memref<32x8xf32, #tpu.memory_space<vmem>>, vector<32x8xf32>
    %cst_312 = arith.constant dense<0.000000e+00> : vector<16x8xf32>
    %605 = tpu.matmul %603, %604, %cst_312 {dimension_numbers = #tpu.dot_dimension_numbers<[1], [0], [0], [1], [0, 0, 1, 1], [], []>} : vector<16x32xf32>, vector<32x8xf32>, vector<16x8xf32> -> vector<16x8xf32>
    %c0_313 = arith.constant 0 : index
    %c0_314 = arith.constant 0 : index
    %606 = vector.load %arg20[%c0_313, %c0_314] : memref<16x32xf32, #tpu.memory_space<vmem>>, vector<16x32xf32>
    %c0_315 = arith.constant 0 : index
    %c0_316 = arith.constant 0 : index
    %607 = vector.load %arg10[%c0_315, %c0_316] : memref<32x8xf32, #tpu.memory_space<vmem>>, vector<32x8xf32>
    %cst_317 = arith.constant dense<0.000000e+00> : vector<16x8xf32>
    %608 = tpu.matmul %606, %607, %cst_317 {dimension_numbers = #tpu.dot_dimension_numbers<[1], [0], [0], [1], [0, 0, 1, 1], [], []>} : vector<16x32xf32>, vector<32x8xf32>, vector<16x8xf32> -> vector<16x8xf32>
    %609 = arith.addf %605, %608 : vector<16x8xf32>
    %c0_318 = arith.constant 0 : index
    %c0_319 = arith.constant 0 : index
    %610 = vector.load %arg11[%c0_318, %c0_319] : memref<1x8xf32, #tpu.memory_space<vmem>>, vector<1x8xf32>
    %611 = vector.broadcast %610 : vector<1x8xf32> to vector<16x8xf32>
    %612 = arith.addf %609, %611 : vector<16x8xf32>
    %cst_320 = arith.constant dense<0xFF800000> : vector<16xf32>
    %613 = vector.multi_reduction <maximumf>, %612, %cst_320 [1] : vector<16x8xf32> to vector<16xf32>
    %614 = vector.shape_cast %613 : vector<16xf32> to vector<16x1xf32>
    %615 = vector.broadcast %614 : vector<16x1xf32> to vector<16x8xf32>
    %616 = arith.subf %612, %615 : vector<16x8xf32>
    %617 = math.exp %616 : vector<16x8xf32>
    %cst_321 = arith.constant dense<0.000000e+00> : vector<16xf32>
    %618 = vector.multi_reduction <add>, %617, %cst_321 [1] : vector<16x8xf32> to vector<16xf32>
    %619 = vector.shape_cast %618 : vector<16xf32> to vector<16x1xf32>
    %620 = tpu.reciprocal %619 {approx = true} : vector<16x1xf32> -> vector<16x1xf32>
    %621 = vector.broadcast %620 : vector<16x1xf32> to vector<16x8xf32>
    %622 = arith.mulf %617, %621 : vector<16x8xf32>
    %c0_322 = arith.constant 0 : index
    %c0_323 = arith.constant 0 : index
    %623 = vector.load %arg12[%c0_322, %c0_323] : memref<16x8xf32, #tpu.memory_space<vmem>>, vector<16x8xf32>
    tpu.vector_store %arg12[%c0_322, %c0_323], %622 {strides = array<i32>} : memref<16x8xf32, #tpu.memory_space<vmem>>, vector<16x8xf32>,
    return
  }
}

</mosaic_0001>

<llo_original>
// kernel: net_forward.1
$region0: #{net_forward.1}
  #allocation0 [shape = 'u32[]', space=smem, size = 0x4, offset = 0x4, fixed_abs, tag = 'smem constant byte address 0x4 - core index']
  #allocation1 [shape = 'u32[144,128]{1,0:T(1,128)}', space=vmem, size = 0x12000, scoped, tag = 'internal scratch']
  #allocation2 [shape = 'f32[16,32]{1,0:T(8,128)}', space=vmem, size = 0x2000, scoped, tag = 'scratch operand']
  #allocation3 [shape = 'f32[16,32]{1,0:T(8,128)}', space=vmem, size = 0x2000, scoped, tag = 'scratch operand']
  #allocation4 [shape = 'f32[16,32]{1,0:T(8,128)}', space=vmem, size = 0x2000, scoped, tag = 'scratch operand']
  #allocation5 [shape = 'f32[16,32]{1,0:T(8,128)}', space=vmem, size = 0x2000, scoped, tag = 'scratch operand']
  #allocation6 [shape = 'f32[16,32]{1,0:T(8,128)}', space=vmem, size = 0x2000, scoped, tag = 'scratch operand']
  #allocation7 [shape = 'f32[16,32]{1,0:T(8,128)}', space=vmem, size = 0x2000, scoped, tag = 'scratch operand']
  #allocation8 [shape = 'f32[16,32]{1,0:T(8,128)}', space=vmem, size = 0x2000, scoped, tag = 'scratch operand']
  #allocation9 [shape = 'f32[16,32]{1,0:T(8,128)}', space=vmem, size = 0x2000, scoped, tag = 'scratch operand']
  %s0 = inlined_call_operand.vmem [shape: f32[16,16], index: 0, kind: input, shape index: {}]
  %s1 = inlined_call_operand.vmem [shape: f32[3,16,32], index: 1, kind: input, shape index: {}]
  %s2 = inlined_call_operand.vmem [shape: f32[3,32,32], index: 2, kind: input, shape index: {}]
  %s3 = inlined_call_operand.vmem [shape: f32[3,1,32], index: 3, kind: input, shape index: {}]
  %s4 = inlined_call_operand.vmem [shape: f32[3,1,32], index: 4, kind: input, shape index: {}]
  %s5 = inlined_call_operand.vmem [shape: f32[3,16,32], index: 5, kind: input, shape index: {}]
  %s6 = inlined_call_operand.vmem [shape: f32[3,32,32], index: 6, kind: input, shape index: {}]
  %s7 = inlined_call_operand.vmem [shape: f32[3,1,32], index: 7, kind: input, shape index: {}]
  %s8 = inlined_call_operand.vmem [shape: f32[3,1,32], index: 8, kind: input, shape index: {}]
  %s9 = inlined_call_operand.vmem [shape: f32[32,8], index: 9, kind: input, shape index: {}]
  %s10 = inlined_call_operand.vmem [shape: f32[32,8], index: 10, kind: input, shape index: {}]
  %s11 = inlined_call_operand.vmem [shape: f32[1,8], index: 11, kind: input, shape index: {}]
  %s12 = inlined_call_operand.vmem [shape: f32[16,8], index: 12, kind: output, shape index: {}]
  %s13 = sld [smem:[#allocation0]]
  $region58: #{net_forward.1} parent=0
    _
  %s15 = ssub.s32 1, %s13
  %s16 = scalar_select 0, %s15, %s13
  // Predicated region
  $region2: #{net_forward.1} parent=0 // pred_check
    _
  $region3: #{net_forward.1} parent=0 // pred_check_branch
    %18 = sbr.rel (0) target = $region5
  $region4: #{net_forward.1} parent=0 // pred_region
    _
  $region5: #{net_forward.1} parent=0 // pred_fallthru
    _
  // Predicated region
  $region6: #{net_forward.1} parent=0 // pred_check
    _
  $region7: #{net_forward.1} parent=0 // pred_check_branch
    %20 = sbr.rel (0) target = $region9
  $region8: #{net_forward.1} parent=0 // pred_region
    _
  $region9: #{net_forward.1} parent=0 // pred_fallthru
    _
  // Predicated region
  $region10: #{net_forward.1} parent=0 // pred_check
    _
  $region11: #{net_forward.1} parent=0 // pred_check_branch
    %22 = sbr.rel (0) target = $region13
  $region12: #{net_forward.1} parent=0 // pred_region
    _
  $region13: #{net_forward.1} parent=0 // pred_fallthru
    _
  // Predicated region
  $region14: #{net_forward.1} parent=0 // pred_check
    _
  $region15: #{net_forward.1} parent=0 // pred_check_branch
    %24 = sbr.rel (0) target = $region17
  $region16: #{net_forward.1} parent=0 // pred_region
    _
  $region17: #{net_forward.1} parent=0 // pred_fallthru
    _
  // Predicated region
  $region18: #{net_forward.1} parent=0 // pred_check
    _
  $region19: #{net_forward.1} parent=0 // pred_check_branch
    %26 = sbr.rel (0) target = $region21
  $region20: #{net_forward.1} parent=0 // pred_region
    _
  $region21: #{net_forward.1} parent=0 // pred_fallthru
    _
  // Predicated region
  $region22: #{net_forward.1} parent=0 // pred_check
    _
  $region23: #{net_forward.1} parent=0 // pred_check_branch
    %28 = sbr.rel (0) target = $region25
  $region24: #{net_forward.1} parent=0 // pred_region
    _
  $region25: #{net_forward.1} parent=0 // pred_fallthru
    _
  // Predicated region
  $region26: #{net_forward.1} parent=0 // pred_check
    _
  $region27: #{net_forward.1} parent=0 // pred_check_branch
    %30 = sbr.rel (0) target = $region29
  $region28: #{net_forward.1} parent=0 // pred_region
    _
  $region29: #{net_forward.1} parent=0 // pred_fallthru
    _
  // Predicated region
  $region30: #{net_forward.1} parent=0 // pred_check
    _
  $region31: #{net_forward.1} parent=0 // pred_check_branch
    %32 = sbr.rel (0) target = $region33
  $region32: #{net_forward.1} parent=0 // pred_region
    _
  $region33: #{net_forward.1} parent=0 // pred_fallthru
    _
  // Predicated region
  $region34: #{net_forward.1} parent=0 // pred_check
    _
  $region35: #{net_forward.1} parent=0 // pred_check_branch
    %34 = sbr.rel (0) target = $region37
  $region36: #{net_forward.1} parent=0 // pred_region
    _
  $region37: #{net_forward.1} parent=0 // pred_fallthru
    _
  // Predicated region
  $region38: #{net_forward.1} parent=0 // pred_check
    _
  $region39: #{net_forward.1} parent=0 // pred_check_branch
    %36 = sbr.rel (0) target = $region41
  $region40: #{net_forward.1} parent=0 // pred_region
    _
  $region41: #{net_forward.1} parent=0 // pred_fallthru
    _
  // Predicated region
  $region42: #{net_forward.1} parent=0 // pred_check
    _
  $region43: #{net_forward.1} parent=0 // pred_check_branch
    %38 = sbr.rel (0) target = $region45
  $region44: #{net_forward.1} parent=0 // pred_region
    _
  $region45: #{net_forward.1} parent=0 // pred_fallthru
    _
  // Predicated region
  $region46: #{net_forward.1} parent=0 // pred_check
    _
  $region47: #{net_forward.1} parent=0 // pred_check_branch
    %40 = sbr.rel (0) target = $region49
  $region48: #{net_forward.1} parent=0 // pred_region
    _
  $region49: #{net_forward.1} parent=0 // pred_fallthru
    _
  %v41 = vld [vmem:[%s0] sm:$0xff]
  %v42 = vld [vmem:[%s0 + $0x8] sm:$0xff]
  %v43 = vld [vmem:[%s1] sm:$0xff]
  %v44 = vld [vmem:[%s1 + $0x8] sm:$0xff]
  %v45 = vld [vmem:[%s3] sm:$0x1]
  %v47 = vlaneseq
  %v48 = vshrl.u32 %v47, 7
  %v49 = vsub.s32 0, %v48
  %v50 = vrot.slane %v45, %v49
  %vm52 = vcmask 130048
  %v54 = vsel %vm52, %v41, 0
  %v57 = vsel %vm52, %v42, 0
  %59 = vmatprep.subr.mxu0 0.0
  %60 = vmatpush1.msra.mxu0 %v43
  %61 = vmatprep.subr.mxu0 0.0
  %62 = vmatpush1.msra.mxu0 %v44
  %63 = vmatprep.subr.mxu0 0.0
  %64 = vmatpush1.msra.mxu0 0.0
  %65 = vmatprep.subr.mxu0 0.0
  %66 = vmatpush1.msra.mxu0 0.0
  %67 = vmatprep.subr.mxu0 0.0
  %68 = vmatpush1.msra.mxu0 0.0
  %69 = vmatprep.subr.mxu0 0.0
  %70 = vmatpush1.msra.mxu0 0.0
  %71 = vmatprep.subr.mxu0 0.0
  %72 = vmatpush1.msra.mxu0 0.0
  %73 = vmatprep.subr.mxu0 0.0
  %74 = vmatpush1.msra.mxu0 0.0
  %75 = vmatprep.subr.mxu0 0.0
  %76 = vmatpush1.msra.mxu0 0.0
  %77 = vmatprep.subr.mxu0 0.0
  %78 = vmatpush1.msra.mxu0 0.0
  %79 = vmatprep.subr.mxu0 0.0
  %80 = vmatpush1.msra.mxu0 0.0
  %81 = vmatprep.subr.mxu0 0.0
  %82 = vmatpush1.msra.mxu0 0.0
  %83 = vmatprep.subr.mxu0 0.0
  %84 = vmatpush1.msra.mxu0 0.0
  %85 = vmatprep.subr.mxu0 0.0
  %86 = vmatpush1.msra.mxu0 0.0
  %87 = vmatprep.subr.mxu0 0.0
  %88 = vmatpush1.msra.mxu0 0.0
  %89 = vmatprep.subr.mxu0 0.0
  %90 = vmatpush1.msra.mxu0 0.0
  %91 = vmatprep.subr.mxu0 0.0
  %92 = vmatpush1.msra.mxu0 0.0
  %93 = vmatprep.subr.mxu0 0.0
  %94 = vmatpush1.msra.mxu0 0.0
  %95 = vmatprep.subr.mxu0 0.0
  %96 = vmatpush1.msra.mxu0 0.0
  %97 = vmatprep.subr.mxu0 0.0
  %98 = vmatpush1.msra.mxu0 0.0
  %99 = vmatprep.subr.mxu0 0.0
  %100 = vmatpush1.msra.mxu0 0.0
  %101 = vmatprep.subr.mxu0 0.0
  %102 = vmatpush1.msra.mxu0 0.0
  %103 = vmatprep.subr.mxu0 0.0
  %104 = vmatpush1.msra.mxu0 0.0
  %105 = vmatprep.subr.mxu0 0.0
  %106 = vmatpush1.msra.mxu0 0.0
  %107 = vmatprep.subr.mxu0 0.0
  %108 = vmatpush1.msra.mxu0 0.0
  %109 = vmatprep.subr.mxu0 0.0
  %110 = vmatpush1.msra.mxu0 0.0
  %111 = vmatprep.subr.mxu0 0.0
  %112 = vmatpush1.msra.mxu0 0.0
  %113 = vmatprep.subr.mxu0 0.0
  %114 = vmatpush1.msra.mxu0 0.0
  %115 = vmatprep.subr.mxu0 0.0
  %116 = vmatpush1.msra.mxu0 0.0
  %117 = vmatprep.subr.mxu0 0.0
  %118 = vmatpush1.msra.mxu0 0.0
  %119 = vmatprep.subr.mxu0 0.0
  %120 = vmatpush1.msra.mxu0 0.0
  %121 = vmatprep.subr.mxu0 0.0
  %122 = vmatpush1.msra.mxu0 0.0
  %123 = vmatprep.mubr.f32.mxu0 0.0
  %124 = vmatmul.mubr.f32.gmra.mrb[0].mxu0 %v54
  %v125 = vpop.f32.mrb[0].mxu0
  %v126 = vadd.f32 %v50, %v125
  %v127 = vpop.f32.mrb[0].mxu0
  %128 = vmatprep.mubr.f32.mxu0 0.0
  %129 = vmatmul.mubr.f32.gmra.mrb[0].mxu0 %v57
  %v130 = vpop.f32.mrb[0].mxu0
  %v131 = vadd.f32 %v50, %v130
  %v132 = vpop.f32.mrb[0].mxu0
  %133 = vdwg.mxu0
  %vm134 = vcmask 261120
  %135 = vst.msk [vmem:[#allocation2] sm:$0xff] %vm134, %v126
  %136 = vst.msk [vmem:[#allocation2 + $0x8] sm:$0xff] %vm134, %v131
  %s137 = scalar_lea.vmem %s1, 16
  %v138 = vld [vmem:[%s137] sm:$0xff]
  %v139 = vld [vmem:[%s137 + $0x8] sm:$0xff]
  %s140 = scalar_lea.vmem %s3, 1
  %v141 = vld [vmem:[%s140] sm:$0x1]
  %v143 = vlaneseq
  %v144 = vshrl.u32 %v143, 7
  %v145 = vsub.s32 0, %v144
  %v146 = vrot.slane %v141, %v145
  %148 = vmatprep.subr.mxu0 0.0
  %149 = vmatpush1.msra.mxu0 %v138
  %150 = vmatprep.subr.mxu0 0.0
  %151 = vmatpush1.msra.mxu0 %v139
  %152 = vmatprep.subr.mxu0 0.0
  %153 = vmatpush1.msra.mxu0 0.0
  %154 = vmatprep.subr.mxu0 0.0
  %155 = vmatpush1.msra.mxu0 0.0
  %156 = vmatprep.subr.mxu0 0.0
  %157 = vmatpush1.msra.mxu0 0.0
  %158 = vmatprep.subr.mxu0 0.0
  %159 = vmatpush1.msra.mxu0 0.0
  %160 = vmatprep.subr.mxu0 0.0
  %161 = vmatpush1.msra.mxu0 0.0
  %162 = vmatprep.subr.mxu0 0.0
  %163 = vmatpush1.msra.mxu0 0.0
  %164 = vmatprep.subr.mxu0 0.0
  %165 = vmatpush1.msra.mxu0 0.0
  %166 = vmatprep.subr.mxu0 0.0
  %167 = vmatpush1.msra.mxu0 0.0
  %168 = vmatprep.subr.mxu0 0.0
  %169 = vmatpush1.msra.mxu0 0.0
  %170 = vmatprep.subr.mxu0 0.0
  %171 = vmatpush1.msra.mxu0 0.0
  %172 = vmatprep.subr.mxu0 0.0
  %173 = vmatpush1.msra.mxu0 0.0
  %174 = vmatprep.subr.mxu0 0.0
  %175 = vmatpush1.msra.mxu0 0.0
  %176 = vmatprep.subr.mxu0 0.0
  %177 = vmatpush1.msra.mxu0 0.0
  %178 = vmatprep.subr.mxu0 0.0
  %179 = vmatpush1.msra.mxu0 0.0
  %180 = vmatprep.subr.mxu0 0.0
  %181 = vmatpush1.msra.mxu0 0.0
  %182 = vmatprep.subr.mxu0 0.0
  %183 = vmatpush1.msra.mxu0 0.0
  %184 = vmatprep.subr.mxu0 0.0
  %185 = vmatpush1.msra.mxu0 0.0
  %186 = vmatprep.subr.mxu0 0.0
  %187 = vmatpush1.msra.mxu0 0.0
  %188 = vmatprep.subr.mxu0 0.0
  %189 = vmatpush1.msra.mxu0 0.0
  %190 = vmatprep.subr.mxu0 0.0
  %191 = vmatpush1.msra.mxu0 0.0
  %192 = vmatprep.subr.mxu0 0.0
  %193 = vmatpush1.msra.mxu0 0.0
  %194 = vmatprep.subr.mxu0 0.0
  %195 = vmatpush1.msra.mxu0 0.0
  %196 = vmatprep.subr.mxu0 0.0
  %197 = vmatpush1.msra.mxu0 0.0
  %198 = vmatprep.subr.mxu0 0.0
  %199 = vmatpush1.msra.mxu0 0.0
  %200 = vmatprep.subr.mxu0 0.0
  %201 = vmatpush1.msra.mxu0 0.0
  %202 = vmatprep.subr.mxu0 0.0
  %203 = vmatpush1.msra.mxu0 0.0
  %204 = vmatprep.subr.mxu0 0.0
  %205 = vmatpush1.msra.mxu0 0.0
  %206 = vmatprep.subr.mxu0 0.0
  %207 = vmatpush1.msra.mxu0 0.0
  %208 = vmatprep.subr.mxu0 0.0
  %209 = vmatpush1.msra.mxu0 0.0
  %210 = vmatprep.subr.mxu0 0.0
  %211 = vmatpush1.msra.mxu0 0.0
  %212 = vmatprep.mubr.f32.mxu0 0.0
  %213 = vmatmul.mubr.f32.gmra.mrb[0].mxu0 %v54
  %v214 = vpop.f32.mrb[0].mxu0
  %v215 = vadd.f32 %v146, %v214
  %v216 = vpop.f32.mrb[0].mxu0
  %217 = vmatprep.mubr.f32.mxu0 0.0
  %218 = vmatmul.mubr.f32.gmra.mrb[0].mxu0 %v57
  %v219 = vpop.f32.mrb[0].mxu0
  %v220 = vadd.f32 %v146, %v219
  %v221 = vpop.f32.mrb[0].mxu0
  %222 = vdwg.mxu0
  %223 = vst.msk [vmem:[#allocation3] sm:$0xff] %vm134, %v215
  %224 = vst.msk [vmem:[#allocation3 + $0x8] sm:$0xff] %vm134, %v220
  %s225 = scalar_lea.vmem %s1, 32
  %v226 = vld [vmem:[%s225] sm:$0xff]
  %v227 = vld [vmem:[%s225 + $0x8] sm:$0xff]
  %s228 = scalar_lea.vmem %s3, 2
  %v229 = vld [vmem:[%s228] sm:$0x1]
  %v231 = vlaneseq
  %v232 = vshrl.u32 %v231, 7
  %v233 = vsub.s32 0, %v232
  %v234 = vrot.slane %v229, %v233
  %236 = vmatprep.subr.mxu0 0.0
  %237 = vmatpush1.msra.mxu0 %v226
  %238 = vmatprep.subr.mxu0 0.0
  %239 = vmatpush1.msra.mxu0 %v227
  %240 = vmatprep.subr.mxu0 0.0
  %241 = vmatpush1.msra.mxu0 0.0
  %242 = vmatprep.subr.mxu0 0.0
  %243 = vmatpush1.msra.mxu0 0.0
  %244 = vmatprep.subr.mxu0 0.0
  %245 = vmatpush1.msra.mxu0 0.0
  %246 = vmatprep.subr.mxu0 0.0
  %247 = vmatpush1.msra.mxu0 0.0
  %248 = vmatprep.subr.mxu0 0.0
  %249 = vmatpush1.msra.mxu0 0.0
  %250 = vmatprep.subr.mxu0 0.0
  %251 = vmatpush1.msra.mxu0 0.0
  %252 = vmatprep.subr.mxu0 0.0
  %253 = vmatpush1.msra.mxu0 0.0
  %254 = vmatprep.subr.mxu0 0.0
  %255 = vmatpush1.msra.mxu0 0.0
  %256 = vmatprep.subr.mxu0 0.0
  %257 = vmatpush1.msra.mxu0 0.0
  %258 = vmatprep.subr.mxu0 0.0
  %259 = vmatpush1.msra.mxu0 0.0
  %260 = vmatprep.subr.mxu0 0.0
  %261 = vmatpush1.msra.mxu0 0.0
  %262 = vmatprep.subr.mxu0 0.0
  %263 = vmatpush1.msra.mxu0 0.0
  %264 = vmatprep.subr.mxu0 0.0
  %265 = vmatpush1.msra.mxu0 0.0
  %266 = vmatprep.subr.mxu0 0.0
  %267 = vmatpush1.msra.mxu0 0.0
  %268 = vmatprep.subr.mxu0 0.0
  %269 = vmatpush1.msra.mxu0 0.0
  %270 = vmatprep.subr.mxu0 0.0
  %271 = vmatpush1.msra.mxu0 0.0
  %272 = vmatprep.subr.mxu0 0.0
  %273 = vmatpush1.msra.mxu0 0.0
  %274 = vmatprep.subr.mxu0 0.0
  %275 = vmatpush1.msra.mxu0 0.0
  %276 = vmatprep.subr.mxu0 0.0
  %277 = vmatpush1.msra.mxu0 0.0
  %278 = vmatprep.subr.mxu0 0.0
  %279 = vmatpush1.msra.mxu0 0.0
  %280 = vmatprep.subr.mxu0 0.0
  %281 = vmatpush1.msra.mxu0 0.0
  %282 = vmatprep.subr.mxu0 0.0
  %283 = vmatpush1.msra.mxu0 0.0
  %284 = vmatprep.subr.mxu0 0.0
  %285 = vmatpush1.msra.mxu0 0.0
  %286 = vmatprep.subr.mxu0 0.0
  %287 = vmatpush1.msra.mxu0 0.0
  %288 = vmatprep.subr.mxu0 0.0
  %289 = vmatpush1.msra.mxu0 0.0
  %290 = vmatprep.subr.mxu0 0.0
  %291 = vmatpush1.msra.mxu0 0.0
  %292 = vmatprep.subr.mxu0 0.0
  %293 = vmatpush1.msra.mxu0 0.0
  %294 = vmatprep.subr.mxu0 0.0
  %295 = vmatpush1.msra.mxu0 0.0
  %296 = vmatprep.subr.mxu0 0.0
  %297 = vmatpush1.msra.mxu0 0.0
  %298 = vmatprep.subr.mxu0 0.0
  %299 = vmatpush1.msra.mxu0 0.0
  %300 = vmatprep.mubr.f32.mxu0 0.0
  %301 = vmatmul.mubr.f32.gmra.mrb[0].mxu0 %v54
  %v302 = vpop.f32.mrb[0].mxu0
  %v303 = vadd.f32 %v234, %v302
  %v304 = vpop.f32.mrb[0].mxu0
  %305 = vmatprep.mubr.f32.mxu0 0.0
  %306 = vmatmul.mubr.f32.gmra.mrb[0].mxu0 %v57
  %v307 = vpop.f32.mrb[0].mxu0
  %v308 = vadd.f32 %v234, %v307
  %v309 = vpop.f32.mrb[0].mxu0
  %310 = vdwg.mxu0
  %311 = vst.msk [vmem:[#allocation4] sm:$0xff] %vm134, %v303
  %312 = vst.msk [vmem:[#allocation4 + $0x8] sm:$0xff] %vm134, %v308
  %v313 = vld [vmem:[%s5] sm:$0xff]
  %v314 = vld [vmem:[%s5 + $0x8] sm:$0xff]
  %v315 = vld [vmem:[%s7] sm:$0x1]
  %v317 = vlaneseq
  %v318 = vshrl.u32 %v317, 7
  %v319 = vsub.s32 0, %v318
  %v320 = vrot.slane %v315, %v319
  %322 = vmatprep.subr.mxu0 0.0
  %323 = vmatpush1.msra.mxu0 %v313
  %324 = vmatprep.subr.mxu0 0.0
  %325 = vmatpush1.msra.mxu0 %v314
  %326 = vmatprep.subr.mxu0 0.0
  %327 = vmatpush1.msra.mxu0 0.0
  %328 = vmatprep.subr.mxu0 0.0
  %329 = vmatpush1.msra.mxu0 0.0
  %330 = vmatprep.subr.mxu0 0.0
  %331 = vmatpush1.msra.mxu0 0.0
  %332 = vmatprep.subr.mxu0 0.0
  %333 = vmatpush1.msra.mxu0 0.0
  %334 = vmatprep.subr.mxu0 0.0
  %335 = vmatpush1.msra.mxu0 0.0
  %336 = vmatprep.subr.mxu0 0.0
  %337 = vmatpush1.msra.mxu0 0.0
  %338 = vmatprep.subr.mxu0 0.0
  %339 = vmatpush1.msra.mxu0 0.0
  %340 = vmatprep.subr.mxu0 0.0
  %341 = vmatpush1.msra.mxu0 0.0
  %342 = vmatprep.subr.mxu0 0.0
  %343 = vmatpush1.msra.mxu0 0.0
  %344 = vmatprep.subr.mxu0 0.0
  %345 = vmatpush1.msra.mxu0 0.0
  %346 = vmatprep.subr.mxu0 0.0
  %347 = vmatpush1.msra.mxu0 0.0
  %348 = vmatprep.subr.mxu0 0.0
  %349 = vmatpush1.msra.mxu0 0.0
  %350 = vmatprep.subr.mxu0 0.0
  %351 = vmatpush1.msra.mxu0 0.0
  %352 = vmatprep.subr.mxu0 0.0
  %353 = vmatpush1.msra.mxu0 0.0
  %354 = vmatprep.subr.mxu0 0.0
  %355 = vmatpush1.msra.mxu0 0.0
  %356 = vmatprep.subr.mxu0 0.0
  %357 = vmatpush1.msra.mxu0 0.0
  %358 = vmatprep.subr.mxu0 0.0
  %359 = vmatpush1.msra.mxu0 0.0
  %360 = vmatprep.subr.mxu0 0.0
  %361 = vmatpush1.msra.mxu0 0.0
  %362 = vmatprep.subr.mxu0 0.0
  %363 = vmatpush1.msra.mxu0 0.0
  %364 = vmatprep.subr.mxu0 0.0
  %365 = vmatpush1.msra.mxu0 0.0
  %366 = vmatprep.subr.mxu0 0.0
  %367 = vmatpush1.msra.mxu0 0.0
  %368 = vmatprep.subr.mxu0 0.0
  %369 = vmatpush1.msra.mxu0 0.0
  %370 = vmatprep.subr.mxu0 0.0
  %371 = vmatpush1.msra.mxu0 0.0
  %372 = vmatprep.subr.mxu0 0.0
  %373 = vmatpush1.msra.mxu0 0.0
  %374 = vmatprep.subr.mxu0 0.0
  %375 = vmatpush1.msra.mxu0 0.0
  %376 = vmatprep.subr.mxu0 0.0
  %377 = vmatpush1.msra.mxu0 0.0
  %378 = vmatprep.subr.mxu0 0.0
  %379 = vmatpush1.msra.mxu0 0.0
  %380 = vmatprep.subr.mxu0 0.0
  %381 = vmatpush1.msra.mxu0 0.0
  %382 = vmatprep.subr.mxu0 0.0
  %383 = vmatpush1.msra.mxu0 0.0
  %384 = vmatprep.subr.mxu0 0.0
  %385 = vmatpush1.msra.mxu0 0.0
  %386 = vmatprep.mubr.f32.mxu0 0.0
  %387 = vmatmul.mubr.f32.gmra.mrb[0].mxu0 %v54
  %v388 = vpop.f32.mrb[0].mxu0
  %v389 = vadd.f32 %v320, %v388
  %v390 = vpop.f32.mrb[0].mxu0
  %391 = vmatprep.mubr.f32.mxu0 0.0
  %392 = vmatmul.mubr.f32.gmra.mrb[0].mxu0 %v57
  %v393 = vpop.f32.mrb[0].mxu0
  %v394 = vadd.f32 %v320, %v393
  %v395 = vpop.f32.mrb[0].mxu0
  %396 = vdwg.mxu0
  %397 = vst.msk [vmem:[#allocation5] sm:$0xff] %vm134, %v389
  %398 = vst.msk [vmem:[#allocation5 + $0x8] sm:$0xff] %vm134, %v394
  %s399 = scalar_lea.vmem %s5, 16
  %v400 = vld [vmem:[%s399] sm:$0xff]
  %v401 = vld [vmem:[%s399 + $0x8] sm:$0xff]
  %s402 = scalar_lea.vmem %s7, 1
  %v403 = vld [vmem:[%s402] sm:$0x1]
  %v405 = vlaneseq
  %v406 = vshrl.u32 %v405, 7
  %v407 = vsub.s32 0, %v406
  %v408 = vrot.slane %v403, %v407
  %410 = vmatprep.subr.mxu0 0.0
  %411 = vmatpush1.msra.mxu0 %v400
  %412 = vmatprep.subr.mxu0 0.0
  %413 = vmatpush1.msra.mxu0 %v401
  %414 = vmatprep.subr.mxu0 0.0
  %415 = vmatpush1.msra.mxu0 0.0
  %416 = vmatprep.subr.mxu0 0.0
  %417 = vmatpush1.msra.mxu0 0.0
  %418 = vmatprep.subr.mxu0 0.0
  %419 = vmatpush1.msra.mxu0 0.0
  %420 = vmatprep.subr.mxu0 0.0
  %421 = vmatpush1.msra.mxu0 0.0
  %422 = vmatprep.subr.mxu0 0.0
  %423 = vmatpush1.msra.mxu0 0.0
  %424 = vmatprep.subr.mxu0 0.0
  %425 = vmatpush1.msra.mxu0 0.0
  %426 = vmatprep.subr.mxu0 0.0
  %427 = vmatpush1.msra.mxu0 0.0
  %428 = vmatprep.subr.mxu0 0.0
  %429 = vmatpush1.msra.mxu0 0.0
  %430 = vmatprep.subr.mxu0 0.0
  %431 = vmatpush1.msra.mxu0 0.0
  %432 = vmatprep.subr.mxu0 0.0
  %433 = vmatpush1.msra.mxu0 0.0
  %434 = vmatprep.subr.mxu0 0.0
  %435 = vmatpush1.msra.mxu0 0.0
  %436 = vmatprep.subr.mxu0 0.0
  %437 = vmatpush1.msra.mxu0 0.0
  %438 = vmatprep.subr.mxu0 0.0
  %439 = vmatpush1.msra.mxu0 0.0
  %440 = vmatprep.subr.mxu0 0.0
  %441 = vmatpush1.msra.mxu0 0.0
  %442 = vmatprep.subr.mxu0 0.0
  %443 = vmatpush1.msra.mxu0 0.0
  %444 = vmatprep.subr.mxu0 0.0
  %445 = vmatpush1.msra.mxu0 0.0
  %446 = vmatprep.subr.mxu0 0.0
  %447 = vmatpush1.msra.mxu0 0.0
  %448 = vmatprep.subr.mxu0 0.0
  %449 = vmatpush1.msra.mxu0 0.0
  %450 = vmatprep.subr.mxu0 0.0
  %451 = vmatpush1.msra.mxu0 0.0
  %452 = vmatprep.subr.mxu0 0.0
  %453 = vmatpush1.msra.mxu0 0.0
  %454 = vmatprep.subr.mxu0 0.0
  %455 = vmatpush1.msra.mxu0 0.0
  %456 = vmatprep.subr.mxu0 0.0
  %457 = vmatpush1.msra.mxu0 0.0
  %458 = vmatprep.subr.mxu0 0.0
  %459 = vmatpush1.msra.mxu0 0.0
  %460 = vmatprep.subr.mxu0 0.0
  %461 = vmatpush1.msra.mxu0 0.0
  %462 = vmatprep.subr.mxu0 0.0
  %463 = vmatpush1.msra.mxu0 0.0
  %464 = vmatprep.subr.mxu0 0.0
  %465 = vmatpush1.msra.mxu0 0.0
  %466 = vmatprep.subr.mxu0 0.0
  %467 = vmatpush1.msra.mxu0 0.0
  %468 = vmatprep.subr.mxu0 0.0
  %469 = vmatpush1.msra.mxu0 0.0
  %470 = vmatprep.subr.mxu0 0.0
  %471 = vmatpush1.msra.mxu0 0.0
  %472 = vmatprep.subr.mxu0 0.0
  %473 = vmatpush1.msra.mxu0 0.0
  %474 = vmatprep.mubr.f32.mxu0 0.0
  %475 = vmatmul.mubr.f32.gmra.mrb[0].mxu0 %v54
  %v476 = vpop.f32.mrb[0].mxu0
  %v477 = vadd.f32 %v408, %v476
  %v478 = vpop.f32.mrb[0].mxu0
  %479 = vmatprep.mubr.f32.mxu0 0.0
  %480 = vmatmul.mubr.f32.gmra.mrb[0].mxu0 %v57
  %v481 = vpop.f32.mrb[0].mxu0
  %v482 = vadd.f32 %v408, %v481
  %v483 = vpop.f32.mrb[0].mxu0
  %484 = vdwg.mxu0
  %485 = vst.msk [vmem:[#allocation6] sm:$0xff] %vm134, %v477
  %486 = vst.msk [vmem:[#allocation6 + $0x8] sm:$0xff] %vm134, %v482
  %s487 = scalar_lea.vmem %s5, 32
  %v488 = vld [vmem:[%s487] sm:$0xff]
  %v489 = vld [vmem:[%s487 + $0x8] sm:$0xff]
  %s490 = scalar_lea.vmem %s7, 2
  %v491 = vld [vmem:[%s490] sm:$0x1]
  %v493 = vlaneseq
  %v494 = vshrl.u32 %v493, 7
  %v495 = vsub.s32 0, %v494
  %v496 = vrot.slane %v491, %v495
  %498 = vmatprep.subr.mxu0 0.0
  %499 = vmatpush1.msra.mxu0 %v488
  %500 = vmatprep.subr.mxu0 0.0
  %501 = vmatpush1.msra.mxu0 %v489
  %502 = vmatprep.subr.mxu0 0.0
  %503 = vmatpush1.msra.mxu0 0.0
  %504 = vmatprep.subr.mxu0 0.0
  %505 = vmatpush1.msra.mxu0 0.0
  %506 = vmatprep.subr.mxu0 0.0
  %507 = vmatpush1.msra.mxu0 0.0
  %508 = vmatprep.subr.mxu0 0.0
  %509 = vmatpush1.msra.mxu0 0.0
  %510 = vmatprep.subr.mxu0 0.0
  %511 = vmatpush1.msra.mxu0 0.0
  %512 = vmatprep.subr.mxu0 0.0
  %513 = vmatpush1.msra.mxu0 0.0
  %514 = vmatprep.subr.mxu0 0.0
  %515 = vmatpush1.msra.mxu0 0.0
  %516 = vmatprep.subr.mxu0 0.0
  %517 = vmatpush1.msra.mxu0 0.0
  %518 = vmatprep.subr.mxu0 0.0
  %519 = vmatpush1.msra.mxu0 0.0
  %520 = vmatprep.subr.mxu0 0.0
  %521 = vmatpush1.msra.mxu0 0.0
  %522 = vmatprep.subr.mxu0 0.0
  %523 = vmatpush1.msra.mxu0 0.0
  %524 = vmatprep.subr.mxu0 0.0
  %525 = vmatpush1.msra.mxu0 0.0
  %526 = vmatprep.subr.mxu0 0.0
  %527 = vmatpush1.msra.mxu0 0.0
  %528 = vmatprep.subr.mxu0 0.0
  %529 = vmatpush1.msra.mxu0 0.0
  %530 = vmatprep.subr.mxu0 0.0
  %531 = vmatpush1.msra.mxu0 0.0
  %532 = vmatprep.subr.mxu0 0.0
  %533 = vmatpush1.msra.mxu0 0.0
  %534 = vmatprep.subr.mxu0 0.0
  %535 = vmatpush1.msra.mxu0 0.0
  %536 = vmatprep.subr.mxu0 0.0
  %537 = vmatpush1.msra.mxu0 0.0
  %538 = vmatprep.subr.mxu0 0.0
  %539 = vmatpush1.msra.mxu0 0.0
  %540 = vmatprep.subr.mxu0 0.0
  %541 = vmatpush1.msra.mxu0 0.0
  %542 = vmatprep.subr.mxu0 0.0
  %543 = vmatpush1.msra.mxu0 0.0
  %544 = vmatprep.subr.mxu0 0.0
  %545 = vmatpush1.msra.mxu0 0.0
  %546 = vmatprep.subr.mxu0 0.0
  %547 = vmatpush1.msra.mxu0 0.0
  %548 = vmatprep.subr.mxu0 0.0
  %549 = vmatpush1.msra.mxu0 0.0
  %550 = vmatprep.subr.mxu0 0.0
  %551 = vmatpush1.msra.mxu0 0.0
  %552 = vmatprep.subr.mxu0 0.0
  %553 = vmatpush1.msra.mxu0 0.0
  %554 = vmatprep.subr.mxu0 0.0
  %555 = vmatpush1.msra.mxu0 0.0
  %556 = vmatprep.subr.mxu0 0.0
  %557 = vmatpush1.msra.mxu0 0.0
  %558 = vmatprep.subr.mxu0 0.0
  %559 = vmatpush1.msra.mxu0 0.0
  %560 = vmatprep.subr.mxu0 0.0
  %561 = vmatpush1.msra.mxu0 0.0
  %562 = vmatprep.mubr.f32.mxu0 0.0
  %563 = vmatmul.mubr.f32.gmra.mrb[0].mxu0 %v54
  %v564 = vpop.f32.mrb[0].mxu0
  %v565 = vadd.f32 %v496, %v564
  %v566 = vpop.f32.mrb[0].mxu0
  %567 = vmatprep.mubr.f32.mxu0 0.0
  %568 = vmatmul.mubr.f32.gmra.mrb[0].mxu0 %v57
  %v569 = vpop.f32.mrb[0].mxu0
  %v570 = vadd.f32 %v496, %v569
  %v571 = vpop.f32.mrb[0].mxu0
  %572 = vdwg.mxu0
  %573 = vst.msk [vmem:[#allocation7] sm:$0xff] %vm134, %v565
  %574 = vst.msk [vmem:[#allocation7 + $0x8] sm:$0xff] %vm134, %v570
  %v575 = vld [vmem:[%s2] sm:$0xff]
  %v576 = vld [vmem:[%s2 + $0x8] sm:$0xff]
  %v577 = vld [vmem:[%s2 + $0x10] sm:$0xff]
  %v578 = vld [vmem:[%s2 + $0x18] sm:$0xff]
  %s579 = scalar_lea.vmem %s2, 32
  %v580 = vld [vmem:[%s579] sm:$0xff]
  %v581 = vld [vmem:[%s579 + $0x8] sm:$0xff]
  %v582 = vld [vmem:[%s579 + $0x10] sm:$0xff]
  %v583 = vld [vmem:[%s579 + $0x18] sm:$0xff]
  %s584 = scalar_lea.vmem %s2, 64
  %v585 = vld [vmem:[%s584] sm:$0xff]
  %v586 = vld [vmem:[%s584 + $0x8] sm:$0xff]
  %v587 = vld [vmem:[%s584 + $0x10] sm:$0xff]
  %v588 = vld [vmem:[%s584 + $0x18] sm:$0xff]
  %v589 = vld [vmem:[%s6] sm:$0xff]
  %v590 = vld [vmem:[%s6 + $0x8] sm:$0xff]
  %v591 = vld [vmem:[%s6 + $0x10] sm:$0xff]
  %v592 = vld [vmem:[%s6 + $0x18] sm:$0xff]
  %s593 = scalar_lea.vmem %s6, 32
  %v594 = vld [vmem:[%s593] sm:$0xff]
  %v595 = vld [vmem:[%s593 + $0x8] sm:$0xff]
  %v596 = vld [vmem:[%s593 + $0x10] sm:$0xff]
  %v597 = vld [vmem:[%s593 + $0x18] sm:$0xff]
  %s598 = scalar_lea.vmem %s6, 64
  %v599 = vld [vmem:[%s598] sm:$0xff]
  %v600 = vld [vmem:[%s598 + $0x8] sm:$0xff]
  %v601 = vld [vmem:[%s598 + $0x10] sm:$0xff]
  %v602 = vld [vmem:[%s598 + $0x18] sm:$0xff]
  %v603 = vld [vmem:[%s4] sm:$0x1]
  %s604 = scalar_lea.vmem %s4, 1
  %v605 = vld [vmem:[%s604] sm:$0x1]
  %s606 = scalar_lea.vmem %s4, 2
  %v607 = vld [vmem:[%s606] sm:$0x1]
  %v608 = vld [vmem:[%s8] sm:$0x1]
  %s609 = scalar_lea.vmem %s8, 1
  %v610 = vld [vmem:[%s609] sm:$0x1]
  %s611 = scalar_lea.vmem %s8, 2
  %v612 = vld [vmem:[%s611] sm:$0x1]
  %v613 = vld [vmem:[#allocation2] sm:$0x3]
  %v614 = vld [vmem:[#allocation3] sm:$0x3]
  %v615 = vld [vmem:[#allocation4] sm:$0x3]
  %v617 = vsel %vm134, 0.0, 0
  %619 = vmatprep.subr.mxu0 0.0
  %620 = vmatpush1.msra.mxu0 %v575
  %621 = vmatprep.subr.mxu0 0.0
  %622 = vmatpush1.msra.mxu0 %v576
  %623 = vmatprep.subr.mxu0 0.0
  %624 = vmatpush1.msra.mxu0 %v577
  %625 = vmatprep.subr.mxu0 0.0
  %626 = vmatpush1.msra.mxu0 %v578
  %627 = vmatprep.subr.mxu0 0.0
  %628 = vmatpush1.msra.mxu0 0.0
  %629 = vmatprep.subr.mxu0 0.0
  %630 = vmatpush1.msra.mxu0 0.0
  %631 = vmatprep.subr.mxu0 0.0
  %632 = vmatpush1.msra.mxu0 0.0
  %633 = vmatprep.subr.mxu0 0.0
  %634 = vmatpush1.msra.mxu0 0.0
  %635 = vmatprep.subr.mxu0 0.0
  %636 = vmatpush1.msra.mxu0 0.0
  %637 = vmatprep.subr.mxu0 0.0
  %638 = vmatpush1.msra.mxu0 0.0
  %639 = vmatprep.subr.mxu0 0.0
  %640 = vmatpush1.msra.mxu0 0.0
  %641 = vmatprep.subr.mxu0 0.0
  %642 = vmatpush1.msra.mxu0 0.0
  %643 = vmatprep.subr.mxu0 0.0
  %644 = vmatpush1.msra.mxu0 0.0
  %645 = vmatprep.subr.mxu0 0.0
  %646 = vmatpush1.msra.mxu0 0.0
  %647 = vmatprep.subr.mxu0 0.0
  %648 = vmatpush1.msra.mxu0 0.0
  %649 = vmatprep.subr.mxu0 0.0
  %650 = vmatpush1.msra.mxu0 0.0
  %651 = vmatprep.subr.mxu0 0.0
  %652 = vmatpush1.msra.mxu0 0.0
  %653 = vmatprep.subr.mxu0 0.0
  %654 = vmatpush1.msra.mxu0 0.0
  %655 = vmatprep.subr.mxu0 0.0
  %656 = vmatpush1.msra.mxu0 0.0
  %657 = vmatprep.subr.mxu0 0.0
  %658 = vmatpush1.msra.mxu0 0.0
  %659 = vmatprep.subr.mxu0 0.0
  %660 = vmatpush1.msra.mxu0 0.0
  %661 = vmatprep.subr.mxu0 0.0
  %662 = vmatpush1.msra.mxu0 0.0
  %663 = vmatprep.subr.mxu0 0.0
  %664 = vmatpush1.msra.mxu0 0.0
  %665 = vmatprep.subr.mxu0 0.0
  %666 = vmatpush1.msra.mxu0 0.0
  %667 = vmatprep.subr.mxu0 0.0
  %668 = vmatpush1.msra.mxu0 0.0
  %669 = vmatprep.subr.mxu0 0.0
  %670 = vmatpush1.msra.mxu0 0.0
  %671 = vmatprep.subr.mxu0 0.0
  %672 = vmatpush1.msra.mxu0 0.0
  %673 = vmatprep.subr.mxu0 0.0
  %674 = vmatpush1.msra.mxu0 0.0
  %675 = vmatprep.subr.mxu0 0.0
  %676 = vmatpush1.msra.mxu0 0.0
  %677 = vmatprep.subr.mxu0 0.0
  %678 = vmatpush1.msra.mxu0 0.0
  %679 = vmatprep.subr.mxu0 0.0
  %680 = vmatpush1.msra.mxu0 0.0
  %681 = vmatprep.subr.mxu0 0.0
  %682 = vmatpush1.msra.mxu0 0.0
  %683 = vmatprep.mubr.f32.mxu0 0.0
  %684 = vmatmul.mubr.f32.gmra.mrb[0].mxu0 %v617
  %v685 = vpop.f32.mrb[0].mxu0
  %v686 = vadd.f32 0.0, %v685
  %v687 = vpop.f32.mrb[0].mxu0
  %688 = vdwg.mxu0
  %v689 = vadd.f32 %v613, %v686
  %v691 = vlaneseq
  %v692 = vshrl.u32 %v691, 7
  %v693 = vsub.s32 0, %v692
  %v694 = vrot.slane %v603, %v693
  %v696 = vadd.f32 %v689, %v694
  %v697 = vxor.u32 %v696, 2147483648
  %v698 = vmul.f32 %v697, 1.442695
  %v699 = vpow.pop %v698
  %v700 = vadd.f32 %v699, 1.0
  %v701 = vrcp.pop %v700
  %v702 = vmul.f32 1.0, %v701
  %703 = vmatprep.subr.mxu0 0.0
  %704 = vmatpush1.msra.mxu0 %v580
  %705 = vmatprep.subr.mxu0 0.0
  %706 = vmatpush1.msra.mxu0 %v581
  %707 = vmatprep.subr.mxu0 0.0
  %708 = vmatpush1.msra.mxu0 %v582
  %709 = vmatprep.subr.mxu0 0.0
  %710 = vmatpush1.msra.mxu0 %v583
  %711 = vmatprep.subr.mxu0 0.0
  %712 = vmatpush1.msra.mxu0 0.0
  %713 = vmatprep.subr.mxu0 0.0
  %714 = vmatpush1.msra.mxu0 0.0
  %715 = vmatprep.subr.mxu0 0.0
  %716 = vmatpush1.msra.mxu0 0.0
  %717 = vmatprep.subr.mxu0 0.0
  %718 = vmatpush1.msra.mxu0 0.0
  %719 = vmatprep.subr.mxu0 0.0
  %720 = vmatpush1.msra.mxu0 0.0
  %721 = vmatprep.subr.mxu0 0.0
  %722 = vmatpush1.msra.mxu0 0.0
  %723 = vmatprep.subr.mxu0 0.0
  %724 = vmatpush1.msra.mxu0 0.0
  %725 = vmatprep.subr.mxu0 0.0
  %726 = vmatpush1.msra.mxu0 0.0
  %727 = vmatprep.subr.mxu0 0.0
  %728 = vmatpush1.msra.mxu0 0.0
  %729 = vmatprep.subr.mxu0 0.0
  %730 = vmatpush1.msra.mxu0 0.0
  %731 = vmatprep.subr.mxu0 0.0
  %732 = vmatpush1.msra.mxu0 0.0
  %733 = vmatprep.subr.mxu0 0.0
  %734 = vmatpush1.msra.mxu0 0.0
  %735 = vmatprep.subr.mxu0 0.0
  %736 = vmatpush1.msra.mxu0 0.0
  %737 = vmatprep.subr.mxu0 0.0
  %738 = vmatpush1.msra.mxu0 0.0
  %739 = vmatprep.subr.mxu0 0.0
  %740 = vmatpush1.msra.mxu0 0.0
  %741 = vmatprep.subr.mxu0 0.0
  %742 = vmatpush1.msra.mxu0 0.0
  %743 = vmatprep.subr.mxu0 0.0
  %744 = vmatpush1.msra.mxu0 0.0
  %745 = vmatprep.subr.mxu0 0.0
  %746 = vmatpush1.msra.mxu0 0.0
  %747 = vmatprep.subr.mxu0 0.0
  %748 = vmatpush1.msra.mxu0 0.0
  %749 = vmatprep.subr.mxu0 0.0
  %750 = vmatpush1.msra.mxu0 0.0
  %751 = vmatprep.subr.mxu0 0.0
  %752 = vmatpush1.msra.mxu0 0.0
  %753 = vmatprep.subr.mxu0 0.0
  %754 = vmatpush1.msra.mxu0 0.0
  %755 = vmatprep.subr.mxu0 0.0
  %756 = vmatpush1.msra.mxu0 0.0
  %757 = vmatprep.subr.mxu0 0.0
  %758 = vmatpush1.msra.mxu0 0.0
  %759 = vmatprep.subr.mxu0 0.0
  %760 = vmatpush1.msra.mxu0 0.0
  %761 = vmatprep.subr.mxu0 0.0
  %762 = vmatpush1.msra.mxu0 0.0
  %763 = vmatprep.subr.mxu0 0.0
  %764 = vmatpush1.msra.mxu0 0.0
  %765 = vmatprep.subr.mxu0 0.0
  %766 = vmatpush1.msra.mxu0 0.0
  %767 = vmatprep.mubr.f32.mxu0 0.0
  %768 = vmatmul.mubr.f32.gmra.mrb[0].mxu0 %v617
  %v769 = vpop.f32.mrb[0].mxu0
  %v770 = vadd.f32 0.0, %v769
  %v771 = vpop.f32.mrb[0].mxu0
  %772 = vdwg.mxu0
  %v773 = vadd.f32 %v614, %v770
  %v775 = vlaneseq
  %v776 = vshrl.u32 %v775, 7
  %v777 = vsub.s32 0, %v776
  %v778 = vrot.slane %v605, %v777
  %v780 = vadd.f32 %v773, %v778
  %v781 = vxor.u32 %v780, 2147483648
  %v782 = vmul.f32 %v781, 1.442695
  %v783 = vpow.pop %v782
  %v784 = vadd.f32 %v783, 1.0
  %v785 = vrcp.pop %v784
  %v786 = vmul.f32 1.0, %v785
  %v788 = vlaneseq
  %v789 = vshrl.u32 %v788, 7
  %v790 = vsub.s32 0, %v789
  %v791 = vrot.slane %v607, %v790
  %793 = vmatprep.subr.mxu0 0.0
  %794 = vmatpush1.msra.mxu0 %v585
  %795 = vmatprep.subr.mxu0 0.0
  %796 = vmatpush1.msra.mxu0 %v586
  %797 = vmatprep.subr.mxu0 0.0
  %798 = vmatpush1.msra.mxu0 %v587
  %799 = vmatprep.subr.mxu0 0.0
  %800 = vmatpush1.msra.mxu0 %v588
  %801 = vmatprep.subr.mxu0 0.0
  %802 = vmatpush1.msra.mxu0 0.0
  %803 = vmatprep.subr.mxu0 0.0
  %804 = vmatpush1.msra.mxu0 0.0
  %805 = vmatprep.subr.mxu0 0.0
  %806 = vmatpush1.msra.mxu0 0.0
  %807 = vmatprep.subr.mxu0 0.0
  %808 = vmatpush1.msra.mxu0 0.0
  %809 = vmatprep.subr.mxu0 0.0
  %810 = vmatpush1.msra.mxu0 0.0
  %811 = vmatprep.subr.mxu0 0.0
  %812 = vmatpush1.msra.mxu0 0.0
  %813 = vmatprep.subr.mxu0 0.0
  %814 = vmatpush1.msra.mxu0 0.0
  %815 = vmatprep.subr.mxu0 0.0
  %816 = vmatpush1.msra.mxu0 0.0
  %817 = vmatprep.subr.mxu0 0.0
  %818 = vmatpush1.msra.mxu0 0.0
  %819 = vmatprep.subr.mxu0 0.0
  %820 = vmatpush1.msra.mxu0 0.0
  %821 = vmatprep.subr.mxu0 0.0
  %822 = vmatpush1.msra.mxu0 0.0
  %823 = vmatprep.subr.mxu0 0.0
  %824 = vmatpush1.msra.mxu0 0.0
  %825 = vmatprep.subr.mxu0 0.0
  %826 = vmatpush1.msra.mxu0 0.0
  %827 = vmatprep.subr.mxu0 0.0
  %828 = vmatpush1.msra.mxu0 0.0
  %829 = vmatprep.subr.mxu0 0.0
  %830 = vmatpush1.msra.mxu0 0.0
  %831 = vmatprep.subr.mxu0 0.0
  %832 = vmatpush1.msra.mxu0 0.0
  %833 = vmatprep.subr.mxu0 0.0
  %834 = vmatpush1.msra.mxu0 0.0
  %835 = vmatprep.subr.mxu0 0.0
  %836 = vmatpush1.msra.mxu0 0.0
  %837 = vmatprep.subr.mxu0 0.0
  %838 = vmatpush1.msra.mxu0 0.0
  %839 = vmatprep.subr.mxu0 0.0
  %840 = vmatpush1.msra.mxu0 0.0
  %841 = vmatprep.subr.mxu0 0.0
  %842 = vmatpush1.msra.mxu0 0.0
  %843 = vmatprep.subr.mxu0 0.0
  %844 = vmatpush1.msra.mxu0 0.0
  %845 = vmatprep.subr.mxu0 0.0
  %846 = vmatpush1.msra.mxu0 0.0
  %847 = vmatprep.subr.mxu0 0.0
  %848 = vmatpush1.msra.mxu0 0.0
  %849 = vmatprep.subr.mxu0 0.0
  %850 = vmatpush1.msra.mxu0 0.0
  %851 = vmatprep.subr.mxu0 0.0
  %852 = vmatpush1.msra.mxu0 0.0
  %853 = vmatprep.subr.mxu0 0.0
  %854 = vmatpush1.msra.mxu0 0.0
  %855 = vmatprep.subr.mxu0 0.0
  %856 = vmatpush1.msra.mxu0 0.0
  %857 = vmatprep.mubr.f32.mxu0 0.0
  %858 = vmatmul.mubr.f32.gmra.mrb[0].mxu0 %v617
  %v859 = vpop.f32.mrb[0].mxu0
  %v860 = vadd.f32 %v791, %v859
  %v861 = vpop.f32.mrb[0].mxu0
  %862 = vdwg.mxu0
  %v863 = vmul.f32 %v702, %v860
  %v864 = vadd.f32 %v615, %v863
  %v865 = vtanh.pop %v864
  %v866 = vsub.f32 1.0, %v786
  %v867 = vmul.f32 %v866, %v865
  %v868 = vmul.f32 %v786, 0.0
  %v869 = vadd.f32 %v867, %v868
  %v870 = vld [vmem:[#allocation5 + $0xe] sm:$0x3]
  %v871 = vld [vmem:[#allocation6 + $0xe] sm:$0x3]
  %v872 = vld [vmem:[#allocation7 + $0xe] sm:$0x3]
  %873 = vmatprep.subr.mxu0 0.0
  %874 = vmatpush1.msra.mxu0 %v589
  %875 = vmatprep.subr.mxu0 0.0
  %876 = vmatpush1.msra.mxu0 %v590
  %877 = vmatprep.subr.mxu0 0.0
  %878 = vmatpush1.msra.mxu0 %v591
  %879 = vmatprep.subr.mxu0 0.0
  %880 = vmatpush1.msra.mxu0 %v592
  %881 = vmatprep.subr.mxu0 0.0
  %882 = vmatpush1.msra.mxu0 0.0
  %883 = vmatprep.subr.mxu0 0.0
  %884 = vmatpush1.msra.mxu0 0.0
  %885 = vmatprep.subr.mxu0 0.0
  %886 = vmatpush1.msra.mxu0 0.0
  %887 = vmatprep.subr.mxu0 0.0
  %888 = vmatpush1.msra.mxu0 0.0
  %889 = vmatprep.subr.mxu0 0.0
  %890 = vmatpush1.msra.mxu0 0.0
  %891 = vmatprep.subr.mxu0 0.0
  %892 = vmatpush1.msra.mxu0 0.0
  %893 = vmatprep.subr.mxu0 0.0
  %894 = vmatpush1.msra.mxu0 0.0
  %895 = vmatprep.subr.mxu0 0.0
  %896 = vmatpush1.msra.mxu0 0.0
  %897 = vmatprep.subr.mxu0 0.0
  %898 = vmatpush1.msra.mxu0 0.0
  %899 = vmatprep.subr.mxu0 0.0
  %900 = vmatpush1.msra.mxu0 0.0
  %901 = vmatprep.subr.mxu0 0.0
  %902 = vmatpush1.msra.mxu0 0.0
  %903 = vmatprep.subr.mxu0 0.0
  %904 = vmatpush1.msra.mxu0 0.0
  %905 = vmatprep.subr.mxu0 0.0
  %906 = vmatpush1.msra.mxu0 0.0
  %907 = vmatprep.subr.mxu0 0.0
  %908 = vmatpush1.msra.mxu0 0.0
  %909 = vmatprep.subr.mxu0 0.0
  %910 = vmatpush1.msra.mxu0 0.0
  %911 = vmatprep.subr.mxu0 0.0
  %912 = vmatpush1.msra.mxu0 0.0
  %913 = vmatprep.subr.mxu0 0.0
  %914 = vmatpush1.msra.mxu0 0.0
  %915 = vmatprep.subr.mxu0 0.0
  %916 = vmatpush1.msra.mxu0 0.0
  %917 = vmatprep.subr.mxu0 0.0
  %918 = vmatpush1.msra.mxu0 0.0
  %919 = vmatprep.subr.mxu0 0.0
  %920 = vmatpush1.msra.mxu0 0.0
  %921 = vmatprep.subr.mxu0 0.0
  %922 = vmatpush1.msra.mxu0 0.0
  %923 = vmatprep.subr.mxu0 0.0
  %924 = vmatpush1.msra.mxu0 0.0
  %925 = vmatprep.subr.mxu0 0.0
  %926 = vmatpush1.msra.mxu0 0.0
  %927 = vmatprep.subr.mxu0 0.0
  %928 = vmatpush1.msra.mxu0 0.0
  %929 = vmatprep.subr.mxu0 0.0
  %930 = vmatpush1.msra.mxu0 0.0
  %931 = vmatprep.subr.mxu0 0.0
  %932 = vmatpush1.msra.mxu0 0.0
  %933 = vmatprep.subr.mxu0 0.0
  %934 = vmatpush1.msra.mxu0 0.0
  %935 = vmatprep.subr.mxu0 0.0
  %936 = vmatpush1.msra.mxu0 0.0
  %937 = vmatprep.mubr.f32.mxu0 0.0
  %938 = vmatmul.mubr.f32.gmra.mrb[0].mxu0 %v617
  %v939 = vpop.f32.mrb[0].mxu0
  %v940 = vadd.f32 0.0, %v939
  %v941 = vpop.f32.mrb[0].mxu0
  %942 = vdwg.mxu0
  %v943 = vadd.f32 %v870, %v940
  %v945 = vlaneseq
  %v946 = vshrl.u32 %v945, 7
  %v947 = vsub.s32 0, %v946
  %v948 = vrot.slane %v608, %v947
  %v950 = vadd.f32 %v943, %v948
  %v951 = vxor.u32 %v950, 2147483648
  %v952 = vmul.f32 %v951, 1.442695
  %v953 = vpow.pop %v952
  %v954 = vadd.f32 %v953, 1.0
  %v955 = vrcp.pop %v954
  %v956 = vmul.f32 1.0, %v955
  %957 = vmatprep.subr.mxu0 0.0
  %958 = vmatpush1.msra.mxu0 %v594
  %959 = vmatprep.subr.mxu0 0.0
  %960 = vmatpush1.msra.mxu0 %v595
  %961 = vmatprep.subr.mxu0 0.0
  %962 = vmatpush1.msra.mxu0 %v596
  %963 = vmatprep.subr.mxu0 0.0
  %964 = vmatpush1.msra.mxu0 %v597
  %965 = vmatprep.subr.mxu0 0.0
  %966 = vmatpush1.msra.mxu0 0.0
  %967 = vmatprep.subr.mxu0 0.0
  %968 = vmatpush1.msra.mxu0 0.0
  %969 = vmatprep.subr.mxu0 0.0
  %970 = vmatpush1.msra.mxu0 0.0
  %971 = vmatprep.subr.mxu0 0.0
  %972 = vmatpush1.msra.mxu0 0.0
  %973 = vmatprep.subr.mxu0 0.0
  %974 = vmatpush1.msra.mxu0 0.0
  %975 = vmatprep.subr.mxu0 0.0
  %976 = vmatpush1.msra.mxu0 0.0
  %977 = vmatprep.subr.mxu0 0.0
  %978 = vmatpush1.msra.mxu0 0.0
  %979 = vmatprep.subr.mxu0 0.0
  %980 = vmatpush1.msra.mxu0 0.0
  %981 = vmatprep.subr.mxu0 0.0
  %982 = vmatpush1.msra.mxu0 0.0
  %983 = vmatprep.subr.mxu0 0.0
  %984 = vmatpush1.msra.mxu0 0.0
  %985 = vmatprep.subr.mxu0 0.0
  %986 = vmatpush1.msra.mxu0 0.0
  %987 = vmatprep.subr.mxu0 0.0
  %988 = vmatpush1.msra.mxu0 0.0
  %989 = vmatprep.subr.mxu0 0.0
  %990 = vmatpush1.msra.mxu0 0.0
  %991 = vmatprep.subr.mxu0 0.0
  %992 = vmatpush1.msra.mxu0 0.0
  %993 = vmatprep.subr.mxu0 0.0
  %994 = vmatpush1.msra.mxu0 0.0
  %995 = vmatprep.subr.mxu0 0.0
  %996 = vmatpush1.msra.mxu0 0.0
  %997 = vmatprep.subr.mxu0 0.0
  %998 = vmatpush1.msra.mxu0 0.0
  %999 = vmatprep.subr.mxu0 0.0
  %1000 = vmatpush1.msra.mxu0 0.0
  %1001 = vmatprep.subr.mxu0 0.0
  %1002 = vmatpush1.msra.mxu0 0.0
  %1003 = vmatprep.subr.mxu0 0.0
  %1004 = vmatpush1.msra.mxu0 0.0
  %1005 = vmatprep.subr.mxu0 0.0
  %1006 = vmatpush1.msra.mxu0 0.0
  %1007 = vmatprep.subr.mxu0 0.0
  %1008 = vmatpush1.msra.mxu0 0.0
  %1009 = vmatprep.subr.mxu0 0.0
  %1010 = vmatpush1.msra.mxu0 0.0
  %1011 = vmatprep.subr.mxu0 0.0
  %1012 = vmatpush1.msra.mxu0 0.0
  %1013 = vmatprep.subr.mxu0 0.0
  %1014 = vmatpush1.msra.mxu0 0.0
  %1015 = vmatprep.subr.mxu0 0.0
  %1016 = vmatpush1.msra.mxu0 0.0
  %1017 = vmatprep.subr.mxu0 0.0
  %1018 = vmatpush1.msra.mxu0 0.0
  %1019 = vmatprep.subr.mxu0 0.0
  %1020 = vmatpush1.msra.mxu0 0.0
  %1021 = vmatprep.mubr.f32.mxu0 0.0
  %1022 = vmatmul.mubr.f32.gmra.mrb[0].mxu0 %v617
  %v1023 = vpop.f32.mrb[0].mxu0
  %v1024 = vadd.f32 0.0, %v1023
  %v1025 = vpop.f32.mrb[0].mxu0
  %1026 = vdwg.mxu0
  %v1027 = vadd.f32 %v871, %v1024
  %v1029 = vlaneseq
  %v1030 = vshrl.u32 %v1029, 7
  %v1031 = vsub.s32 0, %v1030
  %v1032 = vrot.slane %v610, %v1031
  %v1034 = vadd.f32 %v1027, %v1032
  %v1035 = vxor.u32 %v1034, 2147483648
  %v1036 = vmul.f32 %v1035, 1.442695
  %v1037 = vpow.pop %v1036
  %v1038 = vadd.f32 %v1037, 1.0
  %v1039 = vrcp.pop %v1038
  %v1040 = vmul.f32 1.0, %v1039
  %v1042 = vlaneseq
  %v1043 = vshrl.u32 %v1042, 7
  %v1044 = vsub.s32 0, %v1043
  %v1045 = vrot.slane %v612, %v1044
  %1047 = vmatprep.subr.mxu0 0.0
  %1048 = vmatpush1.msra.mxu0 %v599
  %1049 = vmatprep.subr.mxu0 0.0
  %1050 = vmatpush1.msra.mxu0 %v600
  %1051 = vmatprep.subr.mxu0 0.0
  %1052 = vmatpush1.msra.mxu0 %v601
  %1053 = vmatprep.subr.mxu0 0.0
  %1054 = vmatpush1.msra.mxu0 %v602
  %1055 = vmatprep.subr.mxu0 0.0
  %1056 = vmatpush1.msra.mxu0 0.0
  %1057 = vmatprep.subr.mxu0 0.0
  %1058 = vmatpush1.msra.mxu0 0.0
  %1059 = vmatprep.subr.mxu0 0.0
  %1060 = vmatpush1.msra.mxu0 0.0
  %1061 = vmatprep.subr.mxu0 0.0
  %1062 = vmatpush1.msra.mxu0 0.0
  %1063 = vmatprep.subr.mxu0 0.0
  %1064 = vmatpush1.msra.mxu0 0.0
  %1065 = vmatprep.subr.mxu0 0.0
  %1066 = vmatpush1.msra.mxu0 0.0
  %1067 = vmatprep.subr.mxu0 0.0
  %1068 = vmatpush1.msra.mxu0 0.0
  %1069 = vmatprep.subr.mxu0 0.0
  %1070 = vmatpush1.msra.mxu0 0.0
  %1071 = vmatprep.subr.mxu0 0.0
  %1072 = vmatpush1.msra.mxu0 0.0
  %1073 = vmatprep.subr.mxu0 0.0
  %1074 = vmatpush1.msra.mxu0 0.0
  %1075 = vmatprep.subr.mxu0 0.0
  %1076 = vmatpush1.msra.mxu0 0.0
  %1077 = vmatprep.subr.mxu0 0.0
  %1078 = vmatpush1.msra.mxu0 0.0
  %1079 = vmatprep.subr.mxu0 0.0
  %1080 = vmatpush1.msra.mxu0 0.0
  %1081 = vmatprep.subr.mxu0 0.0
  %1082 = vmatpush1.msra.mxu0 0.0
  %1083 = vmatprep.subr.mxu0 0.0
  %1084 = vmatpush1.msra.mxu0 0.0
  %1085 = vmatprep.subr.mxu0 0.0
  %1086 = vmatpush1.msra.mxu0 0.0
  %1087 = vmatprep.subr.mxu0 0.0
  %1088 = vmatpush1.msra.mxu0 0.0
  %1089 = vmatprep.subr.mxu0 0.0
  %1090 = vmatpush1.msra.mxu0 0.0
  %1091 = vmatprep.subr.mxu0 0.0
  %1092 = vmatpush1.msra.mxu0 0.0
  %1093 = vmatprep.subr.mxu0 0.0
  %1094 = vmatpush1.msra.mxu0 0.0
  %1095 = vmatprep.subr.mxu0 0.0
  %1096 = vmatpush1.msra.mxu0 0.0
  %1097 = vmatprep.subr.mxu0 0.0
  %1098 = vmatpush1.msra.mxu0 0.0
  %1099 = vmatprep.subr.mxu0 0.0
  %1100 = vmatpush1.msra.mxu0 0.0
  %1101 = vmatprep.subr.mxu0 0.0
  %1102 = vmatpush1.msra.mxu0 0.0
  %1103 = vmatprep.subr.mxu0 0.0
  %1104 = vmatpush1.msra.mxu0 0.0
  %1105 = vmatprep.subr.mxu0 0.0
  %1106 = vmatpush1.msra.mxu0 0.0
  %1107 = vmatprep.subr.mxu0 0.0
  %1108 = vmatpush1.msra.mxu0 0.0
  %1109 = vmatprep.subr.mxu0 0.0
  %1110 = vmatpush1.msra.mxu0 0.0
  %1111 = vmatprep.mubr.f32.mxu0 0.0
  %1112 = vmatmul.mubr.f32.gmra.mrb[0].mxu0 %v617
  %v1113 = vpop.f32.mrb[0].mxu0
  %v1114 = vadd.f32 %v1045, %v1113
  %v1115 = vpop.f32.mrb[0].mxu0
  %1116 = vdwg.mxu0
  %v1117 = vmul.f32 %v956, %v1114
  %v1118 = vadd.f32 %v872, %v1117
  %v1119 = vtanh.pop %v1118
  %v1120 = vsub.f32 1.0, %v1040
  %v1121 = vmul.f32 %v1120, %v1119
  %v1122 = vmul.f32 %v1040, 0.0
  %v1123 = vadd.f32 %v1121, %v1122
  %vm1124 = vcmask 254976
  %1125 = vst.msk [vmem:[#allocation8] sm:$0x3] %vm1124, %v869
  %1126 = vst.msk [vmem:[#allocation9 + $0xe] sm:$0x3] %vm1124, %v1123
  %v1127 = vld [vmem:[#allocation2 + $0x2] sm:$0x3]
  %v1128 = vld [vmem:[#allocation3 + $0x2] sm:$0x3]
  %v1129 = vld [vmem:[#allocation4 + $0x2] sm:$0x3]
  %v1131 = vsel %vm134, %v869, 0
  %1133 = vmatprep.subr.mxu0 0.0
  %1134 = vmatpush1.msra.mxu0 %v575
  %1135 = vmatprep.subr.mxu0 0.0
  %1136 = vmatpush1.msra.mxu0 %v576
  %1137 = vmatprep.subr.mxu0 0.0
  %1138 = vmatpush1.msra.mxu0 %v577
  %1139 = vmatprep.subr.mxu0 0.0
  %1140 = vmatpush1.msra.mxu0 %v578
  %1141 = vmatprep.subr.mxu0 0.0
  %1142 = vmatpush1.msra.mxu0 0.0
  %1143 = vmatprep.subr.mxu0 0.0
  %1144 = vmatpush1.msra.mxu0 0.0
  %1145 = vmatprep.subr.mxu0 0.0
  %1146 = vmatpush1.msra.mxu0 0.0
  %1147 = vmatprep.subr.mxu0 0.0
  %1148 = vmatpush1.msra.mxu0 0.0
  %1149 = vmatprep.subr.mxu0 0.0
  %1150 = vmatpush1.msra.mxu0 0.0
  %1151 = vmatprep.subr.mxu0 0.0
  %1152 = vmatpush1.msra.mxu0 0.0
  %1153 = vmatprep.subr.mxu0 0.0
  %1154 = vmatpush1.msra.mxu0 0.0
  %1155 = vmatprep.subr.mxu0 0.0
  %1156 = vmatpush1.msra.mxu0 0.0
  %1157 = vmatprep.subr.mxu0 0.0
  %1158 = vmatpush1.msra.mxu0 0.0
  %1159 = vmatprep.subr.mxu0 0.0
  %1160 = vmatpush1.msra.mxu0 0.0
  %1161 = vmatprep.subr.mxu0 0.0
  %1162 = vmatpush1.msra.mxu0 0.0
  %1163 = vmatprep.subr.mxu0 0.0
  %1164 = vmatpush1.msra.mxu0 0.0
  %1165 = vmatprep.subr.mxu0 0.0
  %1166 = vmatpush1.msra.mxu0 0.0
  %1167 = vmatprep.subr.mxu0 0.0
  %1168 = vmatpush1.msra.mxu0 0.0
  %1169 = vmatprep.subr.mxu0 0.0
  %1170 = vmatpush1.msra.mxu0 0.0
  %1171 = vmatprep.subr.mxu0 0.0
  %1172 = vmatpush1.msra.mxu0 0.0
  %1173 = vmatprep.subr.mxu0 0.0
  %1174 = vmatpush1.msra.mxu0 0.0
  %1175 = vmatprep.subr.mxu0 0.0
  %1176 = vmatpush1.msra.mxu0 0.0
  %1177 = vmatprep.subr.mxu0 0.0
  %1178 = vmatpush1.msra.mxu0 0.0
  %1179 = vmatprep.subr.mxu0 0.0
  %1180 = vmatpush1.msra.mxu0 0.0
  %1181 = vmatprep.subr.mxu0 0.0
  %1182 = vmatpush1.msra.mxu0 0.0
  %1183 = vmatprep.subr.mxu0 0.0
  %1184 = vmatpush1.msra.mxu0 0.0
  %1185 = vmatprep.subr.mxu0 0.0
  %1186 = vmatpush1.msra.mxu0 0.0
  %1187 = vmatprep.subr.mxu0 0.0
  %1188 = vmatpush1.msra.mxu0 0.0
  %1189 = vmatprep.subr.mxu0 0.0
  %1190 = vmatpush1.msra.mxu0 0.0
  %1191 = vmatprep.subr.mxu0 0.0
  %1192 = vmatpush1.msra.mxu0 0.0
  %1193 = vmatprep.subr.mxu0 0.0
  %1194 = vmatpush1.msra.mxu0 0.0
  %1195 = vmatprep.subr.mxu0 0.0
  %1196 = vmatpush1.msra.mxu0 0.0
  %1197 = vmatprep.mubr.f32.mxu0 0.0
  %1198 = vmatmul.mubr.f32.gmra.mrb[0].mxu0 %v1131
  %v1199 = vpop.f32.mrb[0].mxu0
  %v1200 = vadd.f32 0.0, %v1199
  %v1201 = vpop.f32.mrb[0].mxu0
  %1202 = vdwg.mxu0
  %v1203 = vadd.f32 %v1127, %v1200
  %v1204 = vadd.f32 %v1203, %v694
  %v1205 = vxor.u32 %v1204, 2147483648
  %v1206 = vmul.f32 %v1205, 1.442695
  %v1207 = vpow.pop %v1206
  %v1208 = vadd.f32 %v1207, 1.0
  %v1209 = vrcp.pop %v1208
  %v1210 = vmul.f32 1.0, %v1209
  %1211 = vmatprep.subr.mxu0 0.0
  %1212 = vmatpush1.msra.mxu0 %v580
  %1213 = vmatprep.subr.mxu0 0.0
  %1214 = vmatpush1.msra.mxu0 %v581
  %1215 = vmatprep.subr.mxu0 0.0
  %1216 = vmatpush1.msra.mxu0 %v582
  %1217 = vmatprep.subr.mxu0 0.0
  %1218 = vmatpush1.msra.mxu0 %v583
  %1219 = vmatprep.subr.mxu0 0.0
  %1220 = vmatpush1.msra.mxu0 0.0
  %1221 = vmatprep.subr.mxu0 0.0
  %1222 = vmatpush1.msra.mxu0 0.0
  %1223 = vmatprep.subr.mxu0 0.0
  %1224 = vmatpush1.msra.mxu0 0.0
  %1225 = vmatprep.subr.mxu0 0.0
  %1226 = vmatpush1.msra.mxu0 0.0
  %1227 = vmatprep.subr.mxu0 0.0
  %1228 = vmatpush1.msra.mxu0 0.0
  %1229 = vmatprep.subr.mxu0 0.0
  %1230 = vmatpush1.msra.mxu0 0.0
  %1231 = vmatprep.subr.mxu0 0.0
  %1232 = vmatpush1.msra.mxu0 0.0
  %1233 = vmatprep.subr.mxu0 0.0
  %1234 = vmatpush1.msra.mxu0 0.0
  %1235 = vmatprep.subr.mxu0 0.0
  %1236 = vmatpush1.msra.mxu0 0.0
  %1237 = vmatprep.subr.mxu0 0.0
  %1238 = vmatpush1.msra.mxu0 0.0
  %1239 = vmatprep.subr.mxu0 0.0
  %1240 = vmatpush1.msra.mxu0 0.0
  %1241 = vmatprep.subr.mxu0 0.0
  %1242 = vmatpush1.msra.mxu0 0.0
  %1243 = vmatprep.subr.mxu0 0.0
  %1244 = vmatpush1.msra.mxu0 0.0
  %1245 = vmatprep.subr.mxu0 0.0
  %1246 = vmatpush1.msra.mxu0 0.0
  %1247 = vmatprep.subr.mxu0 0.0
  %1248 = vmatpush1.msra.mxu0 0.0
  %1249 = vmatprep.subr.mxu0 0.0
  %1250 = vmatpush1.msra.mxu0 0.0
  %1251 = vmatprep.subr.mxu0 0.0
  %1252 = vmatpush1.msra.mxu0 0.0
  %1253 = vmatprep.subr.mxu0 0.0
  %1254 = vmatpush1.msra.mxu0 0.0
  %1255 = vmatprep.subr.mxu0 0.0
  %1256 = vmatpush1.msra.mxu0 0.0
  %1257 = vmatprep.subr.mxu0 0.0
  %1258 = vmatpush1.msra.mxu0 0.0
  %1259 = vmatprep.subr.mxu0 0.0
  %1260 = vmatpush1.msra.mxu0 0.0
  %1261 = vmatprep.subr.mxu0 0.0
  %1262 = vmatpush1.msra.mxu0 0.0
  %1263 = vmatprep.subr.mxu0 0.0
  %1264 = vmatpush1.msra.mxu0 0.0
  %1265 = vmatprep.subr.mxu0 0.0
  %1266 = vmatpush1.msra.mxu0 0.0
  %1267 = vmatprep.subr.mxu0 0.0
  %1268 = vmatpush1.msra.mxu0 0.0
  %1269 = vmatprep.subr.mxu0 0.0
  %1270 = vmatpush1.msra.mxu0 0.0
  %1271 = vmatprep.subr.mxu0 0.0
  %1272 = vmatpush1.msra.mxu0 0.0
  %1273 = vmatprep.subr.mxu0 0.0
  %1274 = vmatpush1.msra.mxu0 0.0
  %1275 = vmatprep.mubr.f32.mxu0 0.0
  %1276 = vmatmul.mubr.f32.gmra.mrb[0].mxu0 %v1131
  %v1277 = vpop.f32.mrb[0].mxu0
  %v1278 = vadd.f32 0.0, %v1277
  %v1279 = vpop.f32.mrb[0].mxu0
  %1280 = vdwg.mxu0
  %v1281 = vadd.f32 %v1128, %v1278
  %v1282 = vadd.f32 %v1281, %v778
  %v1283 = vxor.u32 %v1282, 2147483648
  %v1284 = vmul.f32 %v1283, 1.442695
  %v1285 = vpow.pop %v1284
  %v1286 = vadd.f32 %v1285, 1.0
  %v1287 = vrcp.pop %v1286
  %v1288 = vmul.f32 1.0, %v1287
  %1289 = vmatprep.subr.mxu0 0.0
  %1290 = vmatpush1.msra.mxu0 %v585
  %1291 = vmatprep.subr.mxu0 0.0
  %1292 = vmatpush1.msra.mxu0 %v586
  %1293 = vmatprep.subr.mxu0 0.0
  %1294 = vmatpush1.msra.mxu0 %v587
  %1295 = vmatprep.subr.mxu0 0.0
  %1296 = vmatpush1.msra.mxu0 %v588
  %1297 = vmatprep.subr.mxu0 0.0
  %1298 = vmatpush1.msra.mxu0 0.0
  %1299 = vmatprep.subr.mxu0 0.0
  %1300 = vmatpush1.msra.mxu0 0.0
  %1301 = vmatprep.subr.mxu0 0.0
  %1302 = vmatpush1.msra.mxu0 0.0
  %1303 = vmatprep.subr.mxu0 0.0
  %1304 = vmatpush1.msra.mxu0 0.0
  %1305 = vmatprep.subr.mxu0 0.0
  %1306 = vmatpush1.msra.mxu0 0.0
  %1307 = vmatprep.subr.mxu0 0.0
  %1308 = vmatpush1.msra.mxu0 0.0
  %1309 = vmatprep.subr.mxu0 0.0
  %1310 = vmatpush1.msra.mxu0 0.0
  %1311 = vmatprep.subr.mxu0 0.0
  %1312 = vmatpush1.msra.mxu0 0.0
  %1313 = vmatprep.subr.mxu0 0.0
  %1314 = vmatpush1.msra.mxu0 0.0
  %1315 = vmatprep.subr.mxu0 0.0
  %1316 = vmatpush1.msra.mxu0 0.0
  %1317 = vmatprep.subr.mxu0 0.0
  %1318 = vmatpush1.msra.mxu0 0.0
  %1319 = vmatprep.subr.mxu0 0.0
  %1320 = vmatpush1.msra.mxu0 0.0
  %1321 = vmatprep.subr.mxu0 0.0
  %1322 = vmatpush1.msra.mxu0 0.0
  %1323 = vmatprep.subr.mxu0 0.0
  %1324 = vmatpush1.msra.mxu0 0.0
  %1325 = vmatprep.subr.mxu0 0.0
  %1326 = vmatpush1.msra.mxu0 0.0
  %1327 = vmatprep.subr.mxu0 0.0
  %1328 = vmatpush1.msra.mxu0 0.0
  %1329 = vmatprep.subr.mxu0 0.0
  %1330 = vmatpush1.msra.mxu0 0.0
  %1331 = vmatprep.subr.mxu0 0.0
  %1332 = vmatpush1.msra.mxu0 0.0
  %1333 = vmatprep.subr.mxu0 0.0
  %1334 = vmatpush1.msra.mxu0 0.0
  %1335 = vmatprep.subr.mxu0 0.0
  %1336 = vmatpush1.msra.mxu0 0.0
  %1337 = vmatprep.subr.mxu0 0.0
  %1338 = vmatpush1.msra.mxu0 0.0
  %1339 = vmatprep.subr.mxu0 0.0
  %1340 = vmatpush1.msra.mxu0 0.0
  %1341 = vmatprep.subr.mxu0 0.0
  %1342 = vmatpush1.msra.mxu0 0.0
  %1343 = vmatprep.subr.mxu0 0.0
  %1344 = vmatpush1.msra.mxu0 0.0
  %1345 = vmatprep.subr.mxu0 0.0
  %1346 = vmatpush1.msra.mxu0 0.0
  %1347 = vmatprep.subr.mxu0 0.0
  %1348 = vmatpush1.msra.mxu0 0.0
  %1349 = vmatprep.subr.mxu0 0.0
  %1350 = vmatpush1.msra.mxu0 0.0
  %1351 = vmatprep.subr.mxu0 0.0
  %1352 = vmatpush1.msra.mxu0 0.0
  %1353 = vmatprep.mubr.f32.mxu0 0.0
  %1354 = vmatmul.mubr.f32.gmra.mrb[0].mxu0 %v1131
  %v1355 = vpop.f32.mrb[0].mxu0
  %v1356 = vadd.f32 %v791, %v1355
  %v1357 = vpop.f32.mrb[0].mxu0
  %1358 = vdwg.mxu0
  %v1359 = vmul.f32 %v1210, %v1356
  %v1360 = vadd.f32 %v1129, %v1359
  %v1361 = vtanh.pop %v1360
  %v1362 = vsub.f32 1.0, %v1288
  %v1363 = vmul.f32 %v1362, %v1361
  %v1364 = vmul.f32 %v1288, %v869
  %v1365 = vadd.f32 %v1363, %v1364
  %v1366 = vld [vmem:[#allocation5 + $0xc] sm:$0x3]
  %v1367 = vld [vmem:[#allocation6 + $0xc] sm:$0x3]
  %v1368 = vld [vmem:[#allocation7 + $0xc] sm:$0x3]
  %v1370 = vsel %vm134, %v1123, 0
  %1372 = vmatprep.subr.mxu0 0.0
  %1373 = vmatpush1.msra.mxu0 %v589
  %1374 = vmatprep.subr.mxu0 0.0
  %1375 = vmatpush1.msra.mxu0 %v590
  %1376 = vmatprep.subr.mxu0 0.0
  %1377 = vmatpush1.msra.mxu0 %v591
  %1378 = vmatprep.subr.mxu0 0.0
  %1379 = vmatpush1.msra.mxu0 %v592
  %1380 = vmatprep.subr.mxu0 0.0
  %1381 = vmatpush1.msra.mxu0 0.0
  %1382 = vmatprep.subr.mxu0 0.0
  %1383 = vmatpush1.msra.mxu0 0.0
  %1384 = vmatprep.subr.mxu0 0.0
  %1385 = vmatpush1.msra.mxu0 0.0
  %1386 = vmatprep.subr.mxu0 0.0
  %1387 = vmatpush1.msra.mxu0 0.0
  %1388 = vmatprep.subr.mxu0 0.0
  %1389 = vmatpush1.msra.mxu0 0.0
  %1390 = vmatprep.subr.mxu0 0.0
  %1391 = vmatpush1.msra.mxu0 0.0
  %1392 = vmatprep.subr.mxu0 0.0
  %1393 = vmatpush1.msra.mxu0 0.0
  %1394 = vmatprep.subr.mxu0 0.0
  %1395 = vmatpush1.msra.mxu0 0.0
  %1396 = vmatprep.subr.mxu0 0.0
  %1397 = vmatpush1.msra.mxu0 0.0
  %1398 = vmatprep.subr.mxu0 0.0
  %1399 = vmatpush1.msra.mxu0 0.0
  %1400 = vmatprep.subr.mxu0 0.0
  %1401 = vmatpush1.msra.mxu0 0.0
  %1402 = vmatprep.subr.mxu0 0.0
  %1403 = vmatpush1.msra.mxu0 0.0
  %1404 = vmatprep.subr.mxu0 0.0
  %1405 = vmatpush1.msra.mxu0 0.0
  %1406 = vmatprep.subr.mxu0 0.0
  %1407 = vmatpush1.msra.mxu0 0.0
  %1408 = vmatprep.subr.mxu0 0.0
  %1409 = vmatpush1.msra.mxu0 0.0
  %1410 = vmatprep.subr.mxu0 0.0
  %1411 = vmatpush1.msra.mxu0 0.0
  %1412 = vmatprep.subr.mxu0 0.0
  %1413 = vmatpush1.msra.mxu0 0.0
  %1414 = vmatprep.subr.mxu0 0.0
  %1415 = vmatpush1.msra.mxu0 0.0
  %1416 = vmatprep.subr.mxu0 0.0
  %1417 = vmatpush1.msra.mxu0 0.0
  %1418 = vmatprep.subr.mxu0 0.0
  %1419 = vmatpush1.msra.mxu0 0.0
  %1420 = vmatprep.subr.mxu0 0.0
  %1421 = vmatpush1.msra.mxu0 0.0
  %1422 = vmatprep.subr.mxu0 0.0
  %1423 = vmatpush1.msra.mxu0 0.0
  %1424 = vmatprep.subr.mxu0 0.0
  %1425 = vmatpush1.msra.mxu0 0.0
  %1426 = vmatprep.subr.mxu0 0.0
  %1427 = vmatpush1.msra.mxu0 0.0
  %1428 = vmatprep.subr.mxu0 0.0
  %1429 = vmatpush1.msra.mxu0 0.0
  %1430 = vmatprep.subr.mxu0 0.0
  %1431 = vmatpush1.msra.mxu0 0.0
  %1432 = vmatprep.subr.mxu0 0.0
  %1433 = vmatpush1.msra.mxu0 0.0
  %1434 = vmatprep.subr.mxu0 0.0
  %1435 = vmatpush1.msra.mxu0 0.0
  %1436 = vmatprep.mubr.f32.mxu0 0.0
  %1437 = vmatmul.mubr.f32.gmra.mrb[0].mxu0 %v1370
  %v1438 = vpop.f32.mrb[0].mxu0
  %v1439 = vadd.f32 0.0, %v1438
  %v1440 = vpop.f32.mrb[0].mxu0
  %1441 = vdwg.mxu0
  %v1442 = vadd.f32 %v1366, %v1439
  %v1443 = vadd.f32 %v1442, %v948
  %v1444 = vxor.u32 %v1443, 2147483648
  %v1445 = vmul.f32 %v1444, 1.442695
  %v1446 = vpow.pop %v1445
  %v1447 = vadd.f32 %v1446, 1.0
  %v1448 = vrcp.pop %v1447
  %v1449 = vmul.f32 1.0, %v1448
  %1450 = vmatprep.subr.mxu0 0.0
  %1451 = vmatpush1.msra.mxu0 %v594
  %1452 = vmatprep.subr.mxu0 0.0
  %1453 = vmatpush1.msra.mxu0 %v595
  %1454 = vmatprep.subr.mxu0 0.0
  %1455 = vmatpush1.msra.mxu0 %v596
  %1456 = vmatprep.subr.mxu0 0.0
  %1457 = vmatpush1.msra.mxu0 %v597
  %1458 = vmatprep.subr.mxu0 0.0
  %1459 = vmatpush1.msra.mxu0 0.0
  %1460 = vmatprep.subr.mxu0 0.0
  %1461 = vmatpush1.msra.mxu0 0.0
  %1462 = vmatprep.subr.mxu0 0.0
  %1463 = vmatpush1.msra.mxu0 0.0
  %1464 = vmatprep.subr.mxu0 0.0
  %1465 = vmatpush1.msra.mxu0 0.0
  %1466 = vmatprep.subr.mxu0 0.0
  %1467 = vmatpush1.msra.mxu0 0.0
  %1468 = vmatprep.subr.mxu0 0.0
  %1469 = vmatpush1.msra.mxu0 0.0
  %1470 = vmatprep.subr.mxu0 0.0
  %1471 = vmatpush1.msra.mxu0 0.0
  %1472 = vmatprep.subr.mxu0 0.0
  %1473 = vmatpush1.msra.mxu0 0.0
  %1474 = vmatprep.subr.mxu0 0.0
  %1475 = vmatpush1.msra.mxu0 0.0
  %1476 = vmatprep.subr.mxu0 0.0
  %1477 = vmatpush1.msra.mxu0 0.0
  %1478 = vmatprep.subr.mxu0 0.0
  %1479 = vmatpush1.msra.mxu0 0.0
  %1480 = vmatprep.subr.mxu0 0.0
  %1481 = vmatpush1.msra.mxu0 0.0
  %1482 = vmatprep.subr.mxu0 0.0
  %1483 = vmatpush1.msra.mxu0 0.0
  %1484 = vmatprep.subr.mxu0 0.0
  %1485 = vmatpush1.msra.mxu0 0.0
  %1486 = vmatprep.subr.mxu0 0.0
  %1487 = vmatpush1.msra.mxu0 0.0
  %1488 = vmatprep.subr.mxu0 0.0
  %1489 = vmatpush1.msra.mxu0 0.0
  %1490 = vmatprep.subr.mxu0 0.0
  %1491 = vmatpush1.msra.mxu0 0.0
  %1492 = vmatprep.subr.mxu0 0.0
  %1493 = vmatpush1.msra.mxu0 0.0
  %1494 = vmatprep.subr.mxu0 0.0
  %1495 = vmatpush1.msra.mxu0 0.0
  %1496 = vmatprep.subr.mxu0 0.0
  %1497 = vmatpush1.msra.mxu0 0.0
  %1498 = vmatprep.subr.mxu0 0.0
  %1499 = vmatpush1.msra.mxu0 0.0
  %1500 = vmatprep.subr.mxu0 0.0
  %1501 = vmatpush1.msra.mxu0 0.0
  %1502 = vmatprep.subr.mxu0 0.0
  %1503 = vmatpush1.msra.mxu0 0.0
  %1504 = vmatprep.subr.mxu0 0.0
  %1505 = vmatpush1.msra.mxu0 0.0
  %1506 = vmatprep.subr.mxu0 0.0
  %1507 = vmatpush1.msra.mxu0 0.0
  %1508 = vmatprep.subr.mxu0 0.0
  %1509 = vmatpush1.msra.mxu0 0.0
  %1510 = vmatprep.subr.mxu0 0.0
  %1511 = vmatpush1.msra.mxu0 0.0
  %1512 = vmatprep.subr.mxu0 0.0
  %1513 = vmatpush1.msra.mxu0 0.0
  %1514 = vmatprep.mubr.f32.mxu0 0.0
  %1515 = vmatmul.mubr.f32.gmra.mrb[0].mxu0 %v1370
  %v1516 = vpop.f32.mrb[0].mxu0
  %v1517 = vadd.f32 0.0, %v1516
  %v1518 = vpop.f32.mrb[0].mxu0
  %1519 = vdwg.mxu0
  %v1520 = vadd.f32 %v1367, %v1517
  %v1521 = vadd.f32 %v1520, %v1032
  %v1522 = vxor.u32 %v1521, 2147483648
  %v1523 = vmul.f32 %v1522, 1.442695
  %v1524 = vpow.pop %v1523
  %v1525 = vadd.f32 %v1524, 1.0
  %v1526 = vrcp.pop %v1525
  %v1527 = vmul.f32 1.0, %v1526
  %1528 = vmatprep.subr.mxu0 0.0
  %1529 = vmatpush1.msra.mxu0 %v599
  %1530 = vmatprep.subr.mxu0 0.0
  %1531 = vmatpush1.msra.mxu0 %v600
  %1532 = vmatprep.subr.mxu0 0.0
  %1533 = vmatpush1.msra.mxu0 %v601
  %1534 = vmatprep.subr.mxu0 0.0
  %1535 = vmatpush1.msra.mxu0 %v602
  %1536 = vmatprep.subr.mxu0 0.0
  %1537 = vmatpush1.msra.mxu0 0.0
  %1538 = vmatprep.subr.mxu0 0.0
  %1539 = vmatpush1.msra.mxu0 0.0
  %1540 = vmatprep.subr.mxu0 0.0
  %1541 = vmatpush1.msra.mxu0 0.0
  %1542 = vmatprep.subr.mxu0 0.0
  %1543 = vmatpush1.msra.mxu0 0.0
  %1544 = vmatprep.subr.mxu0 0.0
  %1545 = vmatpush1.msra.mxu0 0.0
  %1546 = vmatprep.subr.mxu0 0.0
  %1547 = vmatpush1.msra.mxu0 0.0
  %1548 = vmatprep.subr.mxu0 0.0
  %1549 = vmatpush1.msra.mxu0 0.0
  %1550 = vmatprep.subr.mxu0 0.0
  %1551 = vmatpush1.msra.mxu0 0.0
  %1552 = vmatprep.subr.mxu0 0.0
  %1553 = vmatpush1.msra.mxu0 0.0
  %1554 = vmatprep.subr.mxu0 0.0
  %1555 = vmatpush1.msra.mxu0 0.0
  %1556 = vmatprep.subr.mxu0 0.0
  %1557 = vmatpush1.msra.mxu0 0.0
  %1558 = vmatprep.subr.mxu0 0.0
  %1559 = vmatpush1.msra.mxu0 0.0
  %1560 = vmatprep.subr.mxu0 0.0
  %1561 = vmatpush1.msra.mxu0 0.0
  %1562 = vmatprep.subr.mxu0 0.0
  %1563 = vmatpush1.msra.mxu0 0.0
  %1564 = vmatprep.subr.mxu0 0.0
  %1565 = vmatpush1.msra.mxu0 0.0
  %1566 = vmatprep.subr.mxu0 0.0
  %1567 = vmatpush1.msra.mxu0 0.0
  %1568 = vmatprep.subr.mxu0 0.0
  %1569 = vmatpush1.msra.mxu0 0.0
  %1570 = vmatprep.subr.mxu0 0.0
  %1571 = vmatpush1.msra.mxu0 0.0
  %1572 = vmatprep.subr.mxu0 0.0
  %1573 = vmatpush1.msra.mxu0 0.0
  %1574 = vmatprep.subr.mxu0 0.0
  %1575 = vmatpush1.msra.mxu0 0.0
  %1576 = vmatprep.subr.mxu0 0.0
  %1577 = vmatpush1.msra.mxu0 0.0
  %1578 = vmatprep.subr.mxu0 0.0
  %1579 = vmatpush1.msra.mxu0 0.0
  %1580 = vmatprep.subr.mxu0 0.0
  %1581 = vmatpush1.msra.mxu0 0.0
  %1582 = vmatprep.subr.mxu0 0.0
  %1583 = vmatpush1.msra.mxu0 0.0
  %1584 = vmatprep.subr.mxu0 0.0
  %1585 = vmatpush1.msra.mxu0 0.0
  %1586 = vmatprep.subr.mxu0 0.0
  %1587 = vmatpush1.msra.mxu0 0.0
  %1588 = vmatprep.subr.mxu0 0.0
  %1589 = vmatpush1.msra.mxu0 0.0
  %1590 = vmatprep.subr.mxu0 0.0
  %1591 = vmatpush1.msra.mxu0 0.0
  %1592 = vmatprep.mubr.f32.mxu0 0.0
  %1593 = vmatmul.mubr.f32.gmra.mrb[0].mxu0 %v1370
  %v1594 = vpop.f32.mrb[0].mxu0
  %v1595 = vadd.f32 %v1045, %v1594
  %v1596 = vpop.f32.mrb[0].mxu0
  %1597 = vdwg.mxu0
  %v1598 = vmul.f32 %v1449, %v1595
  %v1599 = vadd.f32 %v1368, %v1598
  %v1600 = vtanh.pop %v1599
  %v1601 = vsub.f32 1.0, %v1527
  %v1602 = vmul.f32 %v1601, %v1600
  %v1603 = vmul.f32 %v1527, %v1123
  %v1604 = vadd.f32 %v1602, %v1603
  %1605 = vst.msk [vmem:[#allocation8 + $0x2] sm:$0x3] %vm1124, %v1365
  %1606 = vst.msk [vmem:[#allocation9 + $0xc] sm:$0x3] %vm1124, %v1604
  %v1607 = vld [vmem:[#allocation2 + $0x4] sm:$0x3]
  %v1608 = vld [vmem:[#allocation3 + $0x4] sm:$0x3]
  %v1609 = vld [vmem:[#allocation4 + $0x4] sm:$0x3]
  %v1611 = vsel %vm134, %v1365, 0
  %1613 = vmatprep.subr.mxu0 0.0
  %1614 = vmatpush1.msra.mxu0 %v575
  %1615 = vmatprep.subr.mxu0 0.0
  %1616 = vmatpush1.msra.mxu0 %v576
  %1617 = vmatprep.subr.mxu0 0.0
  %1618 = vmatpush1.msra.mxu0 %v577
  %1619 = vmatprep.subr.mxu0 0.0
  %1620 = vmatpush1.msra.mxu0 %v578
  %1621 = vmatprep.subr.mxu0 0.0
  %1622 = vmatpush1.msra.mxu0 0.0
  %1623 = vmatprep.subr.mxu0 0.0
  %1624 = vmatpush1.msra.mxu0 0.0
  %1625 = vmatprep.subr.mxu0 0.0
  %1626 = vmatpush1.msra.mxu0 0.0
  %1627 = vmatprep.subr.mxu0 0.0
  %1628 = vmatpush1.msra.mxu0 0.0
  %1629 = vmatprep.subr.mxu0 0.0
  %1630 = vmatpush1.msra.mxu0 0.0
  %1631 = vmatprep.subr.mxu0 0.0
  %1632 = vmatpush1.msra.mxu0 0.0
  %1633 = vmatprep.subr.mxu0 0.0
  %1634 = vmatpush1.msra.mxu0 0.0
  %1635 = vmatprep.subr.mxu0 0.0
  %1636 = vmatpush1.msra.mxu0 0.0
  %1637 = vmatprep.subr.mxu0 0.0
  %1638 = vmatpush1.msra.mxu0 0.0
  %1639 = vmatprep.subr.mxu0 0.0
  %1640 = vmatpush1.msra.mxu0 0.0
  %1641 = vmatprep.subr.mxu0 0.0
  %1642 = vmatpush1.msra.mxu0 0.0
  %1643 = vmatprep.subr.mxu0 0.0
  %1644 = vmatpush1.msra.mxu0 0.0
  %1645 = vmatprep.subr.mxu0 0.0
  %1646 = vmatpush1.msra.mxu0 0.0
  %1647 = vmatprep.subr.mxu0 0.0
  %1648 = vmatpush1.msra.mxu0 0.0
  %1649 = vmatprep.subr.mxu0 0.0
  %1650 = vmatpush1.msra.mxu0 0.0
  %1651 = vmatprep.subr.mxu0 0.0
  %1652 = vmatpush1.msra.mxu0 0.0
  %1653 = vmatprep.subr.mxu0 0.0
  %1654 = vmatpush1.msra.mxu0 0.0
  %1655 = vmatprep.subr.mxu0 0.0
  %1656 = vmatpush1.msra.mxu0 0.0
  %1657 = vmatprep.subr.mxu0 0.0
  %1658 = vmatpush1.msra.mxu0 0.0
  %1659 = vmatprep.subr.mxu0 0.0
  %1660 = vmatpush1.msra.mxu0 0.0
  %1661 = vmatprep.subr.mxu0 0.0
  %1662 = vmatpush1.msra.mxu0 0.0
  %1663 = vmatprep.subr.mxu0 0.0
  %1664 = vmatpush1.msra.mxu0 0.0
  %1665 = vmatprep.subr.mxu0 0.0
  %1666 = vmatpush1.msra.mxu0 0.0
  %1667 = vmatprep.subr.mxu0 0.0
  %1668 = vmatpush1.msra.mxu0 0.0
  %1669 = vmatprep.subr.mxu0 0.0
  %1670 = vmatpush1.msra.mxu0 0.0
  %1671 = vmatprep.subr.mxu0 0.0
  %1672 = vmatpush1.msra.mxu0 0.0
  %1673 = vmatprep.subr.mxu0 0.0
  %1674 = vmatpush1.msra.mxu0 0.0
  %1675 = vmatprep.subr.mxu0 0.0
  %1676 = vmatpush1.msra.mxu0 0.0
  %1677 = vmatprep.mubr.f32.mxu0 0.0
  %1678 = vmatmul.mubr.f32.gmra.mrb[0].mxu0 %v1611
  %v1679 = vpop.f32.mrb[0].mxu0
  %v1680 = vadd.f32 0.0, %v1679
  %v1681 = vpop.f32.mrb[0].mxu0
  %1682 = vdwg.mxu0
  %v1683 = vadd.f32 %v1607, %v1680
  %v1684 = vadd.f32 %v1683, %v694
  %v1685 = vxor.u32 %v1684, 2147483648
  %v1686 = vmul.f32 %v1685, 1.442695
  %v1687 = vpow.pop %v1686
  %v1688 = vadd.f32 %v1687, 1.0
  %v1689 = vrcp.pop %v1688
  %v1690 = vmul.f32 1.0, %v1689
  %1691 = vmatprep.subr.mxu0 0.0
  %1692 = vmatpush1.msra.mxu0 %v580
  %1693 = vmatprep.subr.mxu0 0.0
  %1694 = vmatpush1.msra.mxu0 %v581
  %1695 = vmatprep.subr.mxu0 0.0
  %1696 = vmatpush1.msra.mxu0 %v582
  %1697 = vmatprep.subr.mxu0 0.0
  %1698 = vmatpush1.msra.mxu0 %v583
  %1699 = vmatprep.subr.mxu0 0.0
  %1700 = vmatpush1.msra.mxu0 0.0
  %1701 = vmatprep.subr.mxu0 0.0
  %1702 = vmatpush1.msra.mxu0 0.0
  %1703 = vmatprep.subr.mxu0 0.0
  %1704 = vmatpush1.msra.mxu0 0.0
  %1705 = vmatprep.subr.mxu0 0.0
  %1706 = vmatpush1.msra.mxu0 0.0
  %1707 = vmatprep.subr.mxu0 0.0
  %1708 = vmatpush1.msra.mxu0 0.0
  %1709 = vmatprep.subr.mxu0 0.0
  %1710 = vmatpush1.msra.mxu0 0.0
  %1711 = vmatprep.subr.mxu0 0.0
  %1712 = vmatpush1.msra.mxu0 0.0
  %1713 = vmatprep.subr.mxu0 0.0
  %1714 = vmatpush1.msra.mxu0 0.0
  %1715 = vmatprep.subr.mxu0 0.0
  %1716 = vmatpush1.msra.mxu0 0.0
  %1717 = vmatprep.subr.mxu0 0.0
  %1718 = vmatpush1.msra.mxu0 0.0
  %1719 = vmatprep.subr.mxu0 0.0
  %1720 = vmatpush1.msra.mxu0 0.0
  %1721 = vmatprep.subr.mxu0 0.0
  %1722 = vmatpush1.msra.mxu0 0.0
  %1723 = vmatprep.subr.mxu0 0.0
  %1724 = vmatpush1.msra.mxu0 0.0
  %1725 = vmatprep.subr.mxu0 0.0
  %1726 = vmatpush1.msra.mxu0 0.0
  %1727 = vmatprep.subr.mxu0 0.0
  %1728 = vmatpush1.msra.mxu0 0.0
  %1729 = vmatprep.subr.mxu0 0.0
  %1730 = vmatpush1.msra.mxu0 0.0
  %1731 = vmatprep.subr.mxu0 0.0
  %1732 = vmatpush1.msra.mxu0 0.0
  %1733 = vmatprep.subr.mxu0 0.0
  %1734 = vmatpush1.msra.mxu0 0.0
  %1735 = vmatprep.subr.mxu0 0.0
  %1736 = vmatpush1.msra.mxu0 0.0
  %1737 = vmatprep.subr.mxu0 0.0
  %1738 = vmatpush1.msra.mxu0 0.0
  %1739 = vmatprep.subr.mxu0 0.0
  %1740 = vmatpush1.msra.mxu0 0.0
  %1741 = vmatprep.subr.mxu0 0.0
  %1742 = vmatpush1.msra.mxu0 0.0
  %1743 = vmatprep.subr.mxu0 0.0
  %1744 = vmatpush1.msra.mxu0 0.0
  %1745 = vmatprep.subr.mxu0 0.0
  %1746 = vmatpush1.msra.mxu0 0.0
  %1747 = vmatprep.subr.mxu0 0.0
  %1748 = vmatpush1.msra.mxu0 0.0
  %1749 = vmatprep.subr.mxu0 0.0
  %1750 = vmatpush1.msra.mxu0 0.0
  %1751 = vmatprep.subr.mxu0 0.0
  %1752 = vmatpush1.msra.mxu0 0.0
  %1753 = vmatprep.subr.mxu0 0.0
  %1754 = vmatpush1.msra.mxu0 0.0
  %1755 = vmatprep.mubr.f32.mxu0 0.0
  %1756 = vmatmul.mubr.f32.gmra.mrb[0].mxu0 %v1611
  %v1757 = vpop.f32.mrb[0].mxu0
  %v1758 = vadd.f32 0.0, %v1757
  %v1759 = vpop.f32.mrb[0].mxu0
  %1760 = vdwg.mxu0
  %v1761 = vadd.f32 %v1608, %v1758
  %v1762 = vadd.f32 %v1761, %v778
  %v1763 = vxor.u32 %v1762, 2147483648
  %v1764 = vmul.f32 %v1763, 1.442695
  %v1765 = vpow.pop %v1764
  %v1766 = vadd.f32 %v1765, 1.0
  %v1767 = vrcp.pop %v1766
  %v1768 = vmul.f32 1.0, %v1767
  %1769 = vmatprep.subr.mxu0 0.0
  %1770 = vmatpush1.msra.mxu0 %v585
  %1771 = vmatprep.subr.mxu0 0.0
  %1772 = vmatpush1.msra.mxu0 %v586
  %1773 = vmatprep.subr.mxu0 0.0
  %1774 = vmatpush1.msra.mxu0 %v587
  %1775 = vmatprep.subr.mxu0 0.0
  %1776 = vmatpush1.msra.mxu0 %v588
  %1777 = vmatprep.subr.mxu0 0.0
  %1778 = vmatpush1.msra.mxu0 0.0
  %1779 = vmatprep.subr.mxu0 0.0
  %1780 = vmatpush1.msra.mxu0 0.0
  %1781 = vmatprep.subr.mxu0 0.0
  %1782 = vmatpush1.msra.mxu0 0.0
  %1783 = vmatprep.subr.mxu0 0.0
  %1784 = vmatpush1.msra.mxu0 0.0
  %1785 = vmatprep.subr.mxu0 0.0
  %1786 = vmatpush1.msra.mxu0 0.0
  %1787 = vmatprep.subr.mxu0 0.0
  %1788 = vmatpush1.msra.mxu0 0.0
  %1789 = vmatprep.subr.mxu0 0.0
  %1790 = vmatpush1.msra.mxu0 0.0
  %1791 = vmatprep.subr.mxu0 0.0
  %1792 = vmatpush1.msra.mxu0 0.0
  %1793 = vmatprep.subr.mxu0 0.0
  %1794 = vmatpush1.msra.mxu0 0.0
  %1795 = vmatprep.subr.mxu0 0.0
  %1796 = vmatpush1.msra.mxu0 0.0
  %1797 = vmatprep.subr.mxu0 0.0
  %1798 = vmatpush1.msra.mxu0 0.0
  %1799 = vmatprep.subr.mxu0 0.0
  %1800 = vmatpush1.msra.mxu0 0.0
  %1801 = vmatprep.subr.mxu0 0.0
  %1802 = vmatpush1.msra.mxu0 0.0
  %1803 = vmatprep.subr.mxu0 0.0
  %1804 = vmatpush1.msra.mxu0 0.0
  %1805 = vmatprep.subr.mxu0 0.0
  %1806 = vmatpush1.msra.mxu0 0.0
  %1807 = vmatprep.subr.mxu0 0.0
  %1808 = vmatpush1.msra.mxu0 0.0
  %1809 = vmatprep.subr.mxu0 0.0
  %1810 = vmatpush1.msra.mxu0 0.0
  %1811 = vmatprep.subr.mxu0 0.0
  %1812 = vmatpush1.msra.mxu0 0.0
  %1813 = vmatprep.subr.mxu0 0.0
  %1814 = vmatpush1.msra.mxu0 0.0
  %1815 = vmatprep.subr.mxu0 0.0
  %1816 = vmatpush1.msra.mxu0 0.0
  %1817 = vmatprep.subr.mxu0 0.0
  %1818 = vmatpush1.msra.mxu0 0.0
  %1819 = vmatprep.subr.mxu0 0.0
  %1820 = vmatpush1.msra.mxu0 0.0
  %1821 = vmatprep.subr.mxu0 0.0
  %1822 = vmatpush1.msra.mxu0 0.0
  %1823 = vmatprep.subr.mxu0 0.0
  %1824 = vmatpush1.msra.mxu0 0.0
  %1825 = vmatprep.subr.mxu0 0.0
  %1826 = vmatpush1.msra.mxu0 0.0
  %1827 = vmatprep.subr.mxu0 0.0
  %1828 = vmatpush1.msra.mxu0 0.0
  %1829 = vmatprep.subr.mxu0 0.0
  %1830 = vmatpush1.msra.mxu0 0.0
  %1831 = vmatprep.subr.mxu0 0.0
  %1832 = vmatpush1.msra.mxu0 0.0
  %1833 = vmatprep.mubr.f32.mxu0 0.0
  %1834 = vmatmul.mubr.f32.gmra.mrb[0].mxu0 %v1611
  %v1835 = vpop.f32.mrb[0].mxu0
  %v1836 = vadd.f32 %v791, %v1835
  %v1837 = vpop.f32.mrb[0].mxu0
  %1838 = vdwg.mxu0
  %v1839 = vmul.f32 %v1690, %v1836
  %v1840 = vadd.f32 %v1609, %v1839
  %v1841 = vtanh.pop %v1840
  %v1842 = vsub.f32 1.0, %v1768
  %v1843 = vmul.f32 %v1842, %v1841
  %v1844 = vmul.f32 %v1768, %v1365
  %v1845 = vadd.f32 %v1843, %v1844
  %v1846 = vld [vmem:[#allocation5 + $0xa] sm:$0x3]
  %v1847 = vld [vmem:[#allocation6 + $0xa] sm:$0x3]
  %v1848 = vld [vmem:[#allocation7 + $0xa] sm:$0x3]
  %v1850 = vsel %vm134, %v1604, 0
  %1852 = vmatprep.subr.mxu0 0.0
  %1853 = vmatpush1.msra.mxu0 %v589
  %1854 = vmatprep.subr.mxu0 0.0
  %1855 = vmatpush1.msra.mxu0 %v590
  %1856 = vmatprep.subr.mxu0 0.0
  %1857 = vmatpush1.msra.mxu0 %v591
  %1858 = vmatprep.subr.mxu0 0.0
  %1859 = vmatpush1.msra.mxu0 %v592
  %1860 = vmatprep.subr.mxu0 0.0
  %1861 = vmatpush1.msra.mxu0 0.0
  %1862 = vmatprep.subr.mxu0 0.0
  %1863 = vmatpush1.msra.mxu0 0.0
  %1864 = vmatprep.subr.mxu0 0.0
  %1865 = vmatpush1.msra.mxu0 0.0
  %1866 = vmatprep.subr.mxu0 0.0
  %1867 = vmatpush1.msra.mxu0 0.0
  %1868 = vmatprep.subr.mxu0 0.0
  %1869 = vmatpush1.msra.mxu0 0.0
  %1870 = vmatprep.subr.mxu0 0.0
  %1871 = vmatpush1.msra.mxu0 0.0
  %1872 = vmatprep.subr.mxu0 0.0
  %1873 = vmatpush1.msra.mxu0 0.0
  %1874 = vmatprep.subr.mxu0 0.0
  %1875 = vmatpush1.msra.mxu0 0.0
  %1876 = vmatprep.subr.mxu0 0.0
  %1877 = vmatpush1.msra.mxu0 0.0
  %1878 = vmatprep.subr.mxu0 0.0
  %1879 = vmatpush1.msra.mxu0 0.0
  %1880 = vmatprep.subr.mxu0 0.0
  %1881 = vmatpush1.msra.mxu0 0.0
  %1882 = vmatprep.subr.mxu0 0.0
  %1883 = vmatpush1.msra.mxu0 0.0
  %1884 = vmatprep.subr.mxu0 0.0
  %1885 = vmatpush1.msra.mxu0 0.0
  %1886 = vmatprep.subr.mxu0 0.0
  %1887 = vmatpush1.msra.mxu0 0.0
  %1888 = vmatprep.subr.mxu0 0.0
  %1889 = vmatpush1.msra.mxu0 0.0
  %1890 = vmatprep.subr.mxu0 0.0
  %1891 = vmatpush1.msra.mxu0 0.0
  %1892 = vmatprep.subr.mxu0 0.0
  %1893 = vmatpush1.msra.mxu0 0.0
  %1894 = vmatprep.subr.mxu0 0.0
  %1895 = vmatpush1.msra.mxu0 0.0
  %1896 = vmatprep.subr.mxu0 0.0
  %1897 = vmatpush1.msra.mxu0 0.0
  %1898 = vmatprep.subr.mxu0 0.0
  %1899 = vmatpush1.msra.mxu0 0.0
  %1900 = vmatprep.subr.mxu0 0.0
  %1901 = vmatpush1.msra.mxu0 0.0
  %1902 = vmatprep.subr.mxu0 0.0
  %1903 = vmatpush1.msra.mxu0 0.0
  %1904 = vmatprep.subr.mxu0 0.0
  %1905 = vmatpush1.msra.mxu0 0.0
  %1906 = vmatprep.subr.mxu0 0.0
  %1907 = vmatpush1.msra.mxu0 0.0
  %1908 = vmatprep.subr.mxu0 0.0
  %1909 = vmatpush1.msra.mxu0 0.0
  %1910 = vmatprep.subr.mxu0 0.0
  %1911 = vmatpush1.msra.mxu0 0.0
  %1912 = vmatprep.subr.mxu0 0.0
  %1913 = vmatpush1.msra.mxu0 0.0
  %1914 = vmatprep.subr.mxu0 0.0
  %1915 = vmatpush1.msra.mxu0 0.0
  %1916 = vmatprep.mubr.f32.mxu0 0.0
  %1917 = vmatmul.mubr.f32.gmra.mrb[0].mxu0 %v1850
  %v1918 = vpop.f32.mrb[0].mxu0
  %v1919 = vadd.f32 0.0, %v1918
  %v1920 = vpop.f32.mrb[0].mxu0
  %1921 = vdwg.mxu0
  %v1922 = vadd.f32 %v1846, %v1919
  %v1923 = vadd.f32 %v1922, %v948
  %v1924 = vxor.u32 %v1923, 2147483648
  %v1925 = vmul.f32 %v1924, 1.442695
  %v1926 = vpow.pop %v1925
  %v1927 = vadd.f32 %v1926, 1.0
  %v1928 = vrcp.pop %v1927
  %v1929 = vmul.f32 1.0, %v1928
  %1930 = vmatprep.subr.mxu0 0.0
  %1931 = vmatpush1.msra.mxu0 %v594
  %1932 = vmatprep.subr.mxu0 0.0
  %1933 = vmatpush1.msra.mxu0 %v595
  %1934 = vmatprep.subr.mxu0 0.0
  %1935 = vmatpush1.msra.mxu0 %v596
  %1936 = vmatprep.subr.mxu0 0.0
  %1937 = vmatpush1.msra.mxu0 %v597
  %1938 = vmatprep.subr.mxu0 0.0
  %1939 = vmatpush1.msra.mxu0 0.0
  %1940 = vmatprep.subr.mxu0 0.0
  %1941 = vmatpush1.msra.mxu0 0.0
  %1942 = vmatprep.subr.mxu0 0.0
  %1943 = vmatpush1.msra.mxu0 0.0
  %1944 = vmatprep.subr.mxu0 0.0
  %1945 = vmatpush1.msra.mxu0 0.0
  %1946 = vmatprep.subr.mxu0 0.0
  %1947 = vmatpush1.msra.mxu0 0.0
  %1948 = vmatprep.subr.mxu0 0.0
  %1949 = vmatpush1.msra.mxu0 0.0
  %1950 = vmatprep.subr.mxu0 0.0
  %1951 = vmatpush1.msra.mxu0 0.0
  %1952 = vmatprep.subr.mxu0 0.0
  %1953 = vmatpush1.msra.mxu0 0.0
  %1954 = vmatprep.subr.mxu0 0.0
  %1955 = vmatpush1.msra.mxu0 0.0
  %1956 = vmatprep.subr.mxu0 0.0
  %1957 = vmatpush1.msra.mxu0 0.0
  %1958 = vmatprep.subr.mxu0 0.0
  %1959 = vmatpush1.msra.mxu0 0.0
  %1960 = vmatprep.subr.mxu0 0.0
  %1961 = vmatpush1.msra.mxu0 0.0
  %1962 = vmatprep.subr.mxu0 0.0
  %1963 = vmatpush1.msra.mxu0 0.0
  %1964 = vmatprep.subr.mxu0 0.0
  %1965 = vmatpush1.msra.mxu0 0.0
  %1966 = vmatprep.subr.mxu0 0.0
  %1967 = vmatpush1.msra.mxu0 0.0
  %1968 = vmatprep.subr.mxu0 0.0
  %1969 = vmatpush1.msra.mxu0 0.0
  %1970 = vmatprep.subr.mxu0 0.0
  %1971 = vmatpush1.msra.mxu0 0.0
  %1972 = vmatprep.subr.mxu0 0.0
  %1973 = vmatpush1.msra.mxu0 0.0
  %1974 = vmatprep.subr.mxu0 0.0
  %1975 = vmatpush1.msra.mxu0 0.0
  %1976 = vmatprep.subr.mxu0 0.0
  %1977 = vmatpush1.msra.mxu0 0.0
  %1978 = vmatprep.subr.mxu0 0.0
  %1979 = vmatpush1.msra.mxu0 0.0
  %1980 = vmatprep.subr.mxu0 0.0
  %1981 = vmatpush1.msra.mxu0 0.0
  %1982 = vmatprep.subr.mxu0 0.0
  %1983 = vmatpush1.msra.mxu0 0.0
  %1984 = vmatprep.subr.mxu0 0.0
  %1985 = vmatpush1.msra.mxu0 0.0
  %1986 = vmatprep.subr.mxu0 0.0
  %1987 = vmatpush1.msra.mxu0 0.0
  %1988 = vmatprep.subr.mxu0 0.0
  %1989 = vmatpush1.msra.mxu0 0.0
  %1990 = vmatprep.subr.mxu0 0.0
  %1991 = vmatpush1.msra.mxu0 0.0
  %1992 = vmatprep.subr.mxu0 0.0
  %1993 = vmatpush1.msra.mxu0 0.0
  %1994 = vmatprep.mubr.f32.mxu0 0.0
  %1995 = vmatmul.mubr.f32.gmra.mrb[0].mxu0 %v1850
  %v1996 = vpop.f32.mrb[0].mxu0
  %v1997 = vadd.f32 0.0, %v1996
  %v1998 = vpop.f32.mrb[0].mxu0
  %1999 = vdwg.mxu0
  %v2000 = vadd.f32 %v1847, %v1997
  %v2001 = vadd.f32 %v2000, %v1032
  %v2002 = vxor.u32 %v2001, 2147483648
  %v2003 = vmul.f32 %v2002, 1.442695
  %v2004 = vpow.pop %v2003
  %v2005 = vadd.f32 %v2004, 1.0
  %v2006 = vrcp.pop %v2005
  %v2007 = vmul.f32 1.0, %v2006
  %2008 = vmatprep.subr.mxu0 0.0
  %2009 = vmatpush1.msra.mxu0 %v599
  %2010 = vmatprep.subr.mxu0 0.0
  %2011 = vmatpush1.msra.mxu0 %v600
  %2012 = vmatprep.subr.mxu0 0.0
  %2013 = vmatpush1.msra.mxu0 %v601
  %2014 = vmatprep.subr.mxu0 0.0
  %2015 = vmatpush1.msra.mxu0 %v602
  %2016 = vmatprep.subr.mxu0 0.0
  %2017 = vmatpush1.msra.mxu0 0.0
  %2018 = vmatprep.subr.mxu0 0.0
  %2019 = vmatpush1.msra.mxu0 0.0
  %2020 = vmatprep.subr.mxu0 0.0
  %2021 = vmatpush1.msra.mxu0 0.0
  %2022 = vmatprep.subr.mxu0 0.0
  %2023 = vmatpush1.msra.mxu0 0.0
  %2024 = vmatprep.subr.mxu0 0.0
  %2025 = vmatpush1.msra.mxu0 0.0
  %2026 = vmatprep.subr.mxu0 0.0
  %2027 = vmatpush1.msra.mxu0 0.0
  %2028 = vmatprep.subr.mxu0 0.0
  %2029 = vmatpush1.msra.mxu0 0.0
  %2030 = vmatprep.subr.mxu0 0.0
  %2031 = vmatpush1.msra.mxu0 0.0
  %2032 = vmatprep.subr.mxu0 0.0
  %2033 = vmatpush1.msra.mxu0 0.0
  %2034 = vmatprep.subr.mxu0 0.0
  %2035 = vmatpush1.msra.mxu0 0.0
  %2036 = vmatprep.subr.mxu0 0.0
  %2037 = vmatpush1.msra.mxu0 0.0
  %2038 = vmatprep.subr.mxu0 0.0
  %2039 = vmatpush1.msra.mxu0 0.0
  %2040 = vmatprep.subr.mxu0 0.0
  %2041 = vmatpush1.msra.mxu0 0.0
  %2042 = vmatprep.subr.mxu0 0.0
  %2043 = vmatpush1.msra.mxu0 0.0
  %2044 = vmatprep.subr.mxu0 0.0
  %2045 = vmatpush1.msra.mxu0 0.0
  %2046 = vmatprep.subr.mxu0 0.0
  %2047 = vmatpush1.msra.mxu0 0.0
  %2048 = vmatprep.subr.mxu0 0.0
  %2049 = vmatpush1.msra.mxu0 0.0
  %2050 = vmatprep.subr.mxu0 0.0
  %2051 = vmatpush1.msra.mxu0 0.0
  %2052 = vmatprep.subr.mxu0 0.0
  %2053 = vmatpush1.msra.mxu0 0.0
  %2054 = vmatprep.subr.mxu0 0.0
  %2055 = vmatpush1.msra.mxu0 0.0
  %2056 = vmatprep.subr.mxu0 0.0
  %2057 = vmatpush1.msra.mxu0 0.0
  %2058 = vmatprep.subr.mxu0 0.0
  %2059 = vmatpush1.msra.mxu0 0.0
  %2060 = vmatprep.subr.mxu0 0.0
  %2061 = vmatpush1.msra.mxu0 0.0
  %2062 = vmatprep.subr.mxu0 0.0
  %2063 = vmatpush1.msra.mxu0 0.0
  %2064 = vmatprep.subr.mxu0 0.0
  %2065 = vmatpush1.msra.mxu0 0.0
  %2066 = vmatprep.subr.mxu0 0.0
  %2067 = vmatpush1.msra.mxu0 0.0
  %2068 = vmatprep.subr.mxu0 0.0
  %2069 = vmatpush1.msra.mxu0 0.0
  %2070 = vmatprep.subr.mxu0 0.0
  %2071 = vmatpush1.msra.mxu0 0.0
  %2072 = vmatprep.mubr.f32.mxu0 0.0
  %2073 = vmatmul.mubr.f32.gmra.mrb[0].mxu0 %v1850
  %v2074 = vpop.f32.mrb[0].mxu0
  %v2075 = vadd.f32 %v1045, %v2074
  %v2076 = vpop.f32.mrb[0].mxu0
  %2077 = vdwg.mxu0
  %v2078 = vmul.f32 %v1929, %v2075
  %v2079 = vadd.f32 %v1848, %v2078
  %v2080 = vtanh.pop %v2079
  %v2081 = vsub.f32 1.0, %v2007
  %v2082 = vmul.f32 %v2081, %v2080
  %v2083 = vmul.f32 %v2007, %v1604
  %v2084 = vadd.f32 %v2082, %v2083
  %2085 = vst.msk [vmem:[#allocation8 + $0x4] sm:$0x3] %vm1124, %v1845
  %2086 = vst.msk [vmem:[#allocation9 + $0xa] sm:$0x3] %vm1124, %v2084
  %v2087 = vld [vmem:[#allocation2 + $0x6] sm:$0x3]
  %v2088 = vld [vmem:[#allocation3 + $0x6] sm:$0x3]
  %v2089 = vld [vmem:[#allocation4 + $0x6] sm:$0x3]
  %v2091 = vsel %vm134, %v1845, 0
  %2093 = vmatprep.subr.mxu0 0.0
  %2094 = vmatpush1.msra.mxu0 %v575
  %2095 = vmatprep.subr.mxu0 0.0
  %2096 = vmatpush1.msra.mxu0 %v576
  %2097 = vmatprep.subr.mxu0 0.0
  %2098 = vmatpush1.msra.mxu0 %v577
  %2099 = vmatprep.subr.mxu0 0.0
  %2100 = vmatpush1.msra.mxu0 %v578
  %2101 = vmatprep.subr.mxu0 0.0
  %2102 = vmatpush1.msra.mxu0 0.0
  %2103 = vmatprep.subr.mxu0 0.0
  %2104 = vmatpush1.msra.mxu0 0.0
  %2105 = vmatprep.subr.mxu0 0.0
  %2106 = vmatpush1.msra.mxu0 0.0
  %2107 = vmatprep.subr.mxu0 0.0
  %2108 = vmatpush1.msra.mxu0 0.0
  %2109 = vmatprep.subr.mxu0 0.0
  %2110 = vmatpush1.msra.mxu0 0.0
  %2111 = vmatprep.subr.mxu0 0.0
  %2112 = vmatpush1.msra.mxu0 0.0
  %2113 = vmatprep.subr.mxu0 0.0
  %2114 = vmatpush1.msra.mxu0 0.0
  %2115 = vmatprep.subr.mxu0 0.0
  %2116 = vmatpush1.msra.mxu0 0.0
  %2117 = vmatprep.subr.mxu0 0.0
  %2118 = vmatpush1.msra.mxu0 0.0
  %2119 = vmatprep.subr.mxu0 0.0
  %2120 = vmatpush1.msra.mxu0 0.0
  %2121 = vmatprep.subr.mxu0 0.0
  %2122 = vmatpush1.msra.mxu0 0.0
  %2123 = vmatprep.subr.mxu0 0.0
  %2124 = vmatpush1.msra.mxu0 0.0
  %2125 = vmatprep.subr.mxu0 0.0
  %2126 = vmatpush1.msra.mxu0 0.0
  %2127 = vmatprep.subr.mxu0 0.0
  %2128 = vmatpush1.msra.mxu0 0.0
  %2129 = vmatprep.subr.mxu0 0.0
  %2130 = vmatpush1.msra.mxu0 0.0
  %2131 = vmatprep.subr.mxu0 0.0
  %2132 = vmatpush1.msra.mxu0 0.0
  %2133 = vmatprep.subr.mxu0 0.0
  %2134 = vmatpush1.msra.mxu0 0.0
  %2135 = vmatprep.subr.mxu0 0.0
  %2136 = vmatpush1.msra.mxu0 0.0
  %2137 = vmatprep.subr.mxu0 0.0
  %2138 = vmatpush1.msra.mxu0 0.0
  %2139 = vmatprep.subr.mxu0 0.0
  %2140 = vmatpush1.msra.mxu0 0.0
  %2141 = vmatprep.subr.mxu0 0.0
  %2142 = vmatpush1.msra.mxu0 0.0
  %2143 = vmatprep.subr.mxu0 0.0
  %2144 = vmatpush1.msra.mxu0 0.0
  %2145 = vmatprep.subr.mxu0 0.0
  %2146 = vmatpush1.msra.mxu0 0.0
  %2147 = vmatprep.subr.mxu0 0.0
  %2148 = vmatpush1.msra.mxu0 0.0
  %2149 = vmatprep.subr.mxu0 0.0
  %2150 = vmatpush1.msra.mxu0 0.0
  %2151 = vmatprep.subr.mxu0 0.0
  %2152 = vmatpush1.msra.mxu0 0.0
  %2153 = vmatprep.subr.mxu0 0.0
  %2154 = vmatpush1.msra.mxu0 0.0
  %2155 = vmatprep.subr.mxu0 0.0
  %2156 = vmatpush1.msra.mxu0 0.0
  %2157 = vmatprep.mubr.f32.mxu0 0.0
  %2158 = vmatmul.mubr.f32.gmra.mrb[0].mxu0 %v2091
  %v2159 = vpop.f32.mrb[0].mxu0
  %v2160 = vadd.f32 0.0, %v2159
  %v2161 = vpop.f32.mrb[0].mxu0
  %2162 = vdwg.mxu0
  %v2163 = vadd.f32 %v2087, %v2160
  %v2164 = vadd.f32 %v2163, %v694
  %v2165 = vxor.u32 %v2164, 2147483648
  %v2166 = vmul.f32 %v2165, 1.442695
  %v2167 = vpow.pop %v2166
  %v2168 = vadd.f32 %v2167, 1.0
  %v2169 = vrcp.pop %v2168
  %v2170 = vmul.f32 1.0, %v2169
  %2171 = vmatprep.subr.mxu0 0.0
  %2172 = vmatpush1.msra.mxu0 %v580
  %2173 = vmatprep.subr.mxu0 0.0
  %2174 = vmatpush1.msra.mxu0 %v581
  %2175 = vmatprep.subr.mxu0 0.0
  %2176 = vmatpush1.msra.mxu0 %v582
  %2177 = vmatprep.subr.mxu0 0.0
  %2178 = vmatpush1.msra.mxu0 %v583
  %2179 = vmatprep.subr.mxu0 0.0
  %2180 = vmatpush1.msra.mxu0 0.0
  %2181 = vmatprep.subr.mxu0 0.0
  %2182 = vmatpush1.msra.mxu0 0.0
  %2183 = vmatprep.subr.mxu0 0.0
  %2184 = vmatpush1.msra.mxu0 0.0
  %2185 = vmatprep.subr.mxu0 0.0
  %2186 = vmatpush1.msra.mxu0 0.0
  %2187 = vmatprep.subr.mxu0 0.0
  %2188 = vmatpush1.msra.mxu0 0.0
  %2189 = vmatprep.subr.mxu0 0.0
  %2190 = vmatpush1.msra.mxu0 0.0
  %2191 = vmatprep.subr.mxu0 0.0
  %2192 = vmatpush1.msra.mxu0 0.0
  %2193 = vmatprep.subr.mxu0 0.0
  %2194 = vmatpush1.msra.mxu0 0.0
  %2195 = vmatprep.subr.mxu0 0.0
  %2196 = vmatpush1.msra.mxu0 0.0
  %2197 = vmatprep.subr.mxu0 0.0
  %2198 = vmatpush1.msra.mxu0 0.0
  %2199 = vmatprep.subr.mxu0 0.0
  %2200 = vmatpush1.msra.mxu0 0.0
  %2201 = vmatprep.subr.mxu0 0.0
  %2202 = vmatpush1.msra.mxu0 0.0
  %2203 = vmatprep.subr.mxu0 0.0
  %2204 = vmatpush1.msra.mxu0 0.0
  %2205 = vmatprep.subr.mxu0 0.0
  %2206 = vmatpush1.msra.mxu0 0.0
  %2207 = vmatprep.subr.mxu0 0.0
  %2208 = vmatpush1.msra.mxu0 0.0
  %2209 = vmatprep.subr.mxu0 0.0
  %2210 = vmatpush1.msra.mxu0 0.0
  %2211 = vmatprep.subr.mxu0 0.0
  %2212 = vmatpush1.msra.mxu0 0.0
  %2213 = vmatprep.subr.mxu0 0.0
  %2214 = vmatpush1.msra.mxu0 0.0
  %2215 = vmatprep.subr.mxu0 0.0
  %2216 = vmatpush1.msra.mxu0 0.0
  %2217 = vmatprep.subr.mxu0 0.0
  %2218 = vmatpush1.msra.mxu0 0.0
  %2219 = vmatprep.subr.mxu0 0.0
  %2220 = vmatpush1.msra.mxu0 0.0
  %2221 = vmatprep.subr.mxu0 0.0
  %2222 = vmatpush1.msra.mxu0 0.0
  %2223 = vmatprep.subr.mxu0 0.0
  %2224 = vmatpush1.msra.mxu0 0.0
  %2225 = vmatprep.subr.mxu0 0.0
  %2226 = vmatpush1.msra.mxu0 0.0
  %2227 = vmatprep.subr.mxu0 0.0
  %2228 = vmatpush1.msra.mxu0 0.0
  %2229 = vmatprep.subr.mxu0 0.0
  %2230 = vmatpush1.msra.mxu0 0.0
  %2231 = vmatprep.subr.mxu0 0.0
  %2232 = vmatpush1.msra.mxu0 0.0
  %2233 = vmatprep.subr.mxu0 0.0
  %2234 = vmatpush1.msra.mxu0 0.0
  %2235 = vmatprep.mubr.f32.mxu0 0.0
  %2236 = vmatmul.mubr.f32.gmra.mrb[0].mxu0 %v2091
  %v2237 = vpop.f32.mrb[0].mxu0
  %v2238 = vadd.f32 0.0, %v2237
  %v2239 = vpop.f32.mrb[0].mxu0
  %2240 = vdwg.mxu0
  %v2241 = vadd.f32 %v2088, %v2238
  %v2242 = vadd.f32 %v2241, %v778
  %v2243 = vxor.u32 %v2242, 2147483648
  %v2244 = vmul.f32 %v2243, 1.442695
  %v2245 = vpow.pop %v2244
  %v2246 = vadd.f32 %v2245, 1.0
  %v2247 = vrcp.pop %v2246
  %v2248 = vmul.f32 1.0, %v2247
  %2249 = vmatprep.subr.mxu0 0.0
  %2250 = vmatpush1.msra.mxu0 %v585
  %2251 = vmatprep.subr.mxu0 0.0
  %2252 = vmatpush1.msra.mxu0 %v586
  %2253 = vmatprep.subr.mxu0 0.0
  %2254 = vmatpush1.msra.mxu0 %v587
  %2255 = vmatprep.subr.mxu0 0.0
  %2256 = vmatpush1.msra.mxu0 %v588
  %2257 = vmatprep.subr.mxu0 0.0
  %2258 = vmatpush1.msra.mxu0 0.0
  %2259 = vmatprep.subr.mxu0 0.0
  %2260 = vmatpush1.msra.mxu0 0.0
  %2261 = vmatprep.subr.mxu0 0.0
  %2262 = vmatpush1.msra.mxu0 0.0
  %2263 = vmatprep.subr.mxu0 0.0
  %2264 = vmatpush1.msra.mxu0 0.0
  %2265 = vmatprep.subr.mxu0 0.0
  %2266 = vmatpush1.msra.mxu0 0.0
  %2267 = vmatprep.subr.mxu0 0.0
  %2268 = vmatpush1.msra.mxu0 0.0
  %2269 = vmatprep.subr.mxu0 0.0
  %2270 = vmatpush1.msra.mxu0 0.0
  %2271 = vmatprep.subr.mxu0 0.0
  %2272 = vmatpush1.msra.mxu0 0.0
  %2273 = vmatprep.subr.mxu0 0.0
  %2274 = vmatpush1.msra.mxu0 0.0
  %2275 = vmatprep.subr.mxu0 0.0
  %2276 = vmatpush1.msra.mxu0 0.0
  %2277 = vmatprep.subr.mxu0 0.0
  %2278 = vmatpush1.msra.mxu0 0.0
  %2279 = vmatprep.subr.mxu0 0.0
  %2280 = vmatpush1.msra.mxu0 0.0
  %2281 = vmatprep.subr.mxu0 0.0
  %2282 = vmatpush1.msra.mxu0 0.0
  %2283 = vmatprep.subr.mxu0 0.0
  %2284 = vmatpush1.msra.mxu0 0.0
  %2285 = vmatprep.subr.mxu0 0.0
  %2286 = vmatpush1.msra.mxu0 0.0
  %2287 = vmatprep.subr.mxu0 0.0
  %2288 = vmatpush1.msra.mxu0 0.0
  %2289 = vmatprep.subr.mxu0 0.0
  %2290 = vmatpush1.msra.mxu0 0.0
  %2291 = vmatprep.subr.mxu0 0.0
  %2292 = vmatpush1.msra.mxu0 0.0
  %2293 = vmatprep.subr.mxu0 0.0
  %2294 = vmatpush1.msra.mxu0 0.0
  %2295 = vmatprep.subr.mxu0 0.0
  %2296 = vmatpush1.msra.mxu0 0.0
  %2297 = vmatprep.subr.mxu0 0.0
  %2298 = vmatpush1.msra.mxu0 0.0
  %2299 = vmatprep.subr.mxu0 0.0
  %2300 = vmatpush1.msra.mxu0 0.0
  %2301 = vmatprep.subr.mxu0 0.0
  %2302 = vmatpush1.msra.mxu0 0.0
  %2303 = vmatprep.subr.mxu0 0.0
  %2304 = vmatpush1.msra.mxu0 0.0
  %2305 = vmatprep.subr.mxu0 0.0
  %2306 = vmatpush1.msra.mxu0 0.0
  %2307 = vmatprep.subr.mxu0 0.0
  %2308 = vmatpush1.msra.mxu0 0.0
  %2309 = vmatprep.subr.mxu0 0.0
  %2310 = vmatpush1.msra.mxu0 0.0
  %2311 = vmatprep.subr.mxu0 0.0
  %2312 = vmatpush1.msra.mxu0 0.0
  %2313 = vmatprep.mubr.f32.mxu0 0.0
  %2314 = vmatmul.mubr.f32.gmra.mrb[0].mxu0 %v2091
  %v2315 = vpop.f32.mrb[0].mxu0
  %v2316 = vadd.f32 %v791, %v2315
  %v2317 = vpop.f32.mrb[0].mxu0
  %2318 = vdwg.mxu0
  %v2319 = vmul.f32 %v2170, %v2316
  %v2320 = vadd.f32 %v2089, %v2319
  %v2321 = vtanh.pop %v2320
  %v2322 = vsub.f32 1.0, %v2248
  %v2323 = vmul.f32 %v2322, %v2321
  %v2324 = vmul.f32 %v2248, %v1845
  %v2325 = vadd.f32 %v2323, %v2324
  %v2326 = vld [vmem:[#allocation5 + $0x8] sm:$0x3]
  %v2327 = vld [vmem:[#allocation6 + $0x8] sm:$0x3]
  %v2328 = vld [vmem:[#allocation7 + $0x8] sm:$0x3]
  %v2330 = vsel %vm134, %v2084, 0
  %2332 = vmatprep.subr.mxu0 0.0
  %2333 = vmatpush1.msra.mxu0 %v589
  %2334 = vmatprep.subr.mxu0 0.0
  %2335 = vmatpush1.msra.mxu0 %v590
  %2336 = vmatprep.subr.mxu0 0.0
  %2337 = vmatpush1.msra.mxu0 %v591
  %2338 = vmatprep.subr.mxu0 0.0
  %2339 = vmatpush1.msra.mxu0 %v592
  %2340 = vmatprep.subr.mxu0 0.0
  %2341 = vmatpush1.msra.mxu0 0.0
  %2342 = vmatprep.subr.mxu0 0.0
  %2343 = vmatpush1.msra.mxu0 0.0
  %2344 = vmatprep.subr.mxu0 0.0
  %2345 = vmatpush1.msra.mxu0 0.0
  %2346 = vmatprep.subr.mxu0 0.0
  %2347 = vmatpush1.msra.mxu0 0.0
  %2348 = vmatprep.subr.mxu0 0.0
  %2349 = vmatpush1.msra.mxu0 0.0
  %2350 = vmatprep.subr.mxu0 0.0
  %2351 = vmatpush1.msra.mxu0 0.0
  %2352 = vmatprep.subr.mxu0 0.0
  %2353 = vmatpush1.msra.mxu0 0.0
  %2354 = vmatprep.subr.mxu0 0.0
  %2355 = vmatpush1.msra.mxu0 0.0
  %2356 = vmatprep.subr.mxu0 0.0
  %2357 = vmatpush1.msra.mxu0 0.0
  %2358 = vmatprep.subr.mxu0 0.0
  %2359 = vmatpush1.msra.mxu0 0.0
  %2360 = vmatprep.subr.mxu0 0.0
  %2361 = vmatpush1.msra.mxu0 0.0
  %2362 = vmatprep.subr.mxu0 0.0
  %2363 = vmatpush1.msra.mxu0 0.0
  %2364 = vmatprep.subr.mxu0 0.0
  %2365 = vmatpush1.msra.mxu0 0.0
  %2366 = vmatprep.subr.mxu0 0.0
  %2367 = vmatpush1.msra.mxu0 0.0
  %2368 = vmatprep.subr.mxu0 0.0
  %2369 = vmatpush1.msra.mxu0 0.0
  %2370 = vmatprep.subr.mxu0 0.0
  %2371 = vmatpush1.msra.mxu0 0.0
  %2372 = vmatprep.subr.mxu0 0.0
  %2373 = vmatpush1.msra.mxu0 0.0
  %2374 = vmatprep.subr.mxu0 0.0
  %2375 = vmatpush1.msra.mxu0 0.0
  %2376 = vmatprep.subr.mxu0 0.0
  %2377 = vmatpush1.msra.mxu0 0.0
  %2378 = vmatprep.subr.mxu0 0.0
  %2379 = vmatpush1.msra.mxu0 0.0
  %2380 = vmatprep.subr.mxu0 0.0
  %2381 = vmatpush1.msra.mxu0 0.0
  %2382 = vmatprep.subr.mxu0 0.0
  %2383 = vmatpush1.msra.mxu0 0.0
  %2384 = vmatprep.subr.mxu0 0.0
  %2385 = vmatpush1.msra.mxu0 0.0
  %2386 = vmatprep.subr.mxu0 0.0
  %2387 = vmatpush1.msra.mxu0 0.0
  %2388 = vmatprep.subr.mxu0 0.0
  %2389 = vmatpush1.msra.mxu0 0.0
  %2390 = vmatprep.subr.mxu0 0.0
  %2391 = vmatpush1.msra.mxu0 0.0
  %2392 = vmatprep.subr.mxu0 0.0
  %2393 = vmatpush1.msra.mxu0 0.0
  %2394 = vmatprep.subr.mxu0 0.0
  %2395 = vmatpush1.msra.mxu0 0.0
  %2396 = vmatprep.mubr.f32.mxu0 0.0
  %2397 = vmatmul.mubr.f32.gmra.mrb[0].mxu0 %v2330
  %v2398 = vpop.f32.mrb[0].mxu0
  %v2399 = vadd.f32 0.0, %v2398
  %v2400 = vpop.f32.mrb[0].mxu0
  %2401 = vdwg.mxu0
  %v2402 = vadd.f32 %v2326, %v2399
  %v2403 = vadd.f32 %v2402, %v948
  %v2404 = vxor.u32 %v2403, 2147483648
  %v2405 = vmul.f32 %v2404, 1.442695
  %v2406 = vpow.pop %v2405
  %v2407 = vadd.f32 %v2406, 1.0
  %v2408 = vrcp.pop %v2407
  %v2409 = vmul.f32 1.0, %v2408
  %2410 = vmatprep.subr.mxu0 0.0
  %2411 = vmatpush1.msra.mxu0 %v594
  %2412 = vmatprep.subr.mxu0 0.0
  %2413 = vmatpush1.msra.mxu0 %v595
  %2414 = vmatprep.subr.mxu0 0.0
  %2415 = vmatpush1.msra.mxu0 %v596
  %2416 = vmatprep.subr.mxu0 0.0
  %2417 = vmatpush1.msra.mxu0 %v597
  %2418 = vmatprep.subr.mxu0 0.0
  %2419 = vmatpush1.msra.mxu0 0.0
  %2420 = vmatprep.subr.mxu0 0.0
  %2421 = vmatpush1.msra.mxu0 0.0
  %2422 = vmatprep.subr.mxu0 0.0
  %2423 = vmatpush1.msra.mxu0 0.0
  %2424 = vmatprep.subr.mxu0 0.0
  %2425 = vmatpush1.msra.mxu0 0.0
  %2426 = vmatprep.subr.mxu0 0.0
  %2427 = vmatpush1.msra.mxu0 0.0
  %2428 = vmatprep.subr.mxu0 0.0
  %2429 = vmatpush1.msra.mxu0 0.0
  %2430 = vmatprep.subr.mxu0 0.0
  %2431 = vmatpush1.msra.mxu0 0.0
  %2432 = vmatprep.subr.mxu0 0.0
  %2433 = vmatpush1.msra.mxu0 0.0
  %2434 = vmatprep.subr.mxu0 0.0
  %2435 = vmatpush1.msra.mxu0 0.0
  %2436 = vmatprep.subr.mxu0 0.0
  %2437 = vmatpush1.msra.mxu0 0.0
  %2438 = vmatprep.subr.mxu0 0.0
  %2439 = vmatpush1.msra.mxu0 0.0
  %2440 = vmatprep.subr.mxu0 0.0
  %2441 = vmatpush1.msra.mxu0 0.0
  %2442 = vmatprep.subr.mxu0 0.0
  %2443 = vmatpush1.msra.mxu0 0.0
  %2444 = vmatprep.subr.mxu0 0.0
  %2445 = vmatpush1.msra.mxu0 0.0
  %2446 = vmatprep.subr.mxu0 0.0
  %2447 = vmatpush1.msra.mxu0 0.0
  %2448 = vmatprep.subr.mxu0 0.0
  %2449 = vmatpush1.msra.mxu0 0.0
  %2450 = vmatprep.subr.mxu0 0.0
  %2451 = vmatpush1.msra.mxu0 0.0
  %2452 = vmatprep.subr.mxu0 0.0
  %2453 = vmatpush1.msra.mxu0 0.0
  %2454 = vmatprep.subr.mxu0 0.0
  %2455 = vmatpush1.msra.mxu0 0.0
  %2456 = vmatprep.subr.mxu0 0.0
  %2457 = vmatpush1.msra.mxu0 0.0
  %2458 = vmatprep.subr.mxu0 0.0
  %2459 = vmatpush1.msra.mxu0 0.0
  %2460 = vmatprep.subr.mxu0 0.0
  %2461 = vmatpush1.msra.mxu0 0.0
  %2462 = vmatprep.subr.mxu0 0.0
  %2463 = vmatpush1.msra.mxu0 0.0
  %2464 = vmatprep.subr.mxu0 0.0
  %2465 = vmatpush1.msra.mxu0 0.0
  %2466 = vmatprep.subr.mxu0 0.0
  %2467 = vmatpush1.msra.mxu0 0.0
  %2468 = vmatprep.subr.mxu0 0.0
  %2469 = vmatpush1.msra.mxu0 0.0
  %2470 = vmatprep.subr.mxu0 0.0
  %2471 = vmatpush1.msra.mxu0 0.0
  %2472 = vmatprep.subr.mxu0 0.0
  %2473 = vmatpush1.msra.mxu0 0.0
  %2474 = vmatprep.mubr.f32.mxu0 0.0
  %2475 = vmatmul.mubr.f32.gmra.mrb[0].mxu0 %v2330
  %v2476 = vpop.f32.mrb[0].mxu0
  %v2477 = vadd.f32 0.0, %v2476
  %v2478 = vpop.f32.mrb[0].mxu0
  %2479 = vdwg.mxu0
  %v2480 = vadd.f32 %v2327, %v2477
  %v2481 = vadd.f32 %v2480, %v1032
  %v2482 = vxor.u32 %v2481, 2147483648
  %v2483 = vmul.f32 %v2482, 1.442695
  %v2484 = vpow.pop %v2483
  %v2485 = vadd.f32 %v2484, 1.0
  %v2486 = vrcp.pop %v2485
  %v2487 = vmul.f32 1.0, %v2486
  %2488 = vmatprep.subr.mxu0 0.0
  %2489 = vmatpush1.msra.mxu0 %v599
  %2490 = vmatprep.subr.mxu0 0.0
  %2491 = vmatpush1.msra.mxu0 %v600
  %2492 = vmatprep.subr.mxu0 0.0
  %2493 = vmatpush1.msra.mxu0 %v601
  %2494 = vmatprep.subr.mxu0 0.0
  %2495 = vmatpush1.msra.mxu0 %v602
  %2496 = vmatprep.subr.mxu0 0.0
  %2497 = vmatpush1.msra.mxu0 0.0
  %2498 = vmatprep.subr.mxu0 0.0
  %2499 = vmatpush1.msra.mxu0 0.0
  %2500 = vmatprep.subr.mxu0 0.0
  %2501 = vmatpush1.msra.mxu0 0.0
  %2502 = vmatprep.subr.mxu0 0.0
  %2503 = vmatpush1.msra.mxu0 0.0
  %2504 = vmatprep.subr.mxu0 0.0
  %2505 = vmatpush1.msra.mxu0 0.0
  %2506 = vmatprep.subr.mxu0 0.0
  %2507 = vmatpush1.msra.mxu0 0.0
  %2508 = vmatprep.subr.mxu0 0.0
  %2509 = vmatpush1.msra.mxu0 0.0
  %2510 = vmatprep.subr.mxu0 0.0
  %2511 = vmatpush1.msra.mxu0 0.0
  %2512 = vmatprep.subr.mxu0 0.0
  %2513 = vmatpush1.msra.mxu0 0.0
  %2514 = vmatprep.subr.mxu0 0.0
  %2515 = vmatpush1.msra.mxu0 0.0
  %2516 = vmatprep.subr.mxu0 0.0
  %2517 = vmatpush1.msra.mxu0 0.0
  %2518 = vmatprep.subr.mxu0 0.0
  %2519 = vmatpush1.msra.mxu0 0.0
  %2520 = vmatprep.subr.mxu0 0.0
  %2521 = vmatpush1.msra.mxu0 0.0
  %2522 = vmatprep.subr.mxu0 0.0
  %2523 = vmatpush1.msra.mxu0 0.0
  %2524 = vmatprep.subr.mxu0 0.0
  %2525 = vmatpush1.msra.mxu0 0.0
  %2526 = vmatprep.subr.mxu0 0.0
  %2527 = vmatpush1.msra.mxu0 0.0
  %2528 = vmatprep.subr.mxu0 0.0
  %2529 = vmatpush1.msra.mxu0 0.0
  %2530 = vmatprep.subr.mxu0 0.0
  %2531 = vmatpush1.msra.mxu0 0.0
  %2532 = vmatprep.subr.mxu0 0.0
  %2533 = vmatpush1.msra.mxu0 0.0
  %2534 = vmatprep.subr.mxu0 0.0
  %2535 = vmatpush1.msra.mxu0 0.0
  %2536 = vmatprep.subr.mxu0 0.0
  %2537 = vmatpush1.msra.mxu0 0.0
  %2538 = vmatprep.subr.mxu0 0.0
  %2539 = vmatpush1.msra.mxu0 0.0
  %2540 = vmatprep.subr.mxu0 0.0
  %2541 = vmatpush1.msra.mxu0 0.0
  %2542 = vmatprep.subr.mxu0 0.0
  %2543 = vmatpush1.msra.mxu0 0.0
  %2544 = vmatprep.subr.mxu0 0.0
  %2545 = vmatpush1.msra.mxu0 0.0
  %2546 = vmatprep.subr.mxu0 0.0
  %2547 = vmatpush1.msra.mxu0 0.0
  %2548 = vmatprep.subr.mxu0 0.0
  %2549 = vmatpush1.msra.mxu0 0.0
  %2550 = vmatprep.subr.mxu0 0.0
  %2551 = vmatpush1.msra.mxu0 0.0
  %2552 = vmatprep.mubr.f32.mxu0 0.0
  %2553 = vmatmul.mubr.f32.gmra.mrb[0].mxu0 %v2330
  %v2554 = vpop.f32.mrb[0].mxu0
  %v2555 = vadd.f32 %v1045, %v2554
  %v2556 = vpop.f32.mrb[0].mxu0
  %2557 = vdwg.mxu0
  %v2558 = vmul.f32 %v2409, %v2555
  %v2559 = vadd.f32 %v2328, %v2558
  %v2560 = vtanh.pop %v2559
  %v2561 = vsub.f32 1.0, %v2487
  %v2562 = vmul.f32 %v2561, %v2560
  %v2563 = vmul.f32 %v2487, %v2084
  %v2564 = vadd.f32 %v2562, %v2563
  %2565 = vst.msk [vmem:[#allocation8 + $0x6] sm:$0x3] %vm1124, %v2325
  %2566 = vst.msk [vmem:[#allocation9 + $0x8] sm:$0x3] %vm1124, %v2564
  %v2567 = vld [vmem:[#allocation2 + $0x8] sm:$0x3]
  %v2568 = vld [vmem:[#allocation3 + $0x8] sm:$0x3]
  %v2569 = vld [vmem:[#allocation4 + $0x8] sm:$0x3]
  %v2571 = vsel %vm134, %v2325, 0
  %2573 = vmatprep.subr.mxu0 0.0
  %2574 = vmatpush1.msra.mxu0 %v575
  %2575 = vmatprep.subr.mxu0 0.0
  %2576 = vmatpush1.msra.mxu0 %v576
  %2577 = vmatprep.subr.mxu0 0.0
  %2578 = vmatpush1.msra.mxu0 %v577
  %2579 = vmatprep.subr.mxu0 0.0
  %2580 = vmatpush1.msra.mxu0 %v578
  %2581 = vmatprep.subr.mxu0 0.0
  %2582 = vmatpush1.msra.mxu0 0.0
  %2583 = vmatprep.subr.mxu0 0.0
  %2584 = vmatpush1.msra.mxu0 0.0
  %2585 = vmatprep.subr.mxu0 0.0
  %2586 = vmatpush1.msra.mxu0 0.0
  %2587 = vmatprep.subr.mxu0 0.0
  %2588 = vmatpush1.msra.mxu0 0.0
  %2589 = vmatprep.subr.mxu0 0.0
  %2590 = vmatpush1.msra.mxu0 0.0
  %2591 = vmatprep.subr.mxu0 0.0
  %2592 = vmatpush1.msra.mxu0 0.0
  %2593 = vmatprep.subr.mxu0 0.0
  %2594 = vmatpush1.msra.mxu0 0.0
  %2595 = vmatprep.subr.mxu0 0.0
  %2596 = vmatpush1.msra.mxu0 0.0
  %2597 = vmatprep.subr.mxu0 0.0
  %2598 = vmatpush1.msra.mxu0 0.0
  %2599 = vmatprep.subr.mxu0 0.0
  %2600 = vmatpush1.msra.mxu0 0.0
  %2601 = vmatprep.subr.mxu0 0.0
  %2602 = vmatpush1.msra.mxu0 0.0
  %2603 = vmatprep.subr.mxu0 0.0
  %2604 = vmatpush1.msra.mxu0 0.0
  %2605 = vmatprep.subr.mxu0 0.0
  %2606 = vmatpush1.msra.mxu0 0.0
  %2607 = vmatprep.subr.mxu0 0.0
  %2608 = vmatpush1.msra.mxu0 0.0
  %2609 = vmatprep.subr.mxu0 0.0
  %2610 = vmatpush1.msra.mxu0 0.0
  %2611 = vmatprep.subr.mxu0 0.0
  %2612 = vmatpush1.msra.mxu0 0.0
  %2613 = vmatprep.subr.mxu0 0.0
  %2614 = vmatpush1.msra.mxu0 0.0
  %2615 = vmatprep.subr.mxu0 0.0
  %2616 = vmatpush1.msra.mxu0 0.0
  %2617 = vmatprep.subr.mxu0 0.0
  %2618 = vmatpush1.msra.mxu0 0.0
  %2619 = vmatprep.subr.mxu0 0.0
  %2620 = vmatpush1.msra.mxu0 0.0
  %2621 = vmatprep.subr.mxu0 0.0
  %2622 = vmatpush1.msra.mxu0 0.0
  %2623 = vmatprep.subr.mxu0 0.0
  %2624 = vmatpush1.msra.mxu0 0.0
  %2625 = vmatprep.subr.mxu0 0.0
  %2626 = vmatpush1.msra.mxu0 0.0
  %2627 = vmatprep.subr.mxu0 0.0
  %2628 = vmatpush1.msra.mxu0 0.0
  %2629 = vmatprep.subr.mxu0 0.0
  %2630 = vmatpush1.msra.mxu0 0.0
  %2631 = vmatprep.subr.mxu0 0.0
  %2632 = vmatpush1.msra.mxu0 0.0
  %2633 = vmatprep.subr.mxu0 0.0
  %2634 = vmatpush1.msra.mxu0 0.0
  %2635 = vmatprep.subr.mxu0 0.0
  %2636 = vmatpush1.msra.mxu0 0.0
  %2637 = vmatprep.mubr.f32.mxu0 0.0
  %2638 = vmatmul.mubr.f32.gmra.mrb[0].mxu0 %v2571
  %v2639 = vpop.f32.mrb[0].mxu0
  %v2640 = vadd.f32 0.0, %v2639
  %v2641 = vpop.f32.mrb[0].mxu0
  %2642 = vdwg.mxu0
  %v2643 = vadd.f32 %v2567, %v2640
  %v2644 = vadd.f32 %v2643, %v694
  %v2645 = vxor.u32 %v2644, 2147483648
  %v2646 = vmul.f32 %v2645, 1.442695
  %v2647 = vpow.pop %v2646
  %v2648 = vadd.f32 %v2647, 1.0
  %v2649 = vrcp.pop %v2648
  %v2650 = vmul.f32 1.0, %v2649
  %2651 = vmatprep.subr.mxu0 0.0
  %2652 = vmatpush1.msra.mxu0 %v580
  %2653 = vmatprep.subr.mxu0 0.0
  %2654 = vmatpush1.msra.mxu0 %v581
  %2655 = vmatprep.subr.mxu0 0.0
  %2656 = vmatpush1.msra.mxu0 %v582
  %2657 = vmatprep.subr.mxu0 0.0
  %2658 = vmatpush1.msra.mxu0 %v583
  %2659 = vmatprep.subr.mxu0 0.0
  %2660 = vmatpush1.msra.mxu0 0.0
  %2661 = vmatprep.subr.mxu0 0.0
  %2662 = vmatpush1.msra.mxu0 0.0
  %2663 = vmatprep.subr.mxu0 0.0
  %2664 = vmatpush1.msra.mxu0 0.0
  %2665 = vmatprep.subr.mxu0 0.0
  %2666 = vmatpush1.msra.mxu0 0.0
  %2667 = vmatprep.subr.mxu0 0.0
  %2668 = vmatpush1.msra.mxu0 0.0
  %2669 = vmatprep.subr.mxu0 0.0
  %2670 = vmatpush1.msra.mxu0 0.0
  %2671 = vmatprep.subr.mxu0 0.0
  %2672 = vmatpush1.msra.mxu0 0.0
  %2673 = vmatprep.subr.mxu0 0.0
  %2674 = vmatpush1.msra.mxu0 0.0
  %2675 = vmatprep.subr.mxu0 0.0
  %2676 = vmatpush1.msra.mxu0 0.0
  %2677 = vmatprep.subr.mxu0 0.0
  %2678 = vmatpush1.msra.mxu0 0.0
  %2679 = vmatprep.subr.mxu0 0.0
  %2680 = vmatpush1.msra.mxu0 0.0
  %2681 = vmatprep.subr.mxu0 0.0
  %2682 = vmatpush1.msra.mxu0 0.0
  %2683 = vmatprep.subr.mxu0 0.0
  %2684 = vmatpush1.msra.mxu0 0.0
  %2685 = vmatprep.subr.mxu0 0.0
  %2686 = vmatpush1.msra.mxu0 0.0
  %2687 = vmatprep.subr.mxu0 0.0
  %2688 = vmatpush1.msra.mxu0 0.0
  %2689 = vmatprep.subr.mxu0 0.0
  %2690 = vmatpush1.msra.mxu0 0.0
  %2691 = vmatprep.subr.mxu0 0.0
  %2692 = vmatpush1.msra.mxu0 0.0
  %2693 = vmatprep.subr.mxu0 0.0
  %2694 = vmatpush1.msra.mxu0 0.0
  %2695 = vmatprep.subr.mxu0 0.0
  %2696 = vmatpush1.msra.mxu0 0.0
  %2697 = vmatprep.subr.mxu0 0.0
  %2698 = vmatpush1.msra.mxu0 0.0
  %2699 = vmatprep.subr.mxu0 0.0
  %2700 = vmatpush1.msra.mxu0 0.0
  %2701 = vmatprep.subr.mxu0 0.0
  %2702 = vmatpush1.msra.mxu0 0.0
  %2703 = vmatprep.subr.mxu0 0.0
  %2704 = vmatpush1.msra.mxu0 0.0
  %2705 = vmatprep.subr.mxu0 0.0
  %2706 = vmatpush1.msra.mxu0 0.0
  %2707 = vmatprep.subr.mxu0 0.0
  %2708 = vmatpush1.msra.mxu0 0.0
  %2709 = vmatprep.subr.mxu0 0.0
  %2710 = vmatpush1.msra.mxu0 0.0
  %2711 = vmatprep.subr.mxu0 0.0
  %2712 = vmatpush1.msra.mxu0 0.0
  %2713 = vmatprep.subr.mxu0 0.0
  %2714 = vmatpush1.msra.mxu0 0.0
  %2715 = vmatprep.mubr.f32.mxu0 0.0
  %2716 = vmatmul.mubr.f32.gmra.mrb[0].mxu0 %v2571
  %v2717 = vpop.f32.mrb[0].mxu0
  %v2718 = vadd.f32 0.0, %v2717
  %v2719 = vpop.f32.mrb[0].mxu0
  %2720 = vdwg.mxu0
  %v2721 = vadd.f32 %v2568, %v2718
  %v2722 = vadd.f32 %v2721, %v778
  %v2723 = vxor.u32 %v2722, 2147483648
  %v2724 = vmul.f32 %v2723, 1.442695
  %v2725 = vpow.pop %v2724
  %v2726 = vadd.f32 %v2725, 1.0
  %v2727 = vrcp.pop %v2726
  %v2728 = vmul.f32 1.0, %v2727
  %2729 = vmatprep.subr.mxu0 0.0
  %2730 = vmatpush1.msra.mxu0 %v585
  %2731 = vmatprep.subr.mxu0 0.0
  %2732 = vmatpush1.msra.mxu0 %v586
  %2733 = vmatprep.subr.mxu0 0.0
  %2734 = vmatpush1.msra.mxu0 %v587
  %2735 = vmatprep.subr.mxu0 0.0
  %2736 = vmatpush1.msra.mxu0 %v588
  %2737 = vmatprep.subr.mxu0 0.0
  %2738 = vmatpush1.msra.mxu0 0.0
  %2739 = vmatprep.subr.mxu0 0.0
  %2740 = vmatpush1.msra.mxu0 0.0
  %2741 = vmatprep.subr.mxu0 0.0
  %2742 = vmatpush1.msra.mxu0 0.0
  %2743 = vmatprep.subr.mxu0 0.0
  %2744 = vmatpush1.msra.mxu0 0.0
  %2745 = vmatprep.subr.mxu0 0.0
  %2746 = vmatpush1.msra.mxu0 0.0
  %2747 = vmatprep.subr.mxu0 0.0
  %2748 = vmatpush1.msra.mxu0 0.0
  %2749 = vmatprep.subr.mxu0 0.0
  %2750 = vmatpush1.msra.mxu0 0.0
  %2751 = vmatprep.subr.mxu0 0.0
  %2752 = vmatpush1.msra.mxu0 0.0
  %2753 = vmatprep.subr.mxu0 0.0
  %2754 = vmatpush1.msra.mxu0 0.0
  %2755 = vmatprep.subr.mxu0 0.0
  %2756 = vmatpush1.msra.mxu0 0.0
  %2757 = vmatprep.subr.mxu0 0.0
  %2758 = vmatpush1.msra.mxu0 0.0
  %2759 = vmatprep.subr.mxu0 0.0
  %2760 = vmatpush1.msra.mxu0 0.0
  %2761 = vmatprep.subr.mxu0 0.0
  %2762 = vmatpush1.msra.mxu0 0.0
  %2763 = vmatprep.subr.mxu0 0.0
  %2764 = vmatpush1.msra.mxu0 0.0
  %2765 = vmatprep.subr.mxu0 0.0
  %2766 = vmatpush1.msra.mxu0 0.0
  %2767 = vmatprep.subr.mxu0 0.0
  %2768 = vmatpush1.msra.mxu0 0.0
  %2769 = vmatprep.subr.mxu0 0.0
  %2770 = vmatpush1.msra.mxu0 0.0
  %2771 = vmatprep.subr.mxu0 0.0
  %2772 = vmatpush1.msra.mxu0 0.0
  %2773 = vmatprep.subr.mxu0 0.0
  %2774 = vmatpush1.msra.mxu0 0.0
  %2775 = vmatprep.subr.mxu0 0.0
  %2776 = vmatpush1.msra.mxu0 0.0
  %2777 = vmatprep.subr.mxu0 0.0
  %2778 = vmatpush1.msra.mxu0 0.0
  %2779 = vmatprep.subr.mxu0 0.0
  %2780 = vmatpush1.msra.mxu0 0.0
  %2781 = vmatprep.subr.mxu0 0.0
  %2782 = vmatpush1.msra.mxu0 0.0
  %2783 = vmatprep.subr.mxu0 0.0
  %2784 = vmatpush1.msra.mxu0 0.0
  %2785 = vmatprep.subr.mxu0 0.0
  %2786 = vmatpush1.msra.mxu0 0.0
  %2787 = vmatprep.subr.mxu0 0.0
  %2788 = vmatpush1.msra.mxu0 0.0
  %2789 = vmatprep.subr.mxu0 0.0
  %2790 = vmatpush1.msra.mxu0 0.0
  %2791 = vmatprep.subr.mxu0 0.0
  %2792 = vmatpush1.msra.mxu0 0.0
  %2793 = vmatprep.mubr.f32.mxu0 0.0
  %2794 = vmatmul.mubr.f32.gmra.mrb[0].mxu0 %v2571
  %v2795 = vpop.f32.mrb[0].mxu0
  %v2796 = vadd.f32 %v791, %v2795
  %v2797 = vpop.f32.mrb[0].mxu0
  %2798 = vdwg.mxu0
  %v2799 = vmul.f32 %v2650, %v2796
  %v2800 = vadd.f32 %v2569, %v2799
  %v2801 = vtanh.pop %v2800
  %v2802 = vsub.f32 1.0, %v2728
  %v2803 = vmul.f32 %v2802, %v2801
  %v2804 = vmul.f32 %v2728, %v2325
  %v2805 = vadd.f32 %v2803, %v2804
  %v2806 = vld [vmem:[#allocation5 + $0x6] sm:$0x3]
  %v2807 = vld [vmem:[#allocation6 + $0x6] sm:$0x3]
  %v2808 = vld [vmem:[#allocation7 + $0x6] sm:$0x3]
  %v2810 = vsel %vm134, %v2564, 0
  %2812 = vmatprep.subr.mxu0 0.0
  %2813 = vmatpush1.msra.mxu0 %v589
  %2814 = vmatprep.subr.mxu0 0.0
  %2815 = vmatpush1.msra.mxu0 %v590
  %2816 = vmatprep.subr.mxu0 0.0
  %2817 = vmatpush1.msra.mxu0 %v591
  %2818 = vmatprep.subr.mxu0 0.0
  %2819 = vmatpush1.msra.mxu0 %v592
  %2820 = vmatprep.subr.mxu0 0.0
  %2821 = vmatpush1.msra.mxu0 0.0
  %2822 = vmatprep.subr.mxu0 0.0
  %2823 = vmatpush1.msra.mxu0 0.0
  %2824 = vmatprep.subr.mxu0 0.0
  %2825 = vmatpush1.msra.mxu0 0.0
  %2826 = vmatprep.subr.mxu0 0.0
  %2827 = vmatpush1.msra.mxu0 0.0
  %2828 = vmatprep.subr.mxu0 0.0
  %2829 = vmatpush1.msra.mxu0 0.0
  %2830 = vmatprep.subr.mxu0 0.0
  %2831 = vmatpush1.msra.mxu0 0.0
  %2832 = vmatprep.subr.mxu0 0.0
  %2833 = vmatpush1.msra.mxu0 0.0
  %2834 = vmatprep.subr.mxu0 0.0
  %2835 = vmatpush1.msra.mxu0 0.0
  %2836 = vmatprep.subr.mxu0 0.0
  %2837 = vmatpush1.msra.mxu0 0.0
  %2838 = vmatprep.subr.mxu0 0.0
  %2839 = vmatpush1.msra.mxu0 0.0
  %2840 = vmatprep.subr.mxu0 0.0
  %2841 = vmatpush1.msra.mxu0 0.0
  %2842 = vmatprep.subr.mxu0 0.0
  %2843 = vmatpush1.msra.mxu0 0.0
  %2844 = vmatprep.subr.mxu0 0.0
  %2845 = vmatpush1.msra.mxu0 0.0
  %2846 = vmatprep.subr.mxu0 0.0
  %2847 = vmatpush1.msra.mxu0 0.0
  %2848 = vmatprep.subr.mxu0 0.0
  %2849 = vmatpush1.msra.mxu0 0.0
  %2850 = vmatprep.subr.mxu0 0.0
  %2851 = vmatpush1.msra.mxu0 0.0
  %2852 = vmatprep.subr.mxu0 0.0
  %2853 = vmatpush1.msra.mxu0 0.0
  %2854 = vmatprep.subr.mxu0 0.0
  %2855 = vmatpush1.msra.mxu0 0.0
  %2856 = vmatprep.subr.mxu0 0.0
  %2857 = vmatpush1.msra.mxu0 0.0
  %2858 = vmatprep.subr.mxu0 0.0
  %2859 = vmatpush1.msra.mxu0 0.0
  %2860 = vmatprep.subr.mxu0 0.0
  %2861 = vmatpush1.msra.mxu0 0.0
  %2862 = vmatprep.subr.mxu0 0.0
  %2863 = vmatpush1.msra.mxu0 0.0
  %2864 = vmatprep.subr.mxu0 0.0
  %2865 = vmatpush1.msra.mxu0 0.0
  %2866 = vmatprep.subr.mxu0 0.0
  %2867 = vmatpush1.msra.mxu0 0.0
  %2868 = vmatprep.subr.mxu0 0.0
  %2869 = vmatpush1.msra.mxu0 0.0
  %2870 = vmatprep.subr.mxu0 0.0
  %2871 = vmatpush1.msra.mxu0 0.0
  %2872 = vmatprep.subr.mxu0 0.0
  %2873 = vmatpush1.msra.mxu0 0.0
  %2874 = vmatprep.subr.mxu0 0.0
  %2875 = vmatpush1.msra.mxu0 0.0
  %2876 = vmatprep.mubr.f32.mxu0 0.0
  %2877 = vmatmul.mubr.f32.gmra.mrb[0].mxu0 %v2810
  %v2878 = vpop.f32.mrb[0].mxu0
  %v2879 = vadd.f32 0.0, %v2878
  %v2880 = vpop.f32.mrb[0].mxu0
  %2881 = vdwg.mxu0
  %v2882 = vadd.f32 %v2806, %v2879
  %v2883 = vadd.f32 %v2882, %v948
  %v2884 = vxor.u32 %v2883, 2147483648
  %v2885 = vmul.f32 %v2884, 1.442695
  %v2886 = vpow.pop %v2885
  %v2887 = vadd.f32 %v2886, 1.0
  %v2888 = vrcp.pop %v2887
  %v2889 = vmul.f32 1.0, %v2888
  %2890 = vmatprep.subr.mxu0 0.0
  %2891 = vmatpush1.msra.mxu0 %v594
  %2892 = vmatprep.subr.mxu0 0.0
  %2893 = vmatpush1.msra.mxu0 %v595
  %2894 = vmatprep.subr.mxu0 0.0
  %2895 = vmatpush1.msra.mxu0 %v596
  %2896 = vmatprep.subr.mxu0 0.0
  %2897 = vmatpush1.msra.mxu0 %v597
  %2898 = vmatprep.subr.mxu0 0.0
  %2899 = vmatpush1.msra.mxu0 0.0
  %2900 = vmatprep.subr.mxu0 0.0
  %2901 = vmatpush1.msra.mxu0 0.0
  %2902 = vmatprep.subr.mxu0 0.0
  %2903 = vmatpush1.msra.mxu0 0.0
  %2904 = vmatprep.subr.mxu0 0.0
  %2905 = vmatpush1.msra.mxu0 0.0
  %2906 = vmatprep.subr.mxu0 0.0
  %2907 = vmatpush1.msra.mxu0 0.0
  %2908 = vmatprep.subr.mxu0 0.0
  %2909 = vmatpush1.msra.mxu0 0.0
  %2910 = vmatprep.subr.mxu0 0.0
  %2911 = vmatpush1.msra.mxu0 0.0
  %2912 = vmatprep.subr.mxu0 0.0
  %2913 = vmatpush1.msra.mxu0 0.0
  %2914 = vmatprep.subr.mxu0 0.0
  %2915 = vmatpush1.msra.mxu0 0.0
  %2916 = vmatprep.subr.mxu0 0.0
  %2917 = vmatpush1.msra.mxu0 0.0
  %2918 = vmatprep.subr.mxu0 0.0
  %2919 = vmatpush1.msra.mxu0 0.0
  %2920 = vmatprep.subr.mxu0 0.0
  %2921 = vmatpush1.msra.mxu0 0.0
  %2922 = vmatprep.subr.mxu0 0.0
  %2923 = vmatpush1.msra.mxu0 0.0
  %2924 = vmatprep.subr.mxu0 0.0
  %2925 = vmatpush1.msra.mxu0 0.0
  %2926 = vmatprep.subr.mxu0 0.0
  %2927 = vmatpush1.msra.mxu0 0.0
  %2928 = vmatprep.subr.mxu0 0.0
  %2929 = vmatpush1.msra.mxu0 0.0
  %2930 = vmatprep.subr.mxu0 0.0
  %2931 = vmatpush1.msra.mxu0 0.0
  %2932 = vmatprep.subr.mxu0 0.0
  %2933 = vmatpush1.msra.mxu0 0.0
  %2934 = vmatprep.subr.mxu0 0.0
  %2935 = vmatpush1.msra.mxu0 0.0
  %2936 = vmatprep.subr.mxu0 0.0
  %2937 = vmatpush1.msra.mxu0 0.0
  %2938 = vmatprep.subr.mxu0 0.0
  %2939 = vmatpush1.msra.mxu0 0.0
  %2940 = vmatprep.subr.mxu0 0.0
  %2941 = vmatpush1.msra.mxu0 0.0
  %2942 = vmatprep.subr.mxu0 0.0
  %2943 = vmatpush1.msra.mxu0 0.0
  %2944 = vmatprep.subr.mxu0 0.0
  %2945 = vmatpush1.msra.mxu0 0.0
  %2946 = vmatprep.subr.mxu0 0.0
  %2947 = vmatpush1.msra.mxu0 0.0
  %2948 = vmatprep.subr.mxu0 0.0
  %2949 = vmatpush1.msra.mxu0 0.0
  %2950 = vmatprep.subr.mxu0 0.0
  %2951 = vmatpush1.msra.mxu0 0.0
  %2952 = vmatprep.subr.mxu0 0.0
  %2953 = vmatpush1.msra.mxu0 0.0
  %2954 = vmatprep.mubr.f32.mxu0 0.0
  %2955 = vmatmul.mubr.f32.gmra.mrb[0].mxu0 %v2810
  %v2956 = vpop.f32.mrb[0].mxu0
  %v2957 = vadd.f32 0.0, %v2956
  %v2958 = vpop.f32.mrb[0].mxu0
  %2959 = vdwg.mxu0
  %v2960 = vadd.f32 %v2807, %v2957
  %v2961 = vadd.f32 %v2960, %v1032
  %v2962 = vxor.u32 %v2961, 2147483648
  %v2963 = vmul.f32 %v2962, 1.442695
  %v2964 = vpow.pop %v2963
  %v2965 = vadd.f32 %v2964, 1.0
  %v2966 = vrcp.pop %v2965
  %v2967 = vmul.f32 1.0, %v2966
  %2968 = vmatprep.subr.mxu0 0.0
  %2969 = vmatpush1.msra.mxu0 %v599
  %2970 = vmatprep.subr.mxu0 0.0
  %2971 = vmatpush1.msra.mxu0 %v600
  %2972 = vmatprep.subr.mxu0 0.0
  %2973 = vmatpush1.msra.mxu0 %v601
  %2974 = vmatprep.subr.mxu0 0.0
  %2975 = vmatpush1.msra.mxu0 %v602
  %2976 = vmatprep.subr.mxu0 0.0
  %2977 = vmatpush1.msra.mxu0 0.0
  %2978 = vmatprep.subr.mxu0 0.0
  %2979 = vmatpush1.msra.mxu0 0.0
  %2980 = vmatprep.subr.mxu0 0.0
  %2981 = vmatpush1.msra.mxu0 0.0
  %2982 = vmatprep.subr.mxu0 0.0
  %2983 = vmatpush1.msra.mxu0 0.0
  %2984 = vmatprep.subr.mxu0 0.0
  %2985 = vmatpush1.msra.mxu0 0.0
  %2986 = vmatprep.subr.mxu0 0.0
  %2987 = vmatpush1.msra.mxu0 0.0
  %2988 = vmatprep.subr.mxu0 0.0
  %2989 = vmatpush1.msra.mxu0 0.0
  %2990 = vmatprep.subr.mxu0 0.0
  %2991 = vmatpush1.msra.mxu0 0.0
  %2992 = vmatprep.subr.mxu0 0.0
  %2993 = vmatpush1.msra.mxu0 0.0
  %2994 = vmatprep.subr.mxu0 0.0
  %2995 = vmatpush1.msra.mxu0 0.0
  %2996 = vmatprep.subr.mxu0 0.0
  %2997 = vmatpush1.msra.mxu0 0.0
  %2998 = vmatprep.subr.mxu0 0.0
  %2999 = vmatpush1.msra.mxu0 0.0
  %3000 = vmatprep.subr.mxu0 0.0
  %3001 = vmatpush1.msra.mxu0 0.0
  %3002 = vmatprep.subr.mxu0 0.0
  %3003 = vmatpush1.msra.mxu0 0.0
  %3004 = vmatprep.subr.mxu0 0.0
  %3005 = vmatpush1.msra.mxu0 0.0
  %3006 = vmatprep.subr.mxu0 0.0
  %3007 = vmatpush1.msra.mxu0 0.0
  %3008 = vmatprep.subr.mxu0 0.0
  %3009 = vmatpush1.msra.mxu0 0.0
  %3010 = vmatprep.subr.mxu0 0.0
  %3011 = vmatpush1.msra.mxu0 0.0
  %3012 = vmatprep.subr.mxu0 0.0
  %3013 = vmatpush1.msra.mxu0 0.0
  %3014 = vmatprep.subr.mxu0 0.0
  %3015 = vmatpush1.msra.mxu0 0.0
  %3016 = vmatprep.subr.mxu0 0.0
  %3017 = vmatpush1.msra.mxu0 0.0
  %3018 = vmatprep.subr.mxu0 0.0
  %3019 = vmatpush1.msra.mxu0 0.0
  %3020 = vmatprep.subr.mxu0 0.0
  %3021 = vmatpush1.msra.mxu0 0.0
  %3022 = vmatprep.subr.mxu0 0.0
  %3023 = vmatpush1.msra.mxu0 0.0
  %3024 = vmatprep.subr.mxu0 0.0
  %3025 = vmatpush1.msra.mxu0 0.0
  %3026 = vmatprep.subr.mxu0 0.0
  %3027 = vmatpush1.msra.mxu0 0.0
  %3028 = vmatprep.subr.mxu0 0.0
  %3029 = vmatpush1.msra.mxu0 0.0
  %3030 = vmatprep.subr.mxu0 0.0
  %3031 = vmatpush1.msra.mxu0 0.0
  %3032 = vmatprep.mubr.f32.mxu0 0.0
  %3033 = vmatmul.mubr.f32.gmra.mrb[0].mxu0 %v2810
  %v3034 = vpop.f32.mrb[0].mxu0
  %v3035 = vadd.f32 %v1045, %v3034
  %v3036 = vpop.f32.mrb[0].mxu0
  %3037 = vdwg.mxu0
  %v3038 = vmul.f32 %v2889, %v3035
  %v3039 = vadd.f32 %v2808, %v3038
  %v3040 = vtanh.pop %v3039
  %v3041 = vsub.f32 1.0, %v2967
  %v3042 = vmul.f32 %v3041, %v3040
  %v3043 = vmul.f32 %v2967, %v2564
  %v3044 = vadd.f32 %v3042, %v3043
  %3045 = vst.msk [vmem:[#allocation8 + $0x8] sm:$0x3] %vm1124, %v2805
  %3046 = vst.msk [vmem:[#allocation9 + $0x6] sm:$0x3] %vm1124, %v3044
  %v3047 = vld [vmem:[#allocation2 + $0xa] sm:$0x3]
  %v3048 = vld [vmem:[#allocation3 + $0xa] sm:$0x3]
  %v3049 = vld [vmem:[#allocation4 + $0xa] sm:$0x3]
  %v3051 = vsel %vm134, %v2805, 0
  %3053 = vmatprep.subr.mxu0 0.0
  %3054 = vmatpush1.msra.mxu0 %v575
  %3055 = vmatprep.subr.mxu0 0.0
  %3056 = vmatpush1.msra.mxu0 %v576
  %3057 = vmatprep.subr.mxu0 0.0
  %3058 = vmatpush1.msra.mxu0 %v577
  %3059 = vmatprep.subr.mxu0 0.0
  %3060 = vmatpush1.msra.mxu0 %v578
  %3061 = vmatprep.subr.mxu0 0.0
  %3062 = vmatpush1.msra.mxu0 0.0
  %3063 = vmatprep.subr.mxu0 0.0
  %3064 = vmatpush1.msra.mxu0 0.0
  %3065 = vmatprep.subr.mxu0 0.0
  %3066 = vmatpush1.msra.mxu0 0.0
  %3067 = vmatprep.subr.mxu0 0.0
  %3068 = vmatpush1.msra.mxu0 0.0
  %3069 = vmatprep.subr.mxu0 0.0
  %3070 = vmatpush1.msra.mxu0 0.0
  %3071 = vmatprep.subr.mxu0 0.0
  %3072 = vmatpush1.msra.mxu0 0.0
  %3073 = vmatprep.subr.mxu0 0.0
  %3074 = vmatpush1.msra.mxu0 0.0
  %3075 = vmatprep.subr.mxu0 0.0
  %3076 = vmatpush1.msra.mxu0 0.0
  %3077 = vmatprep.subr.mxu0 0.0
  %3078 = vmatpush1.msra.mxu0 0.0
  %3079 = vmatprep.subr.mxu0 0.0
  %3080 = vmatpush1.msra.mxu0 0.0
  %3081 = vmatprep.subr.mxu0 0.0
  %3082 = vmatpush1.msra.mxu0 0.0
  %3083 = vmatprep.subr.mxu0 0.0
  %3084 = vmatpush1.msra.mxu0 0.0
  %3085 = vmatprep.subr.mxu0 0.0
  %3086 = vmatpush1.msra.mxu0 0.0
  %3087 = vmatprep.subr.mxu0 0.0
  %3088 = vmatpush1.msra.mxu0 0.0
  %3089 = vmatprep.subr.mxu0 0.0
  %3090 = vmatpush1.msra.mxu0 0.0
  %3091 = vmatprep.subr.mxu0 0.0
  %3092 = vmatpush1.msra.mxu0 0.0
  %3093 = vmatprep.subr.mxu0 0.0
  %3094 = vmatpush1.msra.mxu0 0.0
  %3095 = vmatprep.subr.mxu0 0.0
  %3096 = vmatpush1.msra.mxu0 0.0
  %3097 = vmatprep.subr.mxu0 0.0
  %3098 = vmatpush1.msra.mxu0 0.0
  %3099 = vmatprep.subr.mxu0 0.0
  %3100 = vmatpush1.msra.mxu0 0.0
  %3101 = vmatprep.subr.mxu0 0.0
  %3102 = vmatpush1.msra.mxu0 0.0
  %3103 = vmatprep.subr.mxu0 0.0
  %3104 = vmatpush1.msra.mxu0 0.0
  %3105 = vmatprep.subr.mxu0 0.0
  %3106 = vmatpush1.msra.mxu0 0.0
  %3107 = vmatprep.subr.mxu0 0.0
  %3108 = vmatpush1.msra.mxu0 0.0
  %3109 = vmatprep.subr.mxu0 0.0
  %3110 = vmatpush1.msra.mxu0 0.0
  %3111 = vmatprep.subr.mxu0 0.0
  %3112 = vmatpush1.msra.mxu0 0.0
  %3113 = vmatprep.subr.mxu0 0.0
  %3114 = vmatpush1.msra.mxu0 0.0
  %3115 = vmatprep.subr.mxu0 0.0
  %3116 = vmatpush1.msra.mxu0 0.0
  %3117 = vmatprep.mubr.f32.mxu0 0.0
  %3118 = vmatmul.mubr.f32.gmra.mrb[0].mxu0 %v3051
  %v3119 = vpop.f32.mrb[0].mxu0
  %v3120 = vadd.f32 0.0, %v3119
  %v3121 = vpop.f32.mrb[0].mxu0
  %3122 = vdwg.mxu0
  %v3123 = vadd.f32 %v3047, %v3120
  %v3124 = vadd.f32 %v3123, %v694
  %v3125 = vxor.u32 %v3124, 2147483648
  %v3126 = vmul.f32 %v3125, 1.442695
  %v3127 = vpow.pop %v3126
  %v3128 = vadd.f32 %v3127, 1.0
  %v3129 = vrcp.pop %v3128
  %v3130 = vmul.f32 1.0, %v3129
  %3131 = vmatprep.subr.mxu0 0.0
  %3132 = vmatpush1.msra.mxu0 %v580
  %3133 = vmatprep.subr.mxu0 0.0
  %3134 = vmatpush1.msra.mxu0 %v581
  %3135 = vmatprep.subr.mxu0 0.0
  %3136 = vmatpush1.msra.mxu0 %v582
  %3137 = vmatprep.subr.mxu0 0.0
  %3138 = vmatpush1.msra.mxu0 %v583
  %3139 = vmatprep.subr.mxu0 0.0
  %3140 = vmatpush1.msra.mxu0 0.0
  %3141 = vmatprep.subr.mxu0 0.0
  %3142 = vmatpush1.msra.mxu0 0.0
  %3143 = vmatprep.subr.mxu0 0.0
  %3144 = vmatpush1.msra.mxu0 0.0
  %3145 = vmatprep.subr.mxu0 0.0
  %3146 = vmatpush1.msra.mxu0 0.0
  %3147 = vmatprep.subr.mxu0 0.0
  %3148 = vmatpush1.msra.mxu0 0.0
  %3149 = vmatprep.subr.mxu0 0.0
  %3150 = vmatpush1.msra.mxu0 0.0
  %3151 = vmatprep.subr.mxu0 0.0
  %3152 = vmatpush1.msra.mxu0 0.0
  %3153 = vmatprep.subr.mxu0 0.0
  %3154 = vmatpush1.msra.mxu0 0.0
  %3155 = vmatprep.subr.mxu0 0.0
  %3156 = vmatpush1.msra.mxu0 0.0
  %3157 = vmatprep.subr.mxu0 0.0
  %3158 = vmatpush1.msra.mxu0 0.0
  %3159 = vmatprep.subr.mxu0 0.0
  %3160 = vmatpush1.msra.mxu0 0.0
  %3161 = vmatprep.subr.mxu0 0.0
  %3162 = vmatpush1.msra.mxu0 0.0
  %3163 = vmatprep.subr.mxu0 0.0
  %3164 = vmatpush1.msra.mxu0 0.0
  %3165 = vmatprep.subr.mxu0 0.0
  %3166 = vmatpush1.msra.mxu0 0.0
  %3167 = vmatprep.subr.mxu0 0.0
  %3168 = vmatpush1.msra.mxu0 0.0
  %3169 = vmatprep.subr.mxu0 0.0
  %3170 = vmatpush1.msra.mxu0 0.0
  %3171 = vmatprep.subr.mxu0 0.0
  %3172 = vmatpush1.msra.mxu0 0.0
  %3173 = vmatprep.subr.mxu0 0.0
  %3174 = vmatpush1.msra.mxu0 0.0
  %3175 = vmatprep.subr.mxu0 0.0
  %3176 = vmatpush1.msra.mxu0 0.0
  %3177 = vmatprep.subr.mxu0 0.0
  %3178 = vmatpush1.msra.mxu0 0.0
  %3179 = vmatprep.subr.mxu0 0.0
  %3180 = vmatpush1.msra.mxu0 0.0
  %3181 = vmatprep.subr.mxu0 0.0
  %3182 = vmatpush1.msra.mxu0 0.0
  %3183 = vmatprep.subr.mxu0 0.0
  %3184 = vmatpush1.msra.mxu0 0.0
  %3185 = vmatprep.subr.mxu0 0.0
  %3186 = vmatpush1.msra.mxu0 0.0
  %3187 = vmatprep.subr.mxu0 0.0
  %3188 = vmatpush1.msra.mxu0 0.0
  %3189 = vmatprep.subr.mxu0 0.0
  %3190 = vmatpush1.msra.mxu0 0.0
  %3191 = vmatprep.subr.mxu0 0.0
  %3192 = vmatpush1.msra.mxu0 0.0
  %3193 = vmatprep.subr.mxu0 0.0
  %3194 = vmatpush1.msra.mxu0 0.0
  %3195 = vmatprep.mubr.f32.mxu0 0.0
  %3196 = vmatmul.mubr.f32.gmra.mrb[0].mxu0 %v3051
  %v3197 = vpop.f32.mrb[0].mxu0
  %v3198 = vadd.f32 0.0, %v3197
  %v3199 = vpop.f32.mrb[0].mxu0
  %3200 = vdwg.mxu0
  %v3201 = vadd.f32 %v3048, %v3198
  %v3202 = vadd.f32 %v3201, %v778
  %v3203 = vxor.u32 %v3202, 2147483648
  %v3204 = vmul.f32 %v3203, 1.442695
  %v3205 = vpow.pop %v3204
  %v3206 = vadd.f32 %v3205, 1.0
  %v3207 = vrcp.pop %v3206
  %v3208 = vmul.f32 1.0, %v3207
  %3209 = vmatprep.subr.mxu0 0.0
  %3210 = vmatpush1.msra.mxu0 %v585
  %3211 = vmatprep.subr.mxu0 0.0
  %3212 = vmatpush1.msra.mxu0 %v586
  %3213 = vmatprep.subr.mxu0 0.0
  %3214 = vmatpush1.msra.mxu0 %v587
  %3215 = vmatprep.subr.mxu0 0.0
  %3216 = vmatpush1.msra.mxu0 %v588
  %3217 = vmatprep.subr.mxu0 0.0
  %3218 = vmatpush1.msra.mxu0 0.0
  %3219 = vmatprep.subr.mxu0 0.0
  %3220 = vmatpush1.msra.mxu0 0.0
  %3221 = vmatprep.subr.mxu0 0.0
  %3222 = vmatpush1.msra.mxu0 0.0
  %3223 = vmatprep.subr.mxu0 0.0
  %3224 = vmatpush1.msra.mxu0 0.0
  %3225 = vmatprep.subr.mxu0 0.0
  %3226 = vmatpush1.msra.mxu0 0.0
  %3227 = vmatprep.subr.mxu0 0.0
  %3228 = vmatpush1.msra.mxu0 0.0
  %3229 = vmatprep.subr.mxu0 0.0
  %3230 = vmatpush1.msra.mxu0 0.0
  %3231 = vmatprep.subr.mxu0 0.0
  %3232 = vmatpush1.msra.mxu0 0.0
  %3233 = vmatprep.subr.mxu0 0.0
  %3234 = vmatpush1.msra.mxu0 0.0
  %3235 = vmatprep.subr.mxu0 0.0
  %3236 = vmatpush1.msra.mxu0 0.0
  %3237 = vmatprep.subr.mxu0 0.0
  %3238 = vmatpush1.msra.mxu0 0.0
  %3239 = vmatprep.subr.mxu0 0.0
  %3240 = vmatpush1.msra.mxu0 0.0
  %3241 = vmatprep.subr.mxu0 0.0
  %3242 = vmatpush1.msra.mxu0 0.0
  %3243 = vmatprep.subr.mxu0 0.0
  %3244 = vmatpush1.msra.mxu0 0.0
  %3245 = vmatprep.subr.mxu0 0.0
  %3246 = vmatpush1.msra.mxu0 0.0
  %3247 = vmatprep.subr.mxu0 0.0
  %3248 = vmatpush1.msra.mxu0 0.0
  %3249 = vmatprep.subr.mxu0 0.0
  %3250 = vmatpush1.msra.mxu0 0.0
  %3251 = vmatprep.subr.mxu0 0.0
  %3252 = vmatpush1.msra.mxu0 0.0
  %3253 = vmatprep.subr.mxu0 0.0
  %3254 = vmatpush1.msra.mxu0 0.0
  %3255 = vmatprep.subr.mxu0 0.0
  %3256 = vmatpush1.msra.mxu0 0.0
  %3257 = vmatprep.subr.mxu0 0.0
  %3258 = vmatpush1.msra.mxu0 0.0
  %3259 = vmatprep.subr.mxu0 0.0
  %3260 = vmatpush1.msra.mxu0 0.0
  %3261 = vmatprep.subr.mxu0 0.0
  %3262 = vmatpush1.msra.mxu0 0.0
  %3263 = vmatprep.subr.mxu0 0.0
  %3264 = vmatpush1.msra.mxu0 0.0
  %3265 = vmatprep.subr.mxu0 0.0
  %3266 = vmatpush1.msra.mxu0 0.0
  %3267 = vmatprep.subr.mxu0 0.0
  %3268 = vmatpush1.msra.mxu0 0.0
  %3269 = vmatprep.subr.mxu0 0.0
  %3270 = vmatpush1.msra.mxu0 0.0
  %3271 = vmatprep.subr.mxu0 0.0
  %3272 = vmatpush1.msra.mxu0 0.0
  %3273 = vmatprep.mubr.f32.mxu0 0.0
  %3274 = vmatmul.mubr.f32.gmra.mrb[0].mxu0 %v3051
  %v3275 = vpop.f32.mrb[0].mxu0
  %v3276 = vadd.f32 %v791, %v3275
  %v3277 = vpop.f32.mrb[0].mxu0
  %3278 = vdwg.mxu0
  %v3279 = vmul.f32 %v3130, %v3276
  %v3280 = vadd.f32 %v3049, %v3279
  %v3281 = vtanh.pop %v3280
  %v3282 = vsub.f32 1.0, %v3208
  %v3283 = vmul.f32 %v3282, %v3281
  %v3284 = vmul.f32 %v3208, %v2805
  %v3285 = vadd.f32 %v3283, %v3284
  %v3286 = vld [vmem:[#allocation5 + $0x4] sm:$0x3]
  %v3287 = vld [vmem:[#allocation6 + $0x4] sm:$0x3]
  %v3288 = vld [vmem:[#allocation7 + $0x4] sm:$0x3]
  %v3290 = vsel %vm134, %v3044, 0
  %3292 = vmatprep.subr.mxu0 0.0
  %3293 = vmatpush1.msra.mxu0 %v589
  %3294 = vmatprep.subr.mxu0 0.0
  %3295 = vmatpush1.msra.mxu0 %v590
  %3296 = vmatprep.subr.mxu0 0.0
  %3297 = vmatpush1.msra.mxu0 %v591
  %3298 = vmatprep.subr.mxu0 0.0
  %3299 = vmatpush1.msra.mxu0 %v592
  %3300 = vmatprep.subr.mxu0 0.0
  %3301 = vmatpush1.msra.mxu0 0.0
  %3302 = vmatprep.subr.mxu0 0.0
  %3303 = vmatpush1.msra.mxu0 0.0
  %3304 = vmatprep.subr.mxu0 0.0
  %3305 = vmatpush1.msra.mxu0 0.0
  %3306 = vmatprep.subr.mxu0 0.0
  %3307 = vmatpush1.msra.mxu0 0.0
  %3308 = vmatprep.subr.mxu0 0.0
  %3309 = vmatpush1.msra.mxu0 0.0
  %3310 = vmatprep.subr.mxu0 0.0
  %3311 = vmatpush1.msra.mxu0 0.0
  %3312 = vmatprep.subr.mxu0 0.0
  %3313 = vmatpush1.msra.mxu0 0.0
  %3314 = vmatprep.subr.mxu0 0.0
  %3315 = vmatpush1.msra.mxu0 0.0
  %3316 = vmatprep.subr.mxu0 0.0
  %3317 = vmatpush1.msra.mxu0 0.0
  %3318 = vmatprep.subr.mxu0 0.0
  %3319 = vmatpush1.msra.mxu0 0.0
  %3320 = vmatprep.subr.mxu0 0.0
  %3321 = vmatpush1.msra.mxu0 0.0
  %3322 = vmatprep.subr.mxu0 0.0
  %3323 = vmatpush1.msra.mxu0 0.0
  %3324 = vmatprep.subr.mxu0 0.0
  %3325 = vmatpush1.msra.mxu0 0.0
  %3326 = vmatprep.subr.mxu0 0.0
  %3327 = vmatpush1.msra.mxu0 0.0
  %3328 = vmatprep.subr.mxu0 0.0
  %3329 = vmatpush1.msra.mxu0 0.0
  %3330 = vmatprep.subr.mxu0 0.0
  %3331 = vmatpush1.msra.mxu0 0.0
  %3332 = vmatprep.subr.mxu0 0.0
  %3333 = vmatpush1.msra.mxu0 0.0
  %3334 = vmatprep.subr.mxu0 0.0
  %3335 = vmatpush1.msra.mxu0 0.0
  %3336 = vmatprep.subr.mxu0 0.0
  %3337 = vmatpush1.msra.mxu0 0.0
  %3338 = vmatprep.subr.mxu0 0.0
  %3339 = vmatpush1.msra.mxu0 0.0
  %3340 = vmatprep.subr.mxu0 0.0
  %3341 = vmatpush1.msra.mxu0 0.0
  %3342 = vmatprep.subr.mxu0 0.0
  %3343 = vmatpush1.msra.mxu0 0.0
  %3344 = vmatprep.subr.mxu0 0.0
  %3345 = vmatpush1.msra.mxu0 0.0
  %3346 = vmatprep.subr.mxu0 0.0
  %3347 = vmatpush1.msra.mxu0 0.0
  %3348 = vmatprep.subr.mxu0 0.0
  %3349 = vmatpush1.msra.mxu0 0.0
  %3350 = vmatprep.subr.mxu0 0.0
  %3351 = vmatpush1.msra.mxu0 0.0
  %3352 = vmatprep.subr.mxu0 0.0
  %3353 = vmatpush1.msra.mxu0 0.0
  %3354 = vmatprep.subr.mxu0 0.0
  %3355 = vmatpush1.msra.mxu0 0.0
  %3356 = vmatprep.mubr.f32.mxu0 0.0
  %3357 = vmatmul.mubr.f32.gmra.mrb[0].mxu0 %v3290
  %v3358 = vpop.f32.mrb[0].mxu0
  %v3359 = vadd.f32 0.0, %v3358
  %v3360 = vpop.f32.mrb[0].mxu0
  %3361 = vdwg.mxu0
  %v3362 = vadd.f32 %v3286, %v3359
  %v3363 = vadd.f32 %v3362, %v948
  %v3364 = vxor.u32 %v3363, 2147483648
  %v3365 = vmul.f32 %v3364, 1.442695
  %v3366 = vpow.pop %v3365
  %v3367 = vadd.f32 %v3366, 1.0
  %v3368 = vrcp.pop %v3367
  %v3369 = vmul.f32 1.0, %v3368
  %3370 = vmatprep.subr.mxu0 0.0
  %3371 = vmatpush1.msra.mxu0 %v594
  %3372 = vmatprep.subr.mxu0 0.0
  %3373 = vmatpush1.msra.mxu0 %v595
  %3374 = vmatprep.subr.mxu0 0.0
  %3375 = vmatpush1.msra.mxu0 %v596
  %3376 = vmatprep.subr.mxu0 0.0
  %3377 = vmatpush1.msra.mxu0 %v597
  %3378 = vmatprep.subr.mxu0 0.0
  %3379 = vmatpush1.msra.mxu0 0.0
  %3380 = vmatprep.subr.mxu0 0.0
  %3381 = vmatpush1.msra.mxu0 0.0
  %3382 = vmatprep.subr.mxu0 0.0
  %3383 = vmatpush1.msra.mxu0 0.0
  %3384 = vmatprep.subr.mxu0 0.0
  %3385 = vmatpush1.msra.mxu0 0.0
  %3386 = vmatprep.subr.mxu0 0.0
  %3387 = vmatpush1.msra.mxu0 0.0
  %3388 = vmatprep.subr.mxu0 0.0
  %3389 = vmatpush1.msra.mxu0 0.0
  %3390 = vmatprep.subr.mxu0 0.0
  %3391 = vmatpush1.msra.mxu0 0.0
  %3392 = vmatprep.subr.mxu0 0.0
  %3393 = vmatpush1.msra.mxu0 0.0
  %3394 = vmatprep.subr.mxu0 0.0
  %3395 = vmatpush1.msra.mxu0 0.0
  %3396 = vmatprep.subr.mxu0 0.0
  %3397 = vmatpush1.msra.mxu0 0.0
  %3398 = vmatprep.subr.mxu0 0.0
  %3399 = vmatpush1.msra.mxu0 0.0
  %3400 = vmatprep.subr.mxu0 0.0
  %3401 = vmatpush1.msra.mxu0 0.0
  %3402 = vmatprep.subr.mxu0 0.0
  %3403 = vmatpush1.msra.mxu0 0.0
  %3404 = vmatprep.subr.mxu0 0.0
  %3405 = vmatpush1.msra.mxu0 0.0
  %3406 = vmatprep.subr.mxu0 0.0
  %3407 = vmatpush1.msra.mxu0 0.0
  %3408 = vmatprep.subr.mxu0 0.0
  %3409 = vmatpush1.msra.mxu0 0.0
  %3410 = vmatprep.subr.mxu0 0.0
  %3411 = vmatpush1.msra.mxu0 0.0
  %3412 = vmatprep.subr.mxu0 0.0
  %3413 = vmatpush1.msra.mxu0 0.0
  %3414 = vmatprep.subr.mxu0 0.0
  %3415 = vmatpush1.msra.mxu0 0.0
  %3416 = vmatprep.subr.mxu0 0.0
  %3417 = vmatpush1.msra.mxu0 0.0
  %3418 = vmatprep.subr.mxu0 0.0
  %3419 = vmatpush1.msra.mxu0 0.0
  %3420 = vmatprep.subr.mxu0 0.0
  %3421 = vmatpush1.msra.mxu0 0.0
  %3422 = vmatprep.subr.mxu0 0.0
  %3423 = vmatpush1.msra.mxu0 0.0
  %3424 = vmatprep.subr.mxu0 0.0
  %3425 = vmatpush1.msra.mxu0 0.0
  %3426 = vmatprep.subr.mxu0 0.0
  %3427 = vmatpush1.msra.mxu0 0.0
  %3428 = vmatprep.subr.mxu0 0.0
  %3429 = vmatpush1.msra.mxu0 0.0
  %3430 = vmatprep.subr.mxu0 0.0
  %3431 = vmatpush1.msra.mxu0 0.0
  %3432 = vmatprep.subr.mxu0 0.0
  %3433 = vmatpush1.msra.mxu0 0.0
  %3434 = vmatprep.mubr.f32.mxu0 0.0
  %3435 = vmatmul.mubr.f32.gmra.mrb[0].mxu0 %v3290
  %v3436 = vpop.f32.mrb[0].mxu0
  %v3437 = vadd.f32 0.0, %v3436
  %v3438 = vpop.f32.mrb[0].mxu0
  %3439 = vdwg.mxu0
  %v3440 = vadd.f32 %v3287, %v3437
  %v3441 = vadd.f32 %v3440, %v1032
  %v3442 = vxor.u32 %v3441, 2147483648
  %v3443 = vmul.f32 %v3442, 1.442695
  %v3444 = vpow.pop %v3443
  %v3445 = vadd.f32 %v3444, 1.0
  %v3446 = vrcp.pop %v3445
  %v3447 = vmul.f32 1.0, %v3446
  %3448 = vmatprep.subr.mxu0 0.0
  %3449 = vmatpush1.msra.mxu0 %v599
  %3450 = vmatprep.subr.mxu0 0.0
  %3451 = vmatpush1.msra.mxu0 %v600
  %3452 = vmatprep.subr.mxu0 0.0
  %3453 = vmatpush1.msra.mxu0 %v601
  %3454 = vmatprep.subr.mxu0 0.0
  %3455 = vmatpush1.msra.mxu0 %v602
  %3456 = vmatprep.subr.mxu0 0.0
  %3457 = vmatpush1.msra.mxu0 0.0
  %3458 = vmatprep.subr.mxu0 0.0
  %3459 = vmatpush1.msra.mxu0 0.0
  %3460 = vmatprep.subr.mxu0 0.0
  %3461 = vmatpush1.msra.mxu0 0.0
  %3462 = vmatprep.subr.mxu0 0.0
  %3463 = vmatpush1.msra.mxu0 0.0
  %3464 = vmatprep.subr.mxu0 0.0
  %3465 = vmatpush1.msra.mxu0 0.0
  %3466 = vmatprep.subr.mxu0 0.0
  %3467 = vmatpush1.msra.mxu0 0.0
  %3468 = vmatprep.subr.mxu0 0.0
  %3469 = vmatpush1.msra.mxu0 0.0
  %3470 = vmatprep.subr.mxu0 0.0
  %3471 = vmatpush1.msra.mxu0 0.0
  %3472 = vmatprep.subr.mxu0 0.0
  %3473 = vmatpush1.msra.mxu0 0.0
  %3474 = vmatprep.subr.mxu0 0.0
  %3475 = vmatpush1.msra.mxu0 0.0
  %3476 = vmatprep.subr.mxu0 0.0
  %3477 = vmatpush1.msra.mxu0 0.0
  %3478 = vmatprep.subr.mxu0 0.0
  %3479 = vmatpush1.msra.mxu0 0.0
  %3480 = vmatprep.subr.mxu0 0.0
  %3481 = vmatpush1.msra.mxu0 0.0
  %3482 = vmatprep.subr.mxu0 0.0
  %3483 = vmatpush1.msra.mxu0 0.0
  %3484 = vmatprep.subr.mxu0 0.0
  %3485 = vmatpush1.msra.mxu0 0.0
  %3486 = vmatprep.subr.mxu0 0.0
  %3487 = vmatpush1.msra.mxu0 0.0
  %3488 = vmatprep.subr.mxu0 0.0
  %3489 = vmatpush1.msra.mxu0 0.0
  %3490 = vmatprep.subr.mxu0 0.0
  %3491 = vmatpush1.msra.mxu0 0.0
  %3492 = vmatprep.subr.mxu0 0.0
  %3493 = vmatpush1.msra.mxu0 0.0
  %3494 = vmatprep.subr.mxu0 0.0
  %3495 = vmatpush1.msra.mxu0 0.0
  %3496 = vmatprep.subr.mxu0 0.0
  %3497 = vmatpush1.msra.mxu0 0.0
  %3498 = vmatprep.subr.mxu0 0.0
  %3499 = vmatpush1.msra.mxu0 0.0
  %3500 = vmatprep.subr.mxu0 0.0
  %3501 = vmatpush1.msra.mxu0 0.0
  %3502 = vmatprep.subr.mxu0 0.0
  %3503 = vmatpush1.msra.mxu0 0.0
  %3504 = vmatprep.subr.mxu0 0.0
  %3505 = vmatpush1.msra.mxu0 0.0
  %3506 = vmatprep.subr.mxu0 0.0
  %3507 = vmatpush1.msra.mxu0 0.0
  %3508 = vmatprep.subr.mxu0 0.0
  %3509 = vmatpush1.msra.mxu0 0.0
  %3510 = vmatprep.subr.mxu0 0.0
  %3511 = vmatpush1.msra.mxu0 0.0
  %3512 = vmatprep.mubr.f32.mxu0 0.0
  %3513 = vmatmul.mubr.f32.gmra.mrb[0].mxu0 %v3290
  %v3514 = vpop.f32.mrb[0].mxu0
  %v3515 = vadd.f32 %v1045, %v3514
  %v3516 = vpop.f32.mrb[0].mxu0
  %3517 = vdwg.mxu0
  %v3518 = vmul.f32 %v3369, %v3515
  %v3519 = vadd.f32 %v3288, %v3518
  %v3520 = vtanh.pop %v3519
  %v3521 = vsub.f32 1.0, %v3447
  %v3522 = vmul.f32 %v3521, %v3520
  %v3523 = vmul.f32 %v3447, %v3044
  %v3524 = vadd.f32 %v3522, %v3523
  %3525 = vst.msk [vmem:[#allocation8 + $0xa] sm:$0x3] %vm1124, %v3285
  %3526 = vst.msk [vmem:[#allocation9 + $0x4] sm:$0x3] %vm1124, %v3524
  %v3527 = vld [vmem:[#allocation2 + $0xc] sm:$0x3]
  %v3528 = vld [vmem:[#allocation3 + $0xc] sm:$0x3]
  %v3529 = vld [vmem:[#allocation4 + $0xc] sm:$0x3]
  %v3531 = vsel %vm134, %v3285, 0
  %3533 = vmatprep.subr.mxu0 0.0
  %3534 = vmatpush1.msra.mxu0 %v575
  %3535 = vmatprep.subr.mxu0 0.0
  %3536 = vmatpush1.msra.mxu0 %v576
  %3537 = vmatprep.subr.mxu0 0.0
  %3538 = vmatpush1.msra.mxu0 %v577
  %3539 = vmatprep.subr.mxu0 0.0
  %3540 = vmatpush1.msra.mxu0 %v578
  %3541 = vmatprep.subr.mxu0 0.0
  %3542 = vmatpush1.msra.mxu0 0.0
  %3543 = vmatprep.subr.mxu0 0.0
  %3544 = vmatpush1.msra.mxu0 0.0
  %3545 = vmatprep.subr.mxu0 0.0
  %3546 = vmatpush1.msra.mxu0 0.0
  %3547 = vmatprep.subr.mxu0 0.0
  %3548 = vmatpush1.msra.mxu0 0.0
  %3549 = vmatprep.subr.mxu0 0.0
  %3550 = vmatpush1.msra.mxu0 0.0
  %3551 = vmatprep.subr.mxu0 0.0
  %3552 = vmatpush1.msra.mxu0 0.0
  %3553 = vmatprep.subr.mxu0 0.0
  %3554 = vmatpush1.msra.mxu0 0.0
  %3555 = vmatprep.subr.mxu0 0.0
  %3556 = vmatpush1.msra.mxu0 0.0
  %3557 = vmatprep.subr.mxu0 0.0
  %3558 = vmatpush1.msra.mxu0 0.0
  %3559 = vmatprep.subr.mxu0 0.0
  %3560 = vmatpush1.msra.mxu0 0.0
  %3561 = vmatprep.subr.mxu0 0.0
  %3562 = vmatpush1.msra.mxu0 0.0
  %3563 = vmatprep.subr.mxu0 0.0
  %3564 = vmatpush1.msra.mxu0 0.0
  %3565 = vmatprep.subr.mxu0 0.0
  %3566 = vmatpush1.msra.mxu0 0.0
  %3567 = vmatprep.subr.mxu0 0.0
  %3568 = vmatpush1.msra.mxu0 0.0
  %3569 = vmatprep.subr.mxu0 0.0
  %3570 = vmatpush1.msra.mxu0 0.0
  %3571 = vmatprep.subr.mxu0 0.0
  %3572 = vmatpush1.msra.mxu0 0.0
  %3573 = vmatprep.subr.mxu0 0.0
  %3574 = vmatpush1.msra.mxu0 0.0
  %3575 = vmatprep.subr.mxu0 0.0
  %3576 = vmatpush1.msra.mxu0 0.0
  %3577 = vmatprep.subr.mxu0 0.0
  %3578 = vmatpush1.msra.mxu0 0.0
  %3579 = vmatprep.subr.mxu0 0.0
  %3580 = vmatpush1.msra.mxu0 0.0
  %3581 = vmatprep.subr.mxu0 0.0
  %3582 = vmatpush1.msra.mxu0 0.0
  %3583 = vmatprep.subr.mxu0 0.0
  %3584 = vmatpush1.msra.mxu0 0.0
  %3585 = vmatprep.subr.mxu0 0.0
  %3586 = vmatpush1.msra.mxu0 0.0
  %3587 = vmatprep.subr.mxu0 0.0
  %3588 = vmatpush1.msra.mxu0 0.0
  %3589 = vmatprep.subr.mxu0 0.0
  %3590 = vmatpush1.msra.mxu0 0.0
  %3591 = vmatprep.subr.mxu0 0.0
  %3592 = vmatpush1.msra.mxu0 0.0
  %3593 = vmatprep.subr.mxu0 0.0
  %3594 = vmatpush1.msra.mxu0 0.0
  %3595 = vmatprep.subr.mxu0 0.0
  %3596 = vmatpush1.msra.mxu0 0.0
  %3597 = vmatprep.mubr.f32.mxu0 0.0
  %3598 = vmatmul.mubr.f32.gmra.mrb[0].mxu0 %v3531
  %v3599 = vpop.f32.mrb[0].mxu0
  %v3600 = vadd.f32 0.0, %v3599
  %v3601 = vpop.f32.mrb[0].mxu0
  %3602 = vdwg.mxu0
  %v3603 = vadd.f32 %v3527, %v3600
  %v3604 = vadd.f32 %v3603, %v694
  %v3605 = vxor.u32 %v3604, 2147483648
  %v3606 = vmul.f32 %v3605, 1.442695
  %v3607 = vpow.pop %v3606
  %v3608 = vadd.f32 %v3607, 1.0
  %v3609 = vrcp.pop %v3608
  %v3610 = vmul.f32 1.0, %v3609
  %3611 = vmatprep.subr.mxu0 0.0
  %3612 = vmatpush1.msra.mxu0 %v580
  %3613 = vmatprep.subr.mxu0 0.0
  %3614 = vmatpush1.msra.mxu0 %v581
  %3615 = vmatprep.subr.mxu0 0.0
  %3616 = vmatpush1.msra.mxu0 %v582
  %3617 = vmatprep.subr.mxu0 0.0
  %3618 = vmatpush1.msra.mxu0 %v583
  %3619 = vmatprep.subr.mxu0 0.0
  %3620 = vmatpush1.msra.mxu0 0.0
  %3621 = vmatprep.subr.mxu0 0.0
  %3622 = vmatpush1.msra.mxu0 0.0
  %3623 = vmatprep.subr.mxu0 0.0
  %3624 = vmatpush1.msra.mxu0 0.0
  %3625 = vmatprep.subr.mxu0 0.0
  %3626 = vmatpush1.msra.mxu0 0.0
  %3627 = vmatprep.subr.mxu0 0.0
  %3628 = vmatpush1.msra.mxu0 0.0
  %3629 = vmatprep.subr.mxu0 0.0
  %3630 = vmatpush1.msra.mxu0 0.0
  %3631 = vmatprep.subr.mxu0 0.0
  %3632 = vmatpush1.msra.mxu0 0.0
  %3633 = vmatprep.subr.mxu0 0.0
  %3634 = vmatpush1.msra.mxu0 0.0
  %3635 = vmatprep.subr.mxu0 0.0
  %3636 = vmatpush1.msra.mxu0 0.0
  %3637 = vmatprep.subr.mxu0 0.0
  %3638 = vmatpush1.msra.mxu0 0.0
  %3639 = vmatprep.subr.mxu0 0.0
  %3640 = vmatpush1.msra.mxu0 0.0
  %3641 = vmatprep.subr.mxu0 0.0
  %3642 = vmatpush1.msra.mxu0 0.0
  %3643 = vmatprep.subr.mxu0 0.0
  %3644 = vmatpush1.msra.mxu0 0.0
  %3645 = vmatprep.subr.mxu0 0.0
  %3646 = vmatpush1.msra.mxu0 0.0
  %3647 = vmatprep.subr.mxu0 0.0
  %3648 = vmatpush1.msra.mxu0 0.0
  %3649 = vmatprep.subr.mxu0 0.0
  %3650 = vmatpush1.msra.mxu0 0.0
  %3651 = vmatprep.subr.mxu0 0.0
  %3652 = vmatpush1.msra.mxu0 0.0
  %3653 = vmatprep.subr.mxu0 0.0
  %3654 = vmatpush1.msra.mxu0 0.0
  %3655 = vmatprep.subr.mxu0 0.0
  %3656 = vmatpush1.msra.mxu0 0.0
  %3657 = vmatprep.subr.mxu0 0.0
  %3658 = vmatpush1.msra.mxu0 0.0
  %3659 = vmatprep.subr.mxu0 0.0
  %3660 = vmatpush1.msra.mxu0 0.0
  %3661 = vmatprep.subr.mxu0 0.0
  %3662 = vmatpush1.msra.mxu0 0.0
  %3663 = vmatprep.subr.mxu0 0.0
  %3664 = vmatpush1.msra.mxu0 0.0
  %3665 = vmatprep.subr.mxu0 0.0
  %3666 = vmatpush1.msra.mxu0 0.0
  %3667 = vmatprep.subr.mxu0 0.0
  %3668 = vmatpush1.msra.mxu0 0.0
  %3669 = vmatprep.subr.mxu0 0.0
  %3670 = vmatpush1.msra.mxu0 0.0
  %3671 = vmatprep.subr.mxu0 0.0
  %3672 = vmatpush1.msra.mxu0 0.0
  %3673 = vmatprep.subr.mxu0 0.0
  %3674 = vmatpush1.msra.mxu0 0.0
  %3675 = vmatprep.mubr.f32.mxu0 0.0
  %3676 = vmatmul.mubr.f32.gmra.mrb[0].mxu0 %v3531
  %v3677 = vpop.f32.mrb[0].mxu0
  %v3678 = vadd.f32 0.0, %v3677
  %v3679 = vpop.f32.mrb[0].mxu0
  %3680 = vdwg.mxu0
  %v3681 = vadd.f32 %v3528, %v3678
  %v3682 = vadd.f32 %v3681, %v778
  %v3683 = vxor.u32 %v3682, 2147483648
  %v3684 = vmul.f32 %v3683, 1.442695
  %v3685 = vpow.pop %v3684
  %v3686 = vadd.f32 %v3685, 1.0
  %v3687 = vrcp.pop %v3686
  %v3688 = vmul.f32 1.0, %v3687
  %3689 = vmatprep.subr.mxu0 0.0
  %3690 = vmatpush1.msra.mxu0 %v585
  %3691 = vmatprep.subr.mxu0 0.0
  %3692 = vmatpush1.msra.mxu0 %v586
  %3693 = vmatprep.subr.mxu0 0.0
  %3694 = vmatpush1.msra.mxu0 %v587
  %3695 = vmatprep.subr.mxu0 0.0
  %3696 = vmatpush1.msra.mxu0 %v588
  %3697 = vmatprep.subr.mxu0 0.0
  %3698 = vmatpush1.msra.mxu0 0.0
  %3699 = vmatprep.subr.mxu0 0.0
  %3700 = vmatpush1.msra.mxu0 0.0
  %3701 = vmatprep.subr.mxu0 0.0
  %3702 = vmatpush1.msra.mxu0 0.0
  %3703 = vmatprep.subr.mxu0 0.0
  %3704 = vmatpush1.msra.mxu0 0.0
  %3705 = vmatprep.subr.mxu0 0.0
  %3706 = vmatpush1.msra.mxu0 0.0
  %3707 = vmatprep.subr.mxu0 0.0
  %3708 = vmatpush1.msra.mxu0 0.0
  %3709 = vmatprep.subr.mxu0 0.0
  %3710 = vmatpush1.msra.mxu0 0.0
  %3711 = vmatprep.subr.mxu0 0.0
  %3712 = vmatpush1.msra.mxu0 0.0
  %3713 = vmatprep.subr.mxu0 0.0
  %3714 = vmatpush1.msra.mxu0 0.0
  %3715 = vmatprep.subr.mxu0 0.0
  %3716 = vmatpush1.msra.mxu0 0.0
  %3717 = vmatprep.subr.mxu0 0.0
  %3718 = vmatpush1.msra.mxu0 0.0
  %3719 = vmatprep.subr.mxu0 0.0
  %3720 = vmatpush1.msra.mxu0 0.0
  %3721 = vmatprep.subr.mxu0 0.0
  %3722 = vmatpush1.msra.mxu0 0.0
  %3723 = vmatprep.subr.mxu0 0.0
  %3724 = vmatpush1.msra.mxu0 0.0
  %3725 = vmatprep.subr.mxu0 0.0
  %3726 = vmatpush1.msra.mxu0 0.0
  %3727 = vmatprep.subr.mxu0 0.0
  %3728 = vmatpush1.msra.mxu0 0.0
  %3729 = vmatprep.subr.mxu0 0.0
  %3730 = vmatpush1.msra.mxu0 0.0
  %3731 = vmatprep.subr.mxu0 0.0
  %3732 = vmatpush1.msra.mxu0 0.0
  %3733 = vmatprep.subr.mxu0 0.0
  %3734 = vmatpush1.msra.mxu0 0.0
  %3735 = vmatprep.subr.mxu0 0.0
  %3736 = vmatpush1.msra.mxu0 0.0
  %3737 = vmatprep.subr.mxu0 0.0
  %3738 = vmatpush1.msra.mxu0 0.0
  %3739 = vmatprep.subr.mxu0 0.0
  %3740 = vmatpush1.msra.mxu0 0.0
  %3741 = vmatprep.subr.mxu0 0.0
  %3742 = vmatpush1.msra.mxu0 0.0
  %3743 = vmatprep.subr.mxu0 0.0
  %3744 = vmatpush1.msra.mxu0 0.0
  %3745 = vmatprep.subr.mxu0 0.0
  %3746 = vmatpush1.msra.mxu0 0.0
  %3747 = vmatprep.subr.mxu0 0.0
  %3748 = vmatpush1.msra.mxu0 0.0
  %3749 = vmatprep.subr.mxu0 0.0
  %3750 = vmatpush1.msra.mxu0 0.0
  %3751 = vmatprep.subr.mxu0 0.0
  %3752 = vmatpush1.msra.mxu0 0.0
  %3753 = vmatprep.mubr.f32.mxu0 0.0
  %3754 = vmatmul.mubr.f32.gmra.mrb[0].mxu0 %v3531
  %v3755 = vpop.f32.mrb[0].mxu0
  %v3756 = vadd.f32 %v791, %v3755
  %v3757 = vpop.f32.mrb[0].mxu0
  %3758 = vdwg.mxu0
  %v3759 = vmul.f32 %v3610, %v3756
  %v3760 = vadd.f32 %v3529, %v3759
  %v3761 = vtanh.pop %v3760
  %v3762 = vsub.f32 1.0, %v3688
  %v3763 = vmul.f32 %v3762, %v3761
  %v3764 = vmul.f32 %v3688, %v3285
  %v3765 = vadd.f32 %v3763, %v3764
  %v3766 = vld [vmem:[#allocation5 + $0x2] sm:$0x3]
  %v3767 = vld [vmem:[#allocation6 + $0x2] sm:$0x3]
  %v3768 = vld [vmem:[#allocation7 + $0x2] sm:$0x3]
  %v3770 = vsel %vm134, %v3524, 0
  %3772 = vmatprep.subr.mxu0 0.0
  %3773 = vmatpush1.msra.mxu0 %v589
  %3774 = vmatprep.subr.mxu0 0.0
  %3775 = vmatpush1.msra.mxu0 %v590
  %3776 = vmatprep.subr.mxu0 0.0
  %3777 = vmatpush1.msra.mxu0 %v591
  %3778 = vmatprep.subr.mxu0 0.0
  %3779 = vmatpush1.msra.mxu0 %v592
  %3780 = vmatprep.subr.mxu0 0.0
  %3781 = vmatpush1.msra.mxu0 0.0
  %3782 = vmatprep.subr.mxu0 0.0
  %3783 = vmatpush1.msra.mxu0 0.0
  %3784 = vmatprep.subr.mxu0 0.0
  %3785 = vmatpush1.msra.mxu0 0.0
  %3786 = vmatprep.subr.mxu0 0.0
  %3787 = vmatpush1.msra.mxu0 0.0
  %3788 = vmatprep.subr.mxu0 0.0
  %3789 = vmatpush1.msra.mxu0 0.0
  %3790 = vmatprep.subr.mxu0 0.0
  %3791 = vmatpush1.msra.mxu0 0.0
  %3792 = vmatprep.subr.mxu0 0.0
  %3793 = vmatpush1.msra.mxu0 0.0
  %3794 = vmatprep.subr.mxu0 0.0
  %3795 = vmatpush1.msra.mxu0 0.0
  %3796 = vmatprep.subr.mxu0 0.0
  %3797 = vmatpush1.msra.mxu0 0.0
  %3798 = vmatprep.subr.mxu0 0.0
  %3799 = vmatpush1.msra.mxu0 0.0
  %3800 = vmatprep.subr.mxu0 0.0
  %3801 = vmatpush1.msra.mxu0 0.0
  %3802 = vmatprep.subr.mxu0 0.0
  %3803 = vmatpush1.msra.mxu0 0.0
  %3804 = vmatprep.subr.mxu0 0.0
  %3805 = vmatpush1.msra.mxu0 0.0
  %3806 = vmatprep.subr.mxu0 0.0
  %3807 = vmatpush1.msra.mxu0 0.0
  %3808 = vmatprep.subr.mxu0 0.0
  %3809 = vmatpush1.msra.mxu0 0.0
  %3810 = vmatprep.subr.mxu0 0.0
  %3811 = vmatpush1.msra.mxu0 0.0
  %3812 = vmatprep.subr.mxu0 0.0
  %3813 = vmatpush1.msra.mxu0 0.0
  %3814 = vmatprep.subr.mxu0 0.0
  %3815 = vmatpush1.msra.mxu0 0.0
  %3816 = vmatprep.subr.mxu0 0.0
  %3817 = vmatpush1.msra.mxu0 0.0
  %3818 = vmatprep.subr.mxu0 0.0
  %3819 = vmatpush1.msra.mxu0 0.0
  %3820 = vmatprep.subr.mxu0 0.0
  %3821 = vmatpush1.msra.mxu0 0.0
  %3822 = vmatprep.subr.mxu0 0.0
  %3823 = vmatpush1.msra.mxu0 0.0
  %3824 = vmatprep.subr.mxu0 0.0
  %3825 = vmatpush1.msra.mxu0 0.0
  %3826 = vmatprep.subr.mxu0 0.0
  %3827 = vmatpush1.msra.mxu0 0.0
  %3828 = vmatprep.subr.mxu0 0.0
  %3829 = vmatpush1.msra.mxu0 0.0
  %3830 = vmatprep.subr.mxu0 0.0
  %3831 = vmatpush1.msra.mxu0 0.0
  %3832 = vmatprep.subr.mxu0 0.0
  %3833 = vmatpush1.msra.mxu0 0.0
  %3834 = vmatprep.subr.mxu0 0.0
  %3835 = vmatpush1.msra.mxu0 0.0
  %3836 = vmatprep.mubr.f32.mxu0 0.0
  %3837 = vmatmul.mubr.f32.gmra.mrb[0].mxu0 %v3770
  %v3838 = vpop.f32.mrb[0].mxu0
  %v3839 = vadd.f32 0.0, %v3838
  %v3840 = vpop.f32.mrb[0].mxu0
  %3841 = vdwg.mxu0
  %v3842 = vadd.f32 %v3766, %v3839
  %v3843 = vadd.f32 %v3842, %v948
  %v3844 = vxor.u32 %v3843, 2147483648
  %v3845 = vmul.f32 %v3844, 1.442695
  %v3846 = vpow.pop %v3845
  %v3847 = vadd.f32 %v3846, 1.0
  %v3848 = vrcp.pop %v3847
  %v3849 = vmul.f32 1.0, %v3848
  %3850 = vmatprep.subr.mxu0 0.0
  %3851 = vmatpush1.msra.mxu0 %v594
  %3852 = vmatprep.subr.mxu0 0.0
  %3853 = vmatpush1.msra.mxu0 %v595
  %3854 = vmatprep.subr.mxu0 0.0
  %3855 = vmatpush1.msra.mxu0 %v596
  %3856 = vmatprep.subr.mxu0 0.0
  %3857 = vmatpush1.msra.mxu0 %v597
  %3858 = vmatprep.subr.mxu0 0.0
  %3859 = vmatpush1.msra.mxu0 0.0
  %3860 = vmatprep.subr.mxu0 0.0
  %3861 = vmatpush1.msra.mxu0 0.0
  %3862 = vmatprep.subr.mxu0 0.0
  %3863 = vmatpush1.msra.mxu0 0.0
  %3864 = vmatprep.subr.mxu0 0.0
  %3865 = vmatpush1.msra.mxu0 0.0
  %3866 = vmatprep.subr.mxu0 0.0
  %3867 = vmatpush1.msra.mxu0 0.0
  %3868 = vmatprep.subr.mxu0 0.0
  %3869 = vmatpush1.msra.mxu0 0.0
  %3870 = vmatprep.subr.mxu0 0.0
  %3871 = vmatpush1.msra.mxu0 0.0
  %3872 = vmatprep.subr.mxu0 0.0
  %3873 = vmatpush1.msra.mxu0 0.0
  %3874 = vmatprep.subr.mxu0 0.0
  %3875 = vmatpush1.msra.mxu0 0.0
  %3876 = vmatprep.subr.mxu0 0.0
  %3877 = vmatpush1.msra.mxu0 0.0
  %3878 = vmatprep.subr.mxu0 0.0
  %3879 = vmatpush1.msra.mxu0 0.0
  %3880 = vmatprep.subr.mxu0 0.0
  %3881 = vmatpush1.msra.mxu0 0.0
  %3882 = vmatprep.subr.mxu0 0.0
  %3883 = vmatpush1.msra.mxu0 0.0
  %3884 = vmatprep.subr.mxu0 0.0
  %3885 = vmatpush1.msra.mxu0 0.0
  %3886 = vmatprep.subr.mxu0 0.0
  %3887 = vmatpush1.msra.mxu0 0.0
  %3888 = vmatprep.subr.mxu0 0.0
  %3889 = vmatpush1.msra.mxu0 0.0
  %3890 = vmatprep.subr.mxu0 0.0
  %3891 = vmatpush1.msra.mxu0 0.0
  %3892 = vmatprep.subr.mxu0 0.0
  %3893 = vmatpush1.msra.mxu0 0.0
  %3894 = vmatprep.subr.mxu0 0.0
  %3895 = vmatpush1.msra.mxu0 0.0
  %3896 = vmatprep.subr.mxu0 0.0
  %3897 = vmatpush1.msra.mxu0 0.0
  %3898 = vmatprep.subr.mxu0 0.0
  %3899 = vmatpush1.msra.mxu0 0.0
  %3900 = vmatprep.subr.mxu0 0.0
  %3901 = vmatpush1.msra.mxu0 0.0
  %3902 = vmatprep.subr.mxu0 0.0
  %3903 = vmatpush1.msra.mxu0 0.0
  %3904 = vmatprep.subr.mxu0 0.0
  %3905 = vmatpush1.msra.mxu0 0.0
  %3906 = vmatprep.subr.mxu0 0.0
  %3907 = vmatpush1.msra.mxu0 0.0
  %3908 = vmatprep.subr.mxu0 0.0
  %3909 = vmatpush1.msra.mxu0 0.0
  %3910 = vmatprep.subr.mxu0 0.0
  %3911 = vmatpush1.msra.mxu0 0.0
  %3912 = vmatprep.subr.mxu0 0.0
  %3913 = vmatpush1.msra.mxu0 0.0
  %3914 = vmatprep.mubr.f32.mxu0 0.0
  %3915 = vmatmul.mubr.f32.gmra.mrb[0].mxu0 %v3770
  %v3916 = vpop.f32.mrb[0].mxu0
  %v3917 = vadd.f32 0.0, %v3916
  %v3918 = vpop.f32.mrb[0].mxu0
  %3919 = vdwg.mxu0
  %v3920 = vadd.f32 %v3767, %v3917
  %v3921 = vadd.f32 %v3920, %v1032
  %v3922 = vxor.u32 %v3921, 2147483648
  %v3923 = vmul.f32 %v3922, 1.442695
  %v3924 = vpow.pop %v3923
  %v3925 = vadd.f32 %v3924, 1.0
  %v3926 = vrcp.pop %v3925
  %v3927 = vmul.f32 1.0, %v3926
  %3928 = vmatprep.subr.mxu0 0.0
  %3929 = vmatpush1.msra.mxu0 %v599
  %3930 = vmatprep.subr.mxu0 0.0
  %3931 = vmatpush1.msra.mxu0 %v600
  %3932 = vmatprep.subr.mxu0 0.0
  %3933 = vmatpush1.msra.mxu0 %v601
  %3934 = vmatprep.subr.mxu0 0.0
  %3935 = vmatpush1.msra.mxu0 %v602
  %3936 = vmatprep.subr.mxu0 0.0
  %3937 = vmatpush1.msra.mxu0 0.0
  %3938 = vmatprep.subr.mxu0 0.0
  %3939 = vmatpush1.msra.mxu0 0.0
  %3940 = vmatprep.subr.mxu0 0.0
  %3941 = vmatpush1.msra.mxu0 0.0
  %3942 = vmatprep.subr.mxu0 0.0
  %3943 = vmatpush1.msra.mxu0 0.0
  %3944 = vmatprep.subr.mxu0 0.0
  %3945 = vmatpush1.msra.mxu0 0.0
  %3946 = vmatprep.subr.mxu0 0.0
  %3947 = vmatpush1.msra.mxu0 0.0
  %3948 = vmatprep.subr.mxu0 0.0
  %3949 = vmatpush1.msra.mxu0 0.0
  %3950 = vmatprep.subr.mxu0 0.0
  %3951 = vmatpush1.msra.mxu0 0.0
  %3952 = vmatprep.subr.mxu0 0.0
  %3953 = vmatpush1.msra.mxu0 0.0
  %3954 = vmatprep.subr.mxu0 0.0
  %3955 = vmatpush1.msra.mxu0 0.0
  %3956 = vmatprep.subr.mxu0 0.0
  %3957 = vmatpush1.msra.mxu0 0.0
  %3958 = vmatprep.subr.mxu0 0.0
  %3959 = vmatpush1.msra.mxu0 0.0
  %3960 = vmatprep.subr.mxu0 0.0
  %3961 = vmatpush1.msra.mxu0 0.0
  %3962 = vmatprep.subr.mxu0 0.0
  %3963 = vmatpush1.msra.mxu0 0.0
  %3964 = vmatprep.subr.mxu0 0.0
  %3965 = vmatpush1.msra.mxu0 0.0
  %3966 = vmatprep.subr.mxu0 0.0
  %3967 = vmatpush1.msra.mxu0 0.0
  %3968 = vmatprep.subr.mxu0 0.0
  %3969 = vmatpush1.msra.mxu0 0.0
  %3970 = vmatprep.subr.mxu0 0.0
  %3971 = vmatpush1.msra.mxu0 0.0
  %3972 = vmatprep.subr.mxu0 0.0
  %3973 = vmatpush1.msra.mxu0 0.0
  %3974 = vmatprep.subr.mxu0 0.0
  %3975 = vmatpush1.msra.mxu0 0.0
  %3976 = vmatprep.subr.mxu0 0.0
  %3977 = vmatpush1.msra.mxu0 0.0
  %3978 = vmatprep.subr.mxu0 0.0
  %3979 = vmatpush1.msra.mxu0 0.0
  %3980 = vmatprep.subr.mxu0 0.0
  %3981 = vmatpush1.msra.mxu0 0.0
  %3982 = vmatprep.subr.mxu0 0.0
  %3983 = vmatpush1.msra.mxu0 0.0
  %3984 = vmatprep.subr.mxu0 0.0
  %3985 = vmatpush1.msra.mxu0 0.0
  %3986 = vmatprep.subr.mxu0 0.0
  %3987 = vmatpush1.msra.mxu0 0.0
  %3988 = vmatprep.subr.mxu0 0.0
  %3989 = vmatpush1.msra.mxu0 0.0
  %3990 = vmatprep.subr.mxu0 0.0
  %3991 = vmatpush1.msra.mxu0 0.0
  %3992 = vmatprep.mubr.f32.mxu0 0.0
  %3993 = vmatmul.mubr.f32.gmra.mrb[0].mxu0 %v3770
  %v3994 = vpop.f32.mrb[0].mxu0
  %v3995 = vadd.f32 %v1045, %v3994
  %v3996 = vpop.f32.mrb[0].mxu0
  %3997 = vdwg.mxu0
  %v3998 = vmul.f32 %v3849, %v3995
  %v3999 = vadd.f32 %v3768, %v3998
  %v4000 = vtanh.pop %v3999
  %v4001 = vsub.f32 1.0, %v3927
  %v4002 = vmul.f32 %v4001, %v4000
  %v4003 = vmul.f32 %v3927, %v3524
  %v4004 = vadd.f32 %v4002, %v4003
  %4005 = vst.msk [vmem:[#allocation8 + $0xc] sm:$0x3] %vm1124, %v3765
  %4006 = vst.msk [vmem:[#allocation9 + $0x2] sm:$0x3] %vm1124, %v4004
  %v4007 = vld [vmem:[#allocation2 + $0xe] sm:$0x3]
  %v4008 = vld [vmem:[#allocation3 + $0xe] sm:$0x3]
  %v4009 = vld [vmem:[#allocation4 + $0xe] sm:$0x3]
  %v4011 = vsel %vm134, %v3765, 0
  %4013 = vmatprep.subr.mxu0 0.0
  %4014 = vmatpush1.msra.mxu0 %v575
  %4015 = vmatprep.subr.mxu0 0.0
  %4016 = vmatpush1.msra.mxu0 %v576
  %4017 = vmatprep.subr.mxu0 0.0
  %4018 = vmatpush1.msra.mxu0 %v577
  %4019 = vmatprep.subr.mxu0 0.0
  %4020 = vmatpush1.msra.mxu0 %v578
  %4021 = vmatprep.subr.mxu0 0.0
  %4022 = vmatpush1.msra.mxu0 0.0
  %4023 = vmatprep.subr.mxu0 0.0
  %4024 = vmatpush1.msra.mxu0 0.0
  %4025 = vmatprep.subr.mxu0 0.0
  %4026 = vmatpush1.msra.mxu0 0.0
  %4027 = vmatprep.subr.mxu0 0.0
  %4028 = vmatpush1.msra.mxu0 0.0
  %4029 = vmatprep.subr.mxu0 0.0
  %4030 = vmatpush1.msra.mxu0 0.0
  %4031 = vmatprep.subr.mxu0 0.0
  %4032 = vmatpush1.msra.mxu0 0.0
  %4033 = vmatprep.subr.mxu0 0.0
  %4034 = vmatpush1.msra.mxu0 0.0
  %4035 = vmatprep.subr.mxu0 0.0
  %4036 = vmatpush1.msra.mxu0 0.0
  %4037 = vmatprep.subr.mxu0 0.0
  %4038 = vmatpush1.msra.mxu0 0.0
  %4039 = vmatprep.subr.mxu0 0.0
  %4040 = vmatpush1.msra.mxu0 0.0
  %4041 = vmatprep.subr.mxu0 0.0
  %4042 = vmatpush1.msra.mxu0 0.0
  %4043 = vmatprep.subr.mxu0 0.0
  %4044 = vmatpush1.msra.mxu0 0.0
  %4045 = vmatprep.subr.mxu0 0.0
  %4046 = vmatpush1.msra.mxu0 0.0
  %4047 = vmatprep.subr.mxu0 0.0
  %4048 = vmatpush1.msra.mxu0 0.0
  %4049 = vmatprep.subr.mxu0 0.0
  %4050 = vmatpush1.msra.mxu0 0.0
  %4051 = vmatprep.subr.mxu0 0.0
  %4052 = vmatpush1.msra.mxu0 0.0
  %4053 = vmatprep.subr.mxu0 0.0
  %4054 = vmatpush1.msra.mxu0 0.0
  %4055 = vmatprep.subr.mxu0 0.0
  %4056 = vmatpush1.msra.mxu0 0.0
  %4057 = vmatprep.subr.mxu0 0.0
  %4058 = vmatpush1.msra.mxu0 0.0
  %4059 = vmatprep.subr.mxu0 0.0
  %4060 = vmatpush1.msra.mxu0 0.0
  %4061 = vmatprep.subr.mxu0 0.0
  %4062 = vmatpush1.msra.mxu0 0.0
  %4063 = vmatprep.subr.mxu0 0.0
  %4064 = vmatpush1.msra.mxu0 0.0
  %4065 = vmatprep.subr.mxu0 0.0
  %4066 = vmatpush1.msra.mxu0 0.0
  %4067 = vmatprep.subr.mxu0 0.0
  %4068 = vmatpush1.msra.mxu0 0.0
  %4069 = vmatprep.subr.mxu0 0.0
  %4070 = vmatpush1.msra.mxu0 0.0
  %4071 = vmatprep.subr.mxu0 0.0
  %4072 = vmatpush1.msra.mxu0 0.0
  %4073 = vmatprep.subr.mxu0 0.0
  %4074 = vmatpush1.msra.mxu0 0.0
  %4075 = vmatprep.subr.mxu0 0.0
  %4076 = vmatpush1.msra.mxu0 0.0
  %4077 = vmatprep.mubr.f32.mxu0 0.0
  %4078 = vmatmul.mubr.f32.gmra.mrb[0].mxu0 %v4011
  %v4079 = vpop.f32.mrb[0].mxu0
  %v4080 = vadd.f32 0.0, %v4079
  %v4081 = vpop.f32.mrb[0].mxu0
  %4082 = vdwg.mxu0
  %v4083 = vadd.f32 %v4007, %v4080
  %v4084 = vadd.f32 %v4083, %v694
  %v4085 = vxor.u32 %v4084, 2147483648
  %v4086 = vmul.f32 %v4085, 1.442695
  %v4087 = vpow.pop %v4086
  %v4088 = vadd.f32 %v4087, 1.0
  %v4089 = vrcp.pop %v4088
  %v4090 = vmul.f32 1.0, %v4089
  %4091 = vmatprep.subr.mxu0 0.0
  %4092 = vmatpush1.msra.mxu0 %v580
  %4093 = vmatprep.subr.mxu0 0.0
  %4094 = vmatpush1.msra.mxu0 %v581
  %4095 = vmatprep.subr.mxu0 0.0
  %4096 = vmatpush1.msra.mxu0 %v582
  %4097 = vmatprep.subr.mxu0 0.0
  %4098 = vmatpush1.msra.mxu0 %v583
  %4099 = vmatprep.subr.mxu0 0.0
  %4100 = vmatpush1.msra.mxu0 0.0
  %4101 = vmatprep.subr.mxu0 0.0
  %4102 = vmatpush1.msra.mxu0 0.0
  %4103 = vmatprep.subr.mxu0 0.0
  %4104 = vmatpush1.msra.mxu0 0.0
  %4105 = vmatprep.subr.mxu0 0.0
  %4106 = vmatpush1.msra.mxu0 0.0
  %4107 = vmatprep.subr.mxu0 0.0
  %4108 = vmatpush1.msra.mxu0 0.0
  %4109 = vmatprep.subr.mxu0 0.0
  %4110 = vmatpush1.msra.mxu0 0.0
  %4111 = vmatprep.subr.mxu0 0.0
  %4112 = vmatpush1.msra.mxu0 0.0
  %4113 = vmatprep.subr.mxu0 0.0
  %4114 = vmatpush1.msra.mxu0 0.0
  %4115 = vmatprep.subr.mxu0 0.0
  %4116 = vmatpush1.msra.mxu0 0.0
  %4117 = vmatprep.subr.mxu0 0.0
  %4118 = vmatpush1.msra.mxu0 0.0
  %4119 = vmatprep.subr.mxu0 0.0
  %4120 = vmatpush1.msra.mxu0 0.0
  %4121 = vmatprep.subr.mxu0 0.0
  %4122 = vmatpush1.msra.mxu0 0.0
  %4123 = vmatprep.subr.mxu0 0.0
  %4124 = vmatpush1.msra.mxu0 0.0
  %4125 = vmatprep.subr.mxu0 0.0
  %4126 = vmatpush1.msra.mxu0 0.0
  %4127 = vmatprep.subr.mxu0 0.0
  %4128 = vmatpush1.msra.mxu0 0.0
  %4129 = vmatprep.subr.mxu0 0.0
  %4130 = vmatpush1.msra.mxu0 0.0
  %4131 = vmatprep.subr.mxu0 0.0
  %4132 = vmatpush1.msra.mxu0 0.0
  %4133 = vmatprep.subr.mxu0 0.0
  %4134 = vmatpush1.msra.mxu0 0.0
  %4135 = vmatprep.subr.mxu0 0.0
  %4136 = vmatpush1.msra.mxu0 0.0
  %4137 = vmatprep.subr.mxu0 0.0
  %4138 = vmatpush1.msra.mxu0 0.0
  %4139 = vmatprep.subr.mxu0 0.0
  %4140 = vmatpush1.msra.mxu0 0.0
  %4141 = vmatprep.subr.mxu0 0.0
  %4142 = vmatpush1.msra.mxu0 0.0
  %4143 = vmatprep.subr.mxu0 0.0
  %4144 = vmatpush1.msra.mxu0 0.0
  %4145 = vmatprep.subr.mxu0 0.0
  %4146 = vmatpush1.msra.mxu0 0.0
  %4147 = vmatprep.subr.mxu0 0.0
  %4148 = vmatpush1.msra.mxu0 0.0
  %4149 = vmatprep.subr.mxu0 0.0
  %4150 = vmatpush1.msra.mxu0 0.0
  %4151 = vmatprep.subr.mxu0 0.0
  %4152 = vmatpush1.msra.mxu0 0.0
  %4153 = vmatprep.subr.mxu0 0.0
  %4154 = vmatpush1.msra.mxu0 0.0
  %4155 = vmatprep.mubr.f32.mxu0 0.0
  %4156 = vmatmul.mubr.f32.gmra.mrb[0].mxu0 %v4011
  %v4157 = vpop.f32.mrb[0].mxu0
  %v4158 = vadd.f32 0.0, %v4157
  %v4159 = vpop.f32.mrb[0].mxu0
  %4160 = vdwg.mxu0
  %v4161 = vadd.f32 %v4008, %v4158
  %v4162 = vadd.f32 %v4161, %v778
  %v4163 = vxor.u32 %v4162, 2147483648
  %v4164 = vmul.f32 %v4163, 1.442695
  %v4165 = vpow.pop %v4164
  %v4166 = vadd.f32 %v4165, 1.0
  %v4167 = vrcp.pop %v4166
  %v4168 = vmul.f32 1.0, %v4167
  %4169 = vmatprep.subr.mxu0 0.0
  %4170 = vmatpush1.msra.mxu0 %v585
  %4171 = vmatprep.subr.mxu0 0.0
  %4172 = vmatpush1.msra.mxu0 %v586
  %4173 = vmatprep.subr.mxu0 0.0
  %4174 = vmatpush1.msra.mxu0 %v587
  %4175 = vmatprep.subr.mxu0 0.0
  %4176 = vmatpush1.msra.mxu0 %v588
  %4177 = vmatprep.subr.mxu0 0.0
  %4178 = vmatpush1.msra.mxu0 0.0
  %4179 = vmatprep.subr.mxu0 0.0
  %4180 = vmatpush1.msra.mxu0 0.0
  %4181 = vmatprep.subr.mxu0 0.0
  %4182 = vmatpush1.msra.mxu0 0.0
  %4183 = vmatprep.subr.mxu0 0.0
  %4184 = vmatpush1.msra.mxu0 0.0
  %4185 = vmatprep.subr.mxu0 0.0
  %4186 = vmatpush1.msra.mxu0 0.0
  %4187 = vmatprep.subr.mxu0 0.0
  %4188 = vmatpush1.msra.mxu0 0.0
  %4189 = vmatprep.subr.mxu0 0.0
  %4190 = vmatpush1.msra.mxu0 0.0
  %4191 = vmatprep.subr.mxu0 0.0
  %4192 = vmatpush1.msra.mxu0 0.0
  %4193 = vmatprep.subr.mxu0 0.0
  %4194 = vmatpush1.msra.mxu0 0.0
  %4195 = vmatprep.subr.mxu0 0.0
  %4196 = vmatpush1.msra.mxu0 0.0
  %4197 = vmatprep.subr.mxu0 0.0
  %4198 = vmatpush1.msra.mxu0 0.0
  %4199 = vmatprep.subr.mxu0 0.0
  %4200 = vmatpush1.msra.mxu0 0.0
  %4201 = vmatprep.subr.mxu0 0.0
  %4202 = vmatpush1.msra.mxu0 0.0
  %4203 = vmatprep.subr.mxu0 0.0
  %4204 = vmatpush1.msra.mxu0 0.0
  %4205 = vmatprep.subr.mxu0 0.0
  %4206 = vmatpush1.msra.mxu0 0.0
  %4207 = vmatprep.subr.mxu0 0.0
  %4208 = vmatpush1.msra.mxu0 0.0
  %4209 = vmatprep.subr.mxu0 0.0
  %4210 = vmatpush1.msra.mxu0 0.0
  %4211 = vmatprep.subr.mxu0 0.0
  %4212 = vmatpush1.msra.mxu0 0.0
  %4213 = vmatprep.subr.mxu0 0.0
  %4214 = vmatpush1.msra.mxu0 0.0
  %4215 = vmatprep.subr.mxu0 0.0
  %4216 = vmatpush1.msra.mxu0 0.0
  %4217 = vmatprep.subr.mxu0 0.0
  %4218 = vmatpush1.msra.mxu0 0.0
  %4219 = vmatprep.subr.mxu0 0.0
  %4220 = vmatpush1.msra.mxu0 0.0
  %4221 = vmatprep.subr.mxu0 0.0
  %4222 = vmatpush1.msra.mxu0 0.0
  %4223 = vmatprep.subr.mxu0 0.0
  %4224 = vmatpush1.msra.mxu0 0.0
  %4225 = vmatprep.subr.mxu0 0.0
  %4226 = vmatpush1.msra.mxu0 0.0
  %4227 = vmatprep.subr.mxu0 0.0
  %4228 = vmatpush1.msra.mxu0 0.0
  %4229 = vmatprep.subr.mxu0 0.0
  %4230 = vmatpush1.msra.mxu0 0.0
  %4231 = vmatprep.subr.mxu0 0.0
  %4232 = vmatpush1.msra.mxu0 0.0
  %4233 = vmatprep.mubr.f32.mxu0 0.0
  %4234 = vmatmul.mubr.f32.gmra.mrb[0].mxu0 %v4011
  %v4235 = vpop.f32.mrb[0].mxu0
  %v4236 = vadd.f32 %v791, %v4235
  %v4237 = vpop.f32.mrb[0].mxu0
  %4238 = vdwg.mxu0
  %v4239 = vmul.f32 %v4090, %v4236
  %v4240 = vadd.f32 %v4009, %v4239
  %v4241 = vtanh.pop %v4240
  %v4242 = vsub.f32 1.0, %v4168
  %v4243 = vmul.f32 %v4242, %v4241
  %v4244 = vmul.f32 %v4168, %v3765
  %v4245 = vadd.f32 %v4243, %v4244
  %v4246 = vld [vmem:[#allocation5] sm:$0x3]
  %v4247 = vld [vmem:[#allocation6] sm:$0x3]
  %v4248 = vld [vmem:[#allocation7] sm:$0x3]
  %v4250 = vsel %vm134, %v4004, 0
  %4252 = vmatprep.subr.mxu0 0.0
  %4253 = vmatpush1.msra.mxu0 %v589
  %4254 = vmatprep.subr.mxu0 0.0
  %4255 = vmatpush1.msra.mxu0 %v590
  %4256 = vmatprep.subr.mxu0 0.0
  %4257 = vmatpush1.msra.mxu0 %v591
  %4258 = vmatprep.subr.mxu0 0.0
  %4259 = vmatpush1.msra.mxu0 %v592
  %4260 = vmatprep.subr.mxu0 0.0
  %4261 = vmatpush1.msra.mxu0 0.0
  %4262 = vmatprep.subr.mxu0 0.0
  %4263 = vmatpush1.msra.mxu0 0.0
  %4264 = vmatprep.subr.mxu0 0.0
  %4265 = vmatpush1.msra.mxu0 0.0
  %4266 = vmatprep.subr.mxu0 0.0
  %4267 = vmatpush1.msra.mxu0 0.0
  %4268 = vmatprep.subr.mxu0 0.0
  %4269 = vmatpush1.msra.mxu0 0.0
  %4270 = vmatprep.subr.mxu0 0.0
  %4271 = vmatpush1.msra.mxu0 0.0
  %4272 = vmatprep.subr.mxu0 0.0
  %4273 = vmatpush1.msra.mxu0 0.0
  %4274 = vmatprep.subr.mxu0 0.0
  %4275 = vmatpush1.msra.mxu0 0.0
  %4276 = vmatprep.subr.mxu0 0.0
  %4277 = vmatpush1.msra.mxu0 0.0
  %4278 = vmatprep.subr.mxu0 0.0
  %4279 = vmatpush1.msra.mxu0 0.0
  %4280 = vmatprep.subr.mxu0 0.0
  %4281 = vmatpush1.msra.mxu0 0.0
  %4282 = vmatprep.subr.mxu0 0.0
  %4283 = vmatpush1.msra.mxu0 0.0
  %4284 = vmatprep.subr.mxu0 0.0
  %4285 = vmatpush1.msra.mxu0 0.0
  %4286 = vmatprep.subr.mxu0 0.0
  %4287 = vmatpush1.msra.mxu0 0.0
  %4288 = vmatprep.subr.mxu0 0.0
  %4289 = vmatpush1.msra.mxu0 0.0
  %4290 = vmatprep.subr.mxu0 0.0
  %4291 = vmatpush1.msra.mxu0 0.0
  %4292 = vmatprep.subr.mxu0 0.0
  %4293 = vmatpush1.msra.mxu0 0.0
  %4294 = vmatprep.subr.mxu0 0.0
  %4295 = vmatpush1.msra.mxu0 0.0
  %4296 = vmatprep.subr.mxu0 0.0
  %4297 = vmatpush1.msra.mxu0 0.0
  %4298 = vmatprep.subr.mxu0 0.0
  %4299 = vmatpush1.msra.mxu0 0.0
  %4300 = vmatprep.subr.mxu0 0.0
  %4301 = vmatpush1.msra.mxu0 0.0
  %4302 = vmatprep.subr.mxu0 0.0
  %4303 = vmatpush1.msra.mxu0 0.0
  %4304 = vmatprep.subr.mxu0 0.0
  %4305 = vmatpush1.msra.mxu0 0.0
  %4306 = vmatprep.subr.mxu0 0.0
  %4307 = vmatpush1.msra.mxu0 0.0
  %4308 = vmatprep.subr.mxu0 0.0
  %4309 = vmatpush1.msra.mxu0 0.0
  %4310 = vmatprep.subr.mxu0 0.0
  %4311 = vmatpush1.msra.mxu0 0.0
  %4312 = vmatprep.subr.mxu0 0.0
  %4313 = vmatpush1.msra.mxu0 0.0
  %4314 = vmatprep.subr.mxu0 0.0
  %4315 = vmatpush1.msra.mxu0 0.0
  %4316 = vmatprep.mubr.f32.mxu0 0.0
  %4317 = vmatmul.mubr.f32.gmra.mrb[0].mxu0 %v4250
  %v4318 = vpop.f32.mrb[0].mxu0
  %v4319 = vadd.f32 0.0, %v4318
  %v4320 = vpop.f32.mrb[0].mxu0
  %4321 = vdwg.mxu0
  %v4322 = vadd.f32 %v4246, %v4319
  %v4323 = vadd.f32 %v4322, %v948
  %v4324 = vxor.u32 %v4323, 2147483648
  %v4325 = vmul.f32 %v4324, 1.442695
  %v4326 = vpow.pop %v4325
  %v4327 = vadd.f32 %v4326, 1.0
  %v4328 = vrcp.pop %v4327
  %v4329 = vmul.f32 1.0, %v4328
  %4330 = vmatprep.subr.mxu0 0.0
  %4331 = vmatpush1.msra.mxu0 %v594
  %4332 = vmatprep.subr.mxu0 0.0
  %4333 = vmatpush1.msra.mxu0 %v595
  %4334 = vmatprep.subr.mxu0 0.0
  %4335 = vmatpush1.msra.mxu0 %v596
  %4336 = vmatprep.subr.mxu0 0.0
  %4337 = vmatpush1.msra.mxu0 %v597
  %4338 = vmatprep.subr.mxu0 0.0
  %4339 = vmatpush1.msra.mxu0 0.0
  %4340 = vmatprep.subr.mxu0 0.0
  %4341 = vmatpush1.msra.mxu0 0.0
  %4342 = vmatprep.subr.mxu0 0.0
  %4343 = vmatpush1.msra.mxu0 0.0
  %4344 = vmatprep.subr.mxu0 0.0
  %4345 = vmatpush1.msra.mxu0 0.0
  %4346 = vmatprep.subr.mxu0 0.0
  %4347 = vmatpush1.msra.mxu0 0.0
  %4348 = vmatprep.subr.mxu0 0.0
  %4349 = vmatpush1.msra.mxu0 0.0
  %4350 = vmatprep.subr.mxu0 0.0
  %4351 = vmatpush1.msra.mxu0 0.0
  %4352 = vmatprep.subr.mxu0 0.0
  %4353 = vmatpush1.msra.mxu0 0.0
  %4354 = vmatprep.subr.mxu0 0.0
  %4355 = vmatpush1.msra.mxu0 0.0
  %4356 = vmatprep.subr.mxu0 0.0
  %4357 = vmatpush1.msra.mxu0 0.0
  %4358 = vmatprep.subr.mxu0 0.0
  %4359 = vmatpush1.msra.mxu0 0.0
  %4360 = vmatprep.subr.mxu0 0.0
  %4361 = vmatpush1.msra.mxu0 0.0
  %4362 = vmatprep.subr.mxu0 0.0
  %4363 = vmatpush1.msra.mxu0 0.0
  %4364 = vmatprep.subr.mxu0 0.0
  %4365 = vmatpush1.msra.mxu0 0.0
  %4366 = vmatprep.subr.mxu0 0.0
  %4367 = vmatpush1.msra.mxu0 0.0
  %4368 = vmatprep.subr.mxu0 0.0
  %4369 = vmatpush1.msra.mxu0 0.0
  %4370 = vmatprep.subr.mxu0 0.0
  %4371 = vmatpush1.msra.mxu0 0.0
  %4372 = vmatprep.subr.mxu0 0.0
  %4373 = vmatpush1.msra.mxu0 0.0
  %4374 = vmatprep.subr.mxu0 0.0
  %4375 = vmatpush1.msra.mxu0 0.0
  %4376 = vmatprep.subr.mxu0 0.0
  %4377 = vmatpush1.msra.mxu0 0.0
  %4378 = vmatprep.subr.mxu0 0.0
  %4379 = vmatpush1.msra.mxu0 0.0
  %4380 = vmatprep.subr.mxu0 0.0
  %4381 = vmatpush1.msra.mxu0 0.0
  %4382 = vmatprep.subr.mxu0 0.0
  %4383 = vmatpush1.msra.mxu0 0.0
  %4384 = vmatprep.subr.mxu0 0.0
  %4385 = vmatpush1.msra.mxu0 0.0
  %4386 = vmatprep.subr.mxu0 0.0
  %4387 = vmatpush1.msra.mxu0 0.0
  %4388 = vmatprep.subr.mxu0 0.0
  %4389 = vmatpush1.msra.mxu0 0.0
  %4390 = vmatprep.subr.mxu0 0.0
  %4391 = vmatpush1.msra.mxu0 0.0
  %4392 = vmatprep.subr.mxu0 0.0
  %4393 = vmatpush1.msra.mxu0 0.0
  %4394 = vmatprep.mubr.f32.mxu0 0.0
  %4395 = vmatmul.mubr.f32.gmra.mrb[0].mxu0 %v4250
  %v4396 = vpop.f32.mrb[0].mxu0
  %v4397 = vadd.f32 0.0, %v4396
  %v4398 = vpop.f32.mrb[0].mxu0
  %4399 = vdwg.mxu0
  %v4400 = vadd.f32 %v4247, %v4397
  %v4401 = vadd.f32 %v4400, %v1032
  %v4402 = vxor.u32 %v4401, 2147483648
  %v4403 = vmul.f32 %v4402, 1.442695
  %v4404 = vpow.pop %v4403
  %v4405 = vadd.f32 %v4404, 1.0
  %v4406 = vrcp.pop %v4405
  %v4407 = vmul.f32 1.0, %v4406
  %4408 = vmatprep.subr.mxu0 0.0
  %4409 = vmatpush1.msra.mxu0 %v599
  %4410 = vmatprep.subr.mxu0 0.0
  %4411 = vmatpush1.msra.mxu0 %v600
  %4412 = vmatprep.subr.mxu0 0.0
  %4413 = vmatpush1.msra.mxu0 %v601
  %4414 = vmatprep.subr.mxu0 0.0
  %4415 = vmatpush1.msra.mxu0 %v602
  %4416 = vmatprep.subr.mxu0 0.0
  %4417 = vmatpush1.msra.mxu0 0.0
  %4418 = vmatprep.subr.mxu0 0.0
  %4419 = vmatpush1.msra.mxu0 0.0
  %4420 = vmatprep.subr.mxu0 0.0
  %4421 = vmatpush1.msra.mxu0 0.0
  %4422 = vmatprep.subr.mxu0 0.0
  %4423 = vmatpush1.msra.mxu0 0.0
  %4424 = vmatprep.subr.mxu0 0.0
  %4425 = vmatpush1.msra.mxu0 0.0
  %4426 = vmatprep.subr.mxu0 0.0
  %4427 = vmatpush1.msra.mxu0 0.0
  %4428 = vmatprep.subr.mxu0 0.0
  %4429 = vmatpush1.msra.mxu0 0.0
  %4430 = vmatprep.subr.mxu0 0.0
  %4431 = vmatpush1.msra.mxu0 0.0
  %4432 = vmatprep.subr.mxu0 0.0
  %4433 = vmatpush1.msra.mxu0 0.0
  %4434 = vmatprep.subr.mxu0 0.0
  %4435 = vmatpush1.msra.mxu0 0.0
  %4436 = vmatprep.subr.mxu0 0.0
  %4437 = vmatpush1.msra.mxu0 0.0
  %4438 = vmatprep.subr.mxu0 0.0
  %4439 = vmatpush1.msra.mxu0 0.0
  %4440 = vmatprep.subr.mxu0 0.0
  %4441 = vmatpush1.msra.mxu0 0.0
  %4442 = vmatprep.subr.mxu0 0.0
  %4443 = vmatpush1.msra.mxu0 0.0
  %4444 = vmatprep.subr.mxu0 0.0
  %4445 = vmatpush1.msra.mxu0 0.0
  %4446 = vmatprep.subr.mxu0 0.0
  %4447 = vmatpush1.msra.mxu0 0.0
  %4448 = vmatprep.subr.mxu0 0.0
  %4449 = vmatpush1.msra.mxu0 0.0
  %4450 = vmatprep.subr.mxu0 0.0
  %4451 = vmatpush1.msra.mxu0 0.0
  %4452 = vmatprep.subr.mxu0 0.0
  %4453 = vmatpush1.msra.mxu0 0.0
  %4454 = vmatprep.subr.mxu0 0.0
  %4455 = vmatpush1.msra.mxu0 0.0
  %4456 = vmatprep.subr.mxu0 0.0
  %4457 = vmatpush1.msra.mxu0 0.0
  %4458 = vmatprep.subr.mxu0 0.0
  %4459 = vmatpush1.msra.mxu0 0.0
  %4460 = vmatprep.subr.mxu0 0.0
  %4461 = vmatpush1.msra.mxu0 0.0
  %4462 = vmatprep.subr.mxu0 0.0
  %4463 = vmatpush1.msra.mxu0 0.0
  %4464 = vmatprep.subr.mxu0 0.0
  %4465 = vmatpush1.msra.mxu0 0.0
  %4466 = vmatprep.subr.mxu0 0.0
  %4467 = vmatpush1.msra.mxu0 0.0
  %4468 = vmatprep.subr.mxu0 0.0
  %4469 = vmatpush1.msra.mxu0 0.0
  %4470 = vmatprep.subr.mxu0 0.0
  %4471 = vmatpush1.msra.mxu0 0.0
  %4472 = vmatprep.mubr.f32.mxu0 0.0
  %4473 = vmatmul.mubr.f32.gmra.mrb[0].mxu0 %v4250
  %v4474 = vpop.f32.mrb[0].mxu0
  %v4475 = vadd.f32 %v1045, %v4474
  %v4476 = vpop.f32.mrb[0].mxu0
  %4477 = vdwg.mxu0
  %v4478 = vmul.f32 %v4329, %v4475
  %v4479 = vadd.f32 %v4248, %v4478
  %v4480 = vtanh.pop %v4479
  %v4481 = vsub.f32 1.0, %v4407
  %v4482 = vmul.f32 %v4481, %v4480
  %v4483 = vmul.f32 %v4407, %v4004
  %v4484 = vadd.f32 %v4482, %v4483
  %4485 = vst.msk [vmem:[#allocation8 + $0xe] sm:$0x3] %vm1124, %v4245
  %4486 = vst.msk [vmem:[#allocation9] sm:$0x3] %vm1124, %v4484
  %v4487 = vld [vmem:[#allocation8] sm:$0xff]
  %v4488 = vld [vmem:[#allocation8 + $0x8] sm:$0xff]
  %v4489 = vld [vmem:[%s9] sm:$0xff]
  %v4490 = vld [vmem:[%s9 + $0x8] sm:$0xff]
  %v4491 = vld [vmem:[%s9 + $0x10] sm:$0xff]
  %v4492 = vld [vmem:[%s9 + $0x18] sm:$0xff]
  %v4493 = vld [vmem:[#allocation9] sm:$0xff]
  %v4494 = vld [vmem:[#allocation9 + $0x8] sm:$0xff]
  %v4495 = vld [vmem:[%s10] sm:$0xff]
  %v4496 = vld [vmem:[%s10 + $0x8] sm:$0xff]
  %v4497 = vld [vmem:[%s10 + $0x10] sm:$0xff]
  %v4498 = vld [vmem:[%s10 + $0x18] sm:$0xff]
  %v4500 = vsel %vm134, %v4493, 0
  %v4503 = vsel %vm134, %v4494, 0
  %4505 = vmatprep.subr.mxu0 0.0
  %4506 = vmatpush1.msra.mxu0 %v4495
  %4507 = vmatprep.subr.mxu0 0.0
  %4508 = vmatpush1.msra.mxu0 %v4496
  %4509 = vmatprep.subr.mxu0 0.0
  %4510 = vmatpush1.msra.mxu0 %v4497
  %4511 = vmatprep.subr.mxu0 0.0
  %4512 = vmatpush1.msra.mxu0 %v4498
  %4513 = vmatprep.subr.mxu0 0.0
  %4514 = vmatpush1.msra.mxu0 0.0
  %4515 = vmatprep.subr.mxu0 0.0
  %4516 = vmatpush1.msra.mxu0 0.0
  %4517 = vmatprep.subr.mxu0 0.0
  %4518 = vmatpush1.msra.mxu0 0.0
  %4519 = vmatprep.subr.mxu0 0.0
  %4520 = vmatpush1.msra.mxu0 0.0
  %4521 = vmatprep.subr.mxu0 0.0
  %4522 = vmatpush1.msra.mxu0 0.0
  %4523 = vmatprep.subr.mxu0 0.0
  %4524 = vmatpush1.msra.mxu0 0.0
  %4525 = vmatprep.subr.mxu0 0.0
  %4526 = vmatpush1.msra.mxu0 0.0
  %4527 = vmatprep.subr.mxu0 0.0
  %4528 = vmatpush1.msra.mxu0 0.0
  %4529 = vmatprep.subr.mxu0 0.0
  %4530 = vmatpush1.msra.mxu0 0.0
  %4531 = vmatprep.subr.mxu0 0.0
  %4532 = vmatpush1.msra.mxu0 0.0
  %4533 = vmatprep.subr.mxu0 0.0
  %4534 = vmatpush1.msra.mxu0 0.0
  %4535 = vmatprep.subr.mxu0 0.0
  %4536 = vmatpush1.msra.mxu0 0.0
  %4537 = vmatprep.subr.mxu0 0.0
  %4538 = vmatpush1.msra.mxu0 0.0
  %4539 = vmatprep.subr.mxu0 0.0
  %4540 = vmatpush1.msra.mxu0 0.0
  %4541 = vmatprep.subr.mxu0 0.0
  %4542 = vmatpush1.msra.mxu0 0.0
  %4543 = vmatprep.subr.mxu0 0.0
  %4544 = vmatpush1.msra.mxu0 0.0
  %4545 = vmatprep.subr.mxu0 0.0
  %4546 = vmatpush1.msra.mxu0 0.0
  %4547 = vmatprep.subr.mxu0 0.0
  %4548 = vmatpush1.msra.mxu0 0.0
  %4549 = vmatprep.subr.mxu0 0.0
  %4550 = vmatpush1.msra.mxu0 0.0
  %4551 = vmatprep.subr.mxu0 0.0
  %4552 = vmatpush1.msra.mxu0 0.0
  %4553 = vmatprep.subr.mxu0 0.0
  %4554 = vmatpush1.msra.mxu0 0.0
  %4555 = vmatprep.subr.mxu0 0.0
  %4556 = vmatpush1.msra.mxu0 0.0
  %4557 = vmatprep.subr.mxu0 0.0
  %4558 = vmatpush1.msra.mxu0 0.0
  %4559 = vmatprep.subr.mxu0 0.0
  %4560 = vmatpush1.msra.mxu0 0.0
  %4561 = vmatprep.subr.mxu0 0.0
  %4562 = vmatpush1.msra.mxu0 0.0
  %4563 = vmatprep.subr.mxu0 0.0
  %4564 = vmatpush1.msra.mxu0 0.0
  %4565 = vmatprep.subr.mxu0 0.0
  %4566 = vmatpush1.msra.mxu0 0.0
  %4567 = vmatprep.subr.mxu0 0.0
  %4568 = vmatpush1.msra.mxu0 0.0
  %4569 = vmatprep.mubr.f32.mxu0 0.0
  %4570 = vmatmul.mubr.f32.gmra.mrb[0].mxu0 %v4500
  %v4571 = vpop.f32.mrb[0].mxu0
  %v4572 = vadd.f32 0.0, %v4571
  %v4573 = vpop.f32.mrb[0].mxu0
  %4574 = vmatprep.mubr.f32.mxu0 0.0
  %4575 = vmatmul.mubr.f32.gmra.mrb[0].mxu0 %v4503
  %v4576 = vpop.f32.mrb[0].mxu0
  %v4577 = vadd.f32 0.0, %v4576
  %v4578 = vpop.f32.mrb[0].mxu0
  %4579 = vdwg.mxu0
  %v4581 = vsel %vm134, %v4487, 0
  %v4584 = vsel %vm134, %v4488, 0
  %4586 = vmatprep.subr.mxu0 0.0
  %4587 = vmatpush1.msra.mxu0 %v4489
  %4588 = vmatprep.subr.mxu0 0.0
  %4589 = vmatpush1.msra.mxu0 %v4490
  %4590 = vmatprep.subr.mxu0 0.0
  %4591 = vmatpush1.msra.mxu0 %v4491
  %4592 = vmatprep.subr.mxu0 0.0
  %4593 = vmatpush1.msra.mxu0 %v4492
  %4594 = vmatprep.subr.mxu0 0.0
  %4595 = vmatpush1.msra.mxu0 0.0
  %4596 = vmatprep.subr.mxu0 0.0
  %4597 = vmatpush1.msra.mxu0 0.0
  %4598 = vmatprep.subr.mxu0 0.0
  %4599 = vmatpush1.msra.mxu0 0.0
  %4600 = vmatprep.subr.mxu0 0.0
  %4601 = vmatpush1.msra.mxu0 0.0
  %4602 = vmatprep.subr.mxu0 0.0
  %4603 = vmatpush1.msra.mxu0 0.0
  %4604 = vmatprep.subr.mxu0 0.0
  %4605 = vmatpush1.msra.mxu0 0.0
  %4606 = vmatprep.subr.mxu0 0.0
  %4607 = vmatpush1.msra.mxu0 0.0
  %4608 = vmatprep.subr.mxu0 0.0
  %4609 = vmatpush1.msra.mxu0 0.0
  %4610 = vmatprep.subr.mxu0 0.0
  %4611 = vmatpush1.msra.mxu0 0.0
  %4612 = vmatprep.subr.mxu0 0.0
  %4613 = vmatpush1.msra.mxu0 0.0
  %4614 = vmatprep.subr.mxu0 0.0
  %4615 = vmatpush1.msra.mxu0 0.0
  %4616 = vmatprep.subr.mxu0 0.0
  %4617 = vmatpush1.msra.mxu0 0.0
  %4618 = vmatprep.subr.mxu0 0.0
  %4619 = vmatpush1.msra.mxu0 0.0
  %4620 = vmatprep.subr.mxu0 0.0
  %4621 = vmatpush1.msra.mxu0 0.0
  %4622 = vmatprep.subr.mxu0 0.0
  %4623 = vmatpush1.msra.mxu0 0.0
  %4624 = vmatprep.subr.mxu0 0.0
  %4625 = vmatpush1.msra.mxu0 0.0
  %4626 = vmatprep.subr.mxu0 0.0
  %4627 = vmatpush1.msra.mxu0 0.0
  %4628 = vmatprep.subr.mxu0 0.0
  %4629 = vmatpush1.msra.mxu0 0.0
  %4630 = vmatprep.subr.mxu0 0.0
  %4631 = vmatpush1.msra.mxu0 0.0
  %4632 = vmatprep.subr.mxu0 0.0
  %4633 = vmatpush1.msra.mxu0 0.0
  %4634 = vmatprep.subr.mxu0 0.0
  %4635 = vmatpush1.msra.mxu0 0.0
  %4636 = vmatprep.subr.mxu0 0.0
  %4637 = vmatpush1.msra.mxu0 0.0
  %4638 = vmatprep.subr.mxu0 0.0
  %4639 = vmatpush1.msra.mxu0 0.0
  %4640 = vmatprep.subr.mxu0 0.0
  %4641 = vmatpush1.msra.mxu0 0.0
  %4642 = vmatprep.subr.mxu0 0.0
  %4643 = vmatpush1.msra.mxu0 0.0
  %4644 = vmatprep.subr.mxu0 0.0
  %4645 = vmatpush1.msra.mxu0 0.0
  %4646 = vmatprep.subr.mxu0 0.0
  %4647 = vmatpush1.msra.mxu0 0.0
  %4648 = vmatprep.subr.mxu0 0.0
  %4649 = vmatpush1.msra.mxu0 0.0
  %4650 = vmatprep.mubr.f32.mxu0 0.0
  %4651 = vmatmul.mubr.f32.gmra.mrb[0].mxu0 %v4581
  %v4652 = vpop.f32.mrb[0].mxu0
  %v4653 = vadd.f32 %v4572, %v4652
  %v4654 = vpop.f32.mrb[0].mxu0
  %4655 = vmatprep.mubr.f32.mxu0 0.0
  %4656 = vmatmul.mubr.f32.gmra.mrb[0].mxu0 %v4584
  %v4657 = vpop.f32.mrb[0].mxu0
  %v4658 = vadd.f32 %v4577, %v4657
  %v4659 = vpop.f32.mrb[0].mxu0
  %4660 = vdwg.mxu0
  %v4661 = vld [vmem:[%s11] sm:$0x1]
  %v4663 = vlaneseq
  %v4664 = vshrl.u32 %v4663, 7
  %v4665 = vsub.s32 0, %v4664
  %v4666 = vrot.slane %v4661, %v4665
  %v4668 = vadd.f32 %v4653, %v4666
  %v4669 = vadd.f32 %v4658, %v4666
  %vm4670 = vcmask 64512
  %v4671 = vsel %vm4670, %v4668, -inf
  %4672 = vmax.xlane.f32.xlu0 %v4671
  %v4673 = vpop.xlane.xlu0 %4672
  %v4674 = vsel %vm4670, %v4669, -inf
  %4675 = vmax.xlane.f32.xlu0 %v4674
  %v4676 = vpop.xlane.xlu0 %4675
  %v4677 = vsub.f32 %v4668, %v4673
  %v4678 = vsub.f32 %v4669, %v4676
  %v4679 = vmul.f32 %v4677, 1.442695
  %v4680 = vpow.pop %v4679
  %v4681 = vmul.f32 %v4678, 1.442695
  %v4682 = vpow.pop %v4681
  %v4683 = vsel %vm4670, %v4680, 0.0
  %4684 = vadd.xlane.f32.xlu0 %v4683
  %v4685 = vpop.xlane.xlu0 %4684
  %v4686 = vsel %vm4670, %v4682, 0.0
  %4687 = vadd.xlane.f32.xlu0 %v4686
  %v4688 = vpop.xlane.xlu0 %4687
  %v4689 = vrcp.pop %v4685
  %v4690 = vrcp.pop %v4688
  %v4691 = vmul.f32 %v4680, %v4689
  %v4692 = vmul.f32 %v4682, %v4690
  %4693 = vst.msk [vmem:[%s12] sm:$0xff] %vm4670, %v4691
  %4694 = vst.msk [vmem:[%s12 + $0x8] sm:$0xff] %vm4670, %v4692
  // Predicated region
  $region50: #{net_forward.1} parent=0 // pred_check
    _
  $region51: #{net_forward.1} parent=0 // pred_check_branch
    %4696 = sbr.rel (0) target = $region53
  $region52: #{net_forward.1} parent=0 // pred_region
    _
  $region53: #{net_forward.1} parent=0 // pred_fallthru
    _
  // Predicated region
  $region54: #{net_forward.1} parent=0 // pred_check
    _
  $region55: #{net_forward.1} parent=0 // pred_check_branch
    %4698 = sbr.rel (0) target = $region57
  $region56: #{net_forward.1} parent=0 // pred_region
    _
  $region57: #{net_forward.1} parent=0 // pred_fallthru
    _

</llo_original>
